<compile_context>
chip_gen: v7x
topology: tpu7x:2x2x1
jax: 0.10.0
libtpu: 0.0.40
codegen_flags: <defaults>
</compile_context>

<pallas_src>
import math
import functools

import numpy as np
import jax
import jax.numpy as jnp
from jax.experimental import pallas as pl
from jax.experimental.pallas import tpu as pltpu


# -----------------------------------------------------------------------------
# Model config (small, but consistent with the module's constraints)
# -----------------------------------------------------------------------------
DIM = 256
N_HEADS = 2
N_KV_HEADS = 1
HEAD_DIM = DIM // N_HEADS            # 128
MULTIPLE_OF = 256
NORM_EPS = 1e-5
ROPE_THETA = 500000.0

BATCH = 2
SEQLEN = 8

# FeedForward hidden dim exactly as in the torch module
_hidden = int(2 * (4 * DIM) / 3)
FFN_HIDDEN = MULTIPLE_OF * ((_hidden + MULTIPLE_OF - 1) // MULTIPLE_OF)   # 768


# -----------------------------------------------------------------------------
# One-time parameter preparation (amortized across calls)
# -----------------------------------------------------------------------------
def prepare_params(params, freqs_cos, freqs_sin):
    """Fuse/cast weights and precompute RoPE tables once (not per forward)."""
    bf16 = jnp.bfloat16
    hd = HEAD_DIM
    # even/odd -> half-layout column permutation within each head
    perm = np.concatenate([np.arange(0, hd, 2), np.arange(1, hd, 2)])

    def permute_heads(w, n_h):
        cols = np.concatenate([h * hd + perm for h in range(n_h)])
        return w[:, cols]

    scale = 1.0 / math.sqrt(hd)                       # folded into wq
    wq = permute_heads(params["wq"], N_HEADS) * scale
    wk = permute_heads(params["wk"], N_KV_HEADS)
    wqkv = jnp.concatenate([wq, wk, params["wv"]], axis=1).astype(bf16)  # (D, 512)
    wo = params["wo"].astype(bf16)                                       # (D, D)
    w13 = jnp.concatenate([params["w1"], params["w3"]], axis=1).astype(bf16)  # (D, 2H)
    w2 = params["w2"].astype(bf16)                                       # (H, D)

    # half-layout cos/sin over head_dim lanes; sign of the rotate-half term
    # folded into sin -> rope(t) = t*cos + roll(t, hd//2)*sin
    cos_hd = jnp.concatenate([freqs_cos, freqs_cos], axis=-1)            # (S, hd)
    sin_hd = jnp.concatenate([-freqs_sin, freqs_sin], axis=-1)           # (S, hd)

    return dict(
        wqkv=wqkv, wo=wo, w13=w13, w2=w2,
        anw=params["attn_norm"].reshape(1, DIM).astype(jnp.float32),
        fnw=params["ffn_norm"].reshape(1, DIM).astype(jnp.float32),
        cos=cos_hd.astype(jnp.float32), sin=sin_hd.astype(jnp.float32))


# -----------------------------------------------------------------------------
# Pallas kernel: one batch slab (S rows) per grid step, grid = (B,)
# -----------------------------------------------------------------------------
def _block_kernel(x_ref, wqkv_ref, wo_ref, w13_ref, w2_ref,
                  anw_ref, fnw_ref, cos_ref, sin_ref, mask_ref,
                  out_ref, *, n_heads, n_kv_heads, head_dim, eps, ffn_hidden):
    f32 = jnp.float32
    bf16 = jnp.bfloat16
    n_rep = n_heads // n_kv_heads
    d_q = n_heads * head_dim
    d_kv = n_kv_heads * head_dim
    half = head_dim // 2

    x = x_ref[...]                                            # (S, D) f32

    # ---- attention RMSNorm (f32) ----
    ms = jnp.mean(x * x, axis=-1, keepdims=True)
    h_norm = x * jax.lax.rsqrt(ms + eps) * anw_ref[...]

    # ---- fused QKV projection (bf16 MXU, f32 accumulate); scale in wq ----
    qkv = jnp.dot(h_norm.astype(bf16), wqkv_ref[...],
                  preferred_element_type=f32)                 # (S, d_q + 2*d_kv)
    xq = qkv[:, :d_q]
    xk = qkv[:, d_q:d_q + d_kv]
    xv = qkv[:, d_q + d_kv:]

    cos = cos_ref[...]                                        # (S, hd)
    sin = sin_ref[...]                                        # (S, hd), sign folded

    def rope(t):                                              # half-layout rotary
        return t * cos + pltpu.roll(t, half, axis=1) * sin

    # ---- head-batched attention (bf16 matmuls, f32 softmax) ----
    q = jnp.stack([rope(xq[:, h * head_dim:(h + 1) * head_dim])
                   for h in range(n_heads)], axis=0).astype(bf16)        # (nH,S,hd)
    k = jnp.stack([rope(xk[:, h * head_dim:(h + 1) * head_dim])
                   for h in range(n_kv_heads)], axis=0).astype(bf16)     # (nKV,S,hd)
    v = jnp.stack([xv[:, h * head_dim:(h + 1) * head_dim]
                   for h in range(n_kv_heads)], axis=0).astype(bf16)     # (nKV,S,hd)
    k = jnp.repeat(k, n_rep, axis=0)                                     # (nH,S,hd)
    v = jnp.repeat(v, n_rep, axis=0)

    sc = jnp.einsum('hqd,hkd->hqk', q, k,
                    preferred_element_type=f32) + mask_ref[...][None]    # (nH,S,S)
    sc = sc - jnp.max(sc, axis=-1, keepdims=True)
    e = jnp.exp(sc)
    p = e * pl.reciprocal(jnp.sum(e, axis=-1, keepdims=True), approx=True)
    o = jnp.einsum('hqk,hkd->hqd', p.astype(bf16), v,
                   preferred_element_type=f32)                           # (nH,S,hd)

    attn = jnp.concatenate([o[h] for h in range(n_heads)], axis=-1)      # (S, d_q)
    h1 = x + jnp.dot(attn.astype(bf16), wo_ref[...],
                     preferred_element_type=f32)                         # residual 1

    # ---- ffn RMSNorm (f32) + SwiGLU FFN (bf16 matmuls) ----
    ms2 = jnp.mean(h1 * h1, axis=-1, keepdims=True)
    h2 = (h1 * jax.lax.rsqrt(ms2 + eps) * fnw_ref[...]).astype(bf16)

    gw = jnp.dot(h2, w13_ref[...], preferred_element_type=f32)           # (S, 2H)
    g = gw[:, :ffn_hidden]
    u = gw[:, ffn_hidden:]
    act = (g * jax.nn.sigmoid(g)) * u                                    # silu*gate
    out_ref[...] = h1 + jnp.dot(act.astype(bf16), w2_ref[...],
                                preferred_element_type=f32)


def transformer_block_pallas(x, prep, mask):
    """x: (B, S, D) float32.  prep: output of prepare_params.  mask: (S, S)."""
    B, S, D = x.shape
    x2 = x.reshape(B * S, D)

    def const_spec(shape):
        zeros = (0,) * len(shape)
        return pl.BlockSpec(shape, lambda b: zeros)

    in_specs = [
        pl.BlockSpec((S, D), lambda b: (b, 0)),               # this batch's rows
        const_spec(prep["wqkv"].shape),
        const_spec(prep["wo"].shape),
        const_spec(prep["w13"].shape),
        const_spec(prep["w2"].shape),
        const_spec(prep["anw"].shape),
        const_spec(prep["fnw"].shape),
        const_spec(prep["cos"].shape),
        const_spec(prep["sin"].shape),
        const_spec(mask.shape),
    ]

    kernel = functools.partial(
        _block_kernel, n_heads=N_HEADS, n_kv_heads=N_KV_HEADS,
        head_dim=HEAD_DIM, eps=NORM_EPS, ffn_hidden=FFN_HIDDEN)

    out = pl.pallas_call(
        kernel,
        out_shape=jax.ShapeDtypeStruct((B * S, D), jnp.float32),
        grid=(B,),
        in_specs=in_specs,
        out_specs=pl.BlockSpec((S, D), lambda b: (b, 0)),
        compiler_params=pltpu.CompilerParams(
            dimension_semantics=("parallel",),                # splits across TCs on v7x
            vmem_limit_bytes=32 * 1024 * 1024),
    )(x2, prep["wqkv"], prep["wo"], prep["w13"], prep["w2"],
      prep["anw"], prep["fnw"], prep["cos"], prep["sin"], mask)
    return out.reshape(B, S, D)


# -----------------------------------------------------------------------------
# Pure-JAX reference (mirrors the torch code path, incl. interleaved RoPE)
# -----------------------------------------------------------------------------
def transformer_block_ref(x, params, freqs_cos, freqs_sin, mask):
    B, S, D = x.shape
    n_rep = N_HEADS // N_KV_HEADS

    def rmsnorm(t, w):
        tf = t.astype(jnp.float32)
        return (tf * jax.lax.rsqrt(jnp.mean(tf * tf, -1, keepdims=True) + NORM_EPS)) * w

    hn = rmsnorm(x, params["attn_norm"])
    xq = (hn @ params["wq"]).reshape(B, S, N_HEADS, HEAD_DIM)
    xk = (hn @ params["wk"]).reshape(B, S, N_KV_HEADS, HEAD_DIM)
    xv = (hn @ params["wv"]).reshape(B, S, N_KV_HEADS, HEAD_DIM)

    def rope(t):
        te, to = t[..., 0::2], t[..., 1::2]
        c = freqs_cos[None, :, None, :]
        s = freqs_sin[None, :, None, :]
        oe = te * c - to * s
        oo = te * s + to * c
        return jnp.stack([oe, oo], axis=-1).reshape(t.shape)

    xq, xk = rope(xq), rope(xk)
    keys = jnp.repeat(xk, n_rep, axis=2)
    vals = jnp.repeat(xv, n_rep, axis=2)

    q = xq.transpose(0, 2, 1, 3)
    k = keys.transpose(0, 2, 1, 3)
    v = vals.transpose(0, 2, 1, 3)
    sc = jnp.einsum("bhqd,bhkd->bhqk", q, k) / math.sqrt(HEAD_DIM) + mask
    p = jax.nn.softmax(sc, axis=-1)
    o = jnp.einsum("bhqk,bhkd->bhqd", p, v).transpose(0, 2, 1, 3).reshape(B, S, -1)
    h1 = x + o @ params["wo"]

    h2 = rmsnorm(h1, params["ffn_norm"])
    ffn = (jax.nn.silu(h2 @ params["w1"]) * (h2 @ params["w3"])) @ params["w2"]
    return h1 + ffn


# -----------------------------------------------------------------------------
# main
# -----------------------------------------------------------------------------
if __name__ == "__main__":
    key = jax.random.PRNGKey(0)
    ks = jax.random.split(key, 12)

    def w(k, shape, scale=0.02):
        return scale * jax.random.normal(k, shape, jnp.float32)

    params = {
        "wq": w(ks[0], (DIM, N_HEADS * HEAD_DIM)),
        "wk": w(ks[1], (DIM, N_KV_HEADS * HEAD_DIM)),
        "wv": w(ks[2], (DIM, N_KV_HEADS * HEAD_DIM)),
        "wo": w(ks[3], (N_HEADS * HEAD_DIM, DIM)),
        "w1": w(ks[4], (DIM, FFN_HIDDEN)),
        "w2": w(ks[5], (FFN_HIDDEN, DIM)),
        "w3": w(ks[6], (DIM, FFN_HIDDEN)),
        "attn_norm": 1.0 + 0.01 * jax.random.normal(ks[7], (DIM,), jnp.float32),
        "ffn_norm": 1.0 + 0.01 * jax.random.normal(ks[8], (DIM,), jnp.float32),
    }

    x = jax.random.normal(ks[9], (BATCH, SEQLEN, DIM), jnp.float32)

    # rotary frequencies (precompute_freqs_cis equivalent, start_pos = 0)
    inv_freq = 1.0 / (ROPE_THETA ** (np.arange(0, HEAD_DIM, 2, dtype=np.float32) / HEAD_DIM))
    pos = np.arange(SEQLEN, dtype=np.float32)
    angles = np.outer(pos, inv_freq)                          # (S, hd//2)
    freqs_cos = jnp.asarray(np.cos(angles), jnp.float32)
    freqs_sin = jnp.asarray(np.sin(angles), jnp.float32)

    # causal mask, (S, S): big-negative strictly above the diagonal
    i = np.arange(SEQLEN)[:, None]
    j = np.arange(SEQLEN)[None, :]
    mask = jnp.asarray(np.where(j > i, -1e30, 0.0).astype(np.float32))

    # one-time weight preparation (amortized across forward calls)
    prep = jax.tree_util.tree_map(jax.block_until_ready,
                                  prepare_params(params, freqs_cos, freqs_sin))

    out = transformer_block_pallas(x, prep, mask)
    out = jax.block_until_ready(out)

    ref = jax.block_until_ready(
        transformer_block_ref(x, params, freqs_cos, freqs_sin, mask))
    np.testing.assert_allclose(np.asarray(out), np.asarray(ref), rtol=5e-2, atol=5e-2)

    print("KERNEL_OK")
</pallas_src>

<mosaic_0001>
module attributes {stable_mosaic.version = 11 : i64} {
  func.func @_block_kernel(%arg0: i32, %arg1: memref<8x256xf32, #tpu.memory_space<vmem>>, %arg2: memref<256x512xbf16, #tpu.memory_space<vmem>>, %arg3: memref<256x256xbf16, #tpu.memory_space<vmem>>, %arg4: memref<256x1536xbf16, #tpu.memory_space<vmem>>, %arg5: memref<768x256xbf16, #tpu.memory_space<vmem>>, %arg6: memref<1x256xf32, #tpu.memory_space<vmem>>, %arg7: memref<1x256xf32, #tpu.memory_space<vmem>>, %arg8: memref<8x128xf32, #tpu.memory_space<vmem>>, %arg9: memref<8x128xf32, #tpu.memory_space<vmem>>, %arg10: memref<8x8xf32, #tpu.memory_space<vmem>>, %arg11: memref<8x256xf32, #tpu.memory_space<vmem>>) attributes {dimension_semantics = [#tpu.dimension_semantics<parallel>], iteration_bounds = array<i64: 2>, scalar_prefetch = 0 : i64, scratch_operands = 0 : i64, tpu.core_type = #tpu.core_type<tc>, window_params = [{transform_indices = @transform_0, window_bounds = array<i64: 8, 256>}, {pipeline_mode = #tpu.pipeline_mode<synchronous>, transform_indices = @transform_1, window_bounds = array<i64: 256, 512>}, {pipeline_mode = #tpu.pipeline_mode<synchronous>, transform_indices = @transform_2, window_bounds = array<i64: 256, 256>}, {pipeline_mode = #tpu.pipeline_mode<synchronous>, transform_indices = @transform_3, window_bounds = array<i64: 256, 1536>}, {pipeline_mode = #tpu.pipeline_mode<synchronous>, transform_indices = @transform_4, window_bounds = array<i64: 768, 256>}, {pipeline_mode = #tpu.pipeline_mode<synchronous>, transform_indices = @transform_5, window_bounds = array<i64: 1, 256>}, {pipeline_mode = #tpu.pipeline_mode<synchronous>, transform_indices = @transform_6, window_bounds = array<i64: 1, 256>}, {pipeline_mode = #tpu.pipeline_mode<synchronous>, transform_indices = @transform_7, window_bounds = array<i64: 8, 128>}, {pipeline_mode = #tpu.pipeline_mode<synchronous>, transform_indices = @transform_8, window_bounds = array<i64: 8, 128>}, {pipeline_mode = #tpu.pipeline_mode<synchronous>, transform_indices = @transform_9, window_bounds = array<i64: 8, 8>}, {transform_indices = @transform_10, window_bounds = array<i64: 8, 256>}]} {
    %c0 = arith.constant 0 : index
    %c0_0 = arith.constant 0 : index
    %0 = vector.load %arg1[%c0, %c0_0] : memref<8x256xf32, #tpu.memory_space<vmem>>, vector<8x256xf32>
    %1 = arith.mulf %0, %0 : vector<8x256xf32>
    %cst = arith.constant dense<0.000000e+00> : vector<8xf32>
    %2 = vector.multi_reduction <add>, %1, %cst [1] : vector<8x256xf32> to vector<8xf32>
    %3 = vector.shape_cast %2 : vector<8xf32> to vector<8x1xf32>
    %cst_1 = arith.constant 2.560000e+02 : f32
    %4 = vector.broadcast %cst_1 : f32 to vector<8x1xf32>
    %5 = arith.divf %3, %4 : vector<8x1xf32>
    %cst_2 = arith.constant 9.99999974E-6 : f32
    %6 = vector.broadcast %cst_2 : f32 to vector<8x1xf32>
    %7 = arith.addf %5, %6 : vector<8x1xf32>
    %8 = math.rsqrt %7 : vector<8x1xf32>
    %9 = vector.broadcast %8 : vector<8x1xf32> to vector<8x256xf32>
    %10 = arith.mulf %0, %9 : vector<8x256xf32>
    %c0_3 = arith.constant 0 : index
    %c0_4 = arith.constant 0 : index
    %11 = vector.load %arg6[%c0_3, %c0_4] : memref<1x256xf32, #tpu.memory_space<vmem>>, vector<1x256xf32>
    %12 = vector.broadcast %11 : vector<1x256xf32> to vector<8x256xf32>
    %13 = arith.mulf %10, %12 : vector<8x256xf32>
    %14 = arith.truncf %13 : vector<8x256xf32> to vector<8x256xbf16>
    %c0_5 = arith.constant 0 : index
    %c0_6 = arith.constant 0 : index
    %15 = vector.load %arg2[%c0_5, %c0_6] : memref<256x512xbf16, #tpu.memory_space<vmem>>, vector<256x512xbf16>
    %cst_7 = arith.constant dense<0.000000e+00> : vector<8x512xf32>
    %16 = tpu.matmul %14, %15, %cst_7 {dimension_numbers = #tpu.dot_dimension_numbers<[1], [0], [0], [1], [0, 0, 1, 1], [], []>} : vector<8x256xbf16>, vector<256x512xbf16>, vector<8x512xf32> -> vector<8x512xf32>
    %17 = vector.extract_strided_slice %16 {offsets = [0, 0], sizes = [8, 256], strides = [1, 1]} : vector<8x512xf32> to vector<8x256xf32>
    %18 = vector.extract_strided_slice %16 {offsets = [0, 256], sizes = [8, 128], strides = [1, 1]} : vector<8x512xf32> to vector<8x128xf32>
    %19 = vector.extract_strided_slice %16 {offsets = [0, 384], sizes = [8, 128], strides = [1, 1]} : vector<8x512xf32> to vector<8x128xf32>
    %c0_8 = arith.constant 0 : index
    %c0_9 = arith.constant 0 : index
    %20 = vector.load %arg8[%c0_8, %c0_9] : memref<8x128xf32, #tpu.memory_space<vmem>>, vector<8x128xf32>
    %c0_10 = arith.constant 0 : index
    %c0_11 = arith.constant 0 : index
    %21 = vector.load %arg9[%c0_10, %c0_11] : memref<8x128xf32, #tpu.memory_space<vmem>>, vector<8x128xf32>
    %22 = vector.extract_strided_slice %17 {offsets = [0, 0], sizes = [8, 128], strides = [1, 1]} : vector<8x256xf32> to vector<8x128xf32>
    %23 = arith.mulf %22, %20 : vector<8x128xf32>
    %c64_i32 = arith.constant 64 : i32
    %24 = tpu.dynamic_rotate %22 by %c64_i32 dim 1 : vector<8x128xf32>, i32 -> vector<8x128xf32>
    %25 = arith.mulf %24, %21 : vector<8x128xf32>
    %26 = arith.addf %23, %25 : vector<8x128xf32>
    %27 = vector.extract_strided_slice %17 {offsets = [0, 128], sizes = [8, 128], strides = [1, 1]} : vector<8x256xf32> to vector<8x128xf32>
    %28 = arith.mulf %27, %20 : vector<8x128xf32>
    %c64_i32_12 = arith.constant 64 : i32
    %29 = tpu.dynamic_rotate %27 by %c64_i32_12 dim 1 : vector<8x128xf32>, i32 -> vector<8x128xf32>
    %30 = arith.mulf %29, %21 : vector<8x128xf32>
    %31 = arith.addf %28, %30 : vector<8x128xf32>
    %32 = vector.shape_cast %26 : vector<8x128xf32> to vector<1x8x128xf32>
    %33 = vector.shape_cast %31 : vector<8x128xf32> to vector<1x8x128xf32>
    %34 = tpu.concatenate %32, %33 in 0 : vector<1x8x128xf32>, vector<1x8x128xf32> -> vector<2x8x128xf32>
    %35 = arith.truncf %34 : vector<2x8x128xf32> to vector<2x8x128xbf16>
    %36 = arith.mulf %18, %20 : vector<8x128xf32>
    %c64_i32_13 = arith.constant 64 : i32
    %37 = tpu.dynamic_rotate %18 by %c64_i32_13 dim 1 : vector<8x128xf32>, i32 -> vector<8x128xf32>
    %38 = arith.mulf %37, %21 : vector<8x128xf32>
    %39 = arith.addf %36, %38 : vector<8x128xf32>
    %40 = vector.shape_cast %39 : vector<8x128xf32> to vector<1x8x128xf32>
    %41 = arith.truncf %40 : vector<1x8x128xf32> to vector<1x8x128xbf16>
    %42 = vector.shape_cast %19 : vector<8x128xf32> to vector<1x8x128xf32>
    %43 = arith.truncf %42 : vector<1x8x128xf32> to vector<1x8x128xbf16>
    %44 = vector.shape_cast %41 : vector<1x8x128xbf16> to vector<1x1x8x128xbf16>
    %45 = vector.broadcast %44 : vector<1x1x8x128xbf16> to vector<1x2x8x128xbf16>
    %46 = vector.shape_cast %45 : vector<1x2x8x128xbf16> to vector<2x8x128xbf16>
    %47 = vector.shape_cast %43 : vector<1x8x128xbf16> to vector<1x1x8x128xbf16>
    %48 = vector.broadcast %47 : vector<1x1x8x128xbf16> to vector<1x2x8x128xbf16>
    %49 = vector.shape_cast %48 : vector<1x2x8x128xbf16> to vector<2x8x128xbf16>
    "tpu.trace_start"() <{level = 10 : i32, message = "hqd,hkd->hqk"}> : () -> ()
    %cst_14 = arith.constant dense<0.000000e+00> : vector<2x8x8xf32>
    %50 = tpu.matmul %35, %46, %cst_14 {dimension_numbers = #tpu.dot_dimension_numbers<[2], [2], [1], [1], [0, 0, 0, 1, 1, 1], [0], [0]>} : vector<2x8x128xbf16>, vector<2x8x128xbf16>, vector<2x8x8xf32> -> vector<2x8x8xf32>
    "tpu.trace_stop"() : () -> ()
    %c0_15 = arith.constant 0 : index
    %c0_16 = arith.constant 0 : index
    %51 = vector.load %arg10[%c0_15, %c0_16] : memref<8x8xf32, #tpu.memory_space<vmem>>, vector<8x8xf32>
    %52 = vector.shape_cast %51 : vector<8x8xf32> to vector<1x8x8xf32>
    %53 = vector.broadcast %52 : vector<1x8x8xf32> to vector<2x8x8xf32>
    %54 = arith.addf %50, %53 : vector<2x8x8xf32>
    %cst_17 = arith.constant dense<0xFF800000> : vector<2x8xf32>
    %55 = vector.multi_reduction <maximumf>, %54, %cst_17 [2] : vector<2x8x8xf32> to vector<2x8xf32>
    %56 = vector.shape_cast %55 : vector<2x8xf32> to vector<2x8x1xf32>
    %57 = vector.broadcast %56 : vector<2x8x1xf32> to vector<2x8x8xf32>
    %58 = arith.subf %54, %57 : vector<2x8x8xf32>
    %59 = math.exp %58 : vector<2x8x8xf32>
    %cst_18 = arith.constant dense<0.000000e+00> : vector<2x8xf32>
    %60 = vector.multi_reduction <add>, %59, %cst_18 [2] : vector<2x8x8xf32> to vector<2x8xf32>
    %61 = vector.shape_cast %60 : vector<2x8xf32> to vector<2x8x1xf32>
    %62 = tpu.reciprocal %61 {approx = true} : vector<2x8x1xf32> -> vector<2x8x1xf32>
    %63 = vector.broadcast %62 : vector<2x8x1xf32> to vector<2x8x8xf32>
    %64 = arith.mulf %59, %63 : vector<2x8x8xf32>
    %65 = arith.truncf %64 : vector<2x8x8xf32> to vector<2x8x8xbf16>
    "tpu.trace_start"() <{level = 10 : i32, message = "hqk,hkd->hqd"}> : () -> ()
    %cst_19 = arith.constant dense<0.000000e+00> : vector<2x8x128xf32>
    %66 = tpu.matmul %65, %49, %cst_19 {dimension_numbers = #tpu.dot_dimension_numbers<[2], [1], [1], [2], [0, 0, 0, 1, 1, 2], [0], [0]>} : vector<2x8x8xbf16>, vector<2x8x128xbf16>, vector<2x8x128xf32> -> vector<2x8x128xf32>
    "tpu.trace_stop"() : () -> ()
    %67 = vector.extract_strided_slice %66 {offsets = [0, 0, 0], sizes = [1, 8, 128], strides = [1, 1, 1]} : vector<2x8x128xf32> to vector<1x8x128xf32>
    %68 = vector.shape_cast %67 : vector<1x8x128xf32> to vector<8x128xf32>
    %69 = vector.extract_strided_slice %66 {offsets = [1, 0, 0], sizes = [1, 8, 128], strides = [1, 1, 1]} : vector<2x8x128xf32> to vector<1x8x128xf32>
    %70 = vector.shape_cast %69 : vector<1x8x128xf32> to vector<8x128xf32>
    %71 = tpu.concatenate %68, %70 in 1 : vector<8x128xf32>, vector<8x128xf32> -> vector<8x256xf32>
    %72 = arith.truncf %71 : vector<8x256xf32> to vector<8x256xbf16>
    %c0_20 = arith.constant 0 : index
    %c0_21 = arith.constant 0 : index
    %73 = vector.load %arg3[%c0_20, %c0_21] : memref<256x256xbf16, #tpu.memory_space<vmem>>, vector<256x256xbf16>
    %cst_22 = arith.constant dense<0.000000e+00> : vector<8x256xf32>
    %74 = tpu.matmul %72, %73, %cst_22 {dimension_numbers = #tpu.dot_dimension_numbers<[1], [0], [0], [1], [0, 0, 1, 1], [], []>} : vector<8x256xbf16>, vector<256x256xbf16>, vector<8x256xf32> -> vector<8x256xf32>
    %75 = arith.addf %0, %74 : vector<8x256xf32>
    %76 = arith.mulf %75, %75 : vector<8x256xf32>
    %cst_23 = arith.constant dense<0.000000e+00> : vector<8xf32>
    %77 = vector.multi_reduction <add>, %76, %cst_23 [1] : vector<8x256xf32> to vector<8xf32>
    %78 = vector.shape_cast %77 : vector<8xf32> to vector<8x1xf32>
    %cst_24 = arith.constant 2.560000e+02 : f32
    %79 = vector.broadcast %cst_24 : f32 to vector<8x1xf32>
    %80 = arith.divf %78, %79 : vector<8x1xf32>
    %cst_25 = arith.constant 9.99999974E-6 : f32
    %81 = vector.broadcast %cst_25 : f32 to vector<8x1xf32>
    %82 = arith.addf %80, %81 : vector<8x1xf32>
    %83 = math.rsqrt %82 : vector<8x1xf32>
    %84 = vector.broadcast %83 : vector<8x1xf32> to vector<8x256xf32>
    %85 = arith.mulf %75, %84 : vector<8x256xf32>
    %c0_26 = arith.constant 0 : index
    %c0_27 = arith.constant 0 : index
    %86 = vector.load %arg7[%c0_26, %c0_27] : memref<1x256xf32, #tpu.memory_space<vmem>>, vector<1x256xf32>
    %87 = vector.broadcast %86 : vector<1x256xf32> to vector<8x256xf32>
    %88 = arith.mulf %85, %87 : vector<8x256xf32>
    %89 = arith.truncf %88 : vector<8x256xf32> to vector<8x256xbf16>
    %c0_28 = arith.constant 0 : index
    %c0_29 = arith.constant 0 : index
    %90 = vector.load %arg4[%c0_28, %c0_29] : memref<256x1536xbf16, #tpu.memory_space<vmem>>, vector<256x1536xbf16>
    %cst_30 = arith.constant dense<0.000000e+00> : vector<8x1536xf32>
    %91 = tpu.matmul %89, %90, %cst_30 {dimension_numbers = #tpu.dot_dimension_numbers<[1], [0], [0], [1], [0, 0, 1, 1], [], []>} : vector<8x256xbf16>, vector<256x1536xbf16>, vector<8x1536xf32> -> vector<8x1536xf32>
    %92 = vector.extract_strided_slice %91 {offsets = [0, 0], sizes = [8, 768], strides = [1, 1]} : vector<8x1536xf32> to vector<8x768xf32>
    %93 = vector.extract_strided_slice %91 {offsets = [0, 768], sizes = [8, 768], strides = [1, 1]} : vector<8x1536xf32> to vector<8x768xf32>
    %94 = arith.negf %92 : vector<8x768xf32>
    %95 = math.exp %94 : vector<8x768xf32>
    %cst_31 = arith.constant 1.000000e+00 : f32
    %96 = vector.broadcast %cst_31 : f32 to vector<8x768xf32>
    %97 = arith.addf %96, %95 : vector<8x768xf32>
    %98 = arith.divf %96, %97 : vector<8x768xf32>
    %99 = arith.mulf %92, %98 : vector<8x768xf32>
    %100 = arith.mulf %99, %93 : vector<8x768xf32>
    %101 = arith.truncf %100 : vector<8x768xf32> to vector<8x768xbf16>
    %c0_32 = arith.constant 0 : index
    %c0_33 = arith.constant 0 : index
    %102 = vector.load %arg5[%c0_32, %c0_33] : memref<768x256xbf16, #tpu.memory_space<vmem>>, vector<768x256xbf16>
    %cst_34 = arith.constant dense<0.000000e+00> : vector<8x256xf32>
    %103 = tpu.matmul %101, %102, %cst_34 {dimension_numbers = #tpu.dot_dimension_numbers<[1], [0], [0], [1], [0, 0, 1, 1], [], []>} : vector<8x768xbf16>, vector<768x256xbf16>, vector<8x256xf32> -> vector<8x256xf32>
    %104 = arith.addf %75, %103 : vector<8x256xf32>
    %c0_35 = arith.constant 0 : index
    %c0_36 = arith.constant 0 : index
    %105 = vector.load %arg11[%c0_35, %c0_36] : memref<8x256xf32, #tpu.memory_space<vmem>>, vector<8x256xf32>
    tpu.vector_store %arg11[%c0_35, %c0_36], %104 {strides = array<i32>} : memref<8x256xf32, #tpu.memory_space<vmem>>, vector<8x256xf32>,
    return
  }
  func.func @transform_0(%arg0: i32) -> (i32, i32) {
    %c0_i32 = arith.constant 0 : i32
    %c0_i32_0 = arith.constant 0 : i32
    return %arg0, %c0_i32 : i32, i32
  }
  func.func @transform_1(%arg0: i32) -> (i32, i32) {
    %c0_i32 = arith.constant 0 : i32
    %c0_i32_0 = arith.constant 0 : i32
    %c0_i32_1 = arith.constant 0 : i32
    return %c0_i32, %c0_i32_0 : i32, i32
  }
  func.func @transform_2(%arg0: i32) -> (i32, i32) {
    %c0_i32 = arith.constant 0 : i32
    %c0_i32_0 = arith.constant 0 : i32
    %c0_i32_1 = arith.constant 0 : i32
    return %c0_i32, %c0_i32_0 : i32, i32
  }
  func.func @transform_3(%arg0: i32) -> (i32, i32) {
    %c0_i32 = arith.constant 0 : i32
    %c0_i32_0 = arith.constant 0 : i32
    %c0_i32_1 = arith.constant 0 : i32
    return %c0_i32, %c0_i32_0 : i32, i32
  }
  func.func @transform_4(%arg0: i32) -> (i32, i32) {
    %c0_i32 = arith.constant 0 : i32
    %c0_i32_0 = arith.constant 0 : i32
    %c0_i32_1 = arith.constant 0 : i32
    return %c0_i32, %c0_i32_0 : i32, i32
  }
  func.func @transform_5(%arg0: i32) -> (i32, i32) {
    %c0_i32 = arith.constant 0 : i32
    %c0_i32_0 = arith.constant 0 : i32
    %c0_i32_1 = arith.constant 0 : i32
    return %c0_i32, %c0_i32_0 : i32, i32
  }
  func.func @transform_6(%arg0: i32) -> (i32, i32) {
    %c0_i32 = arith.constant 0 : i32
    %c0_i32_0 = arith.constant 0 : i32
    %c0_i32_1 = arith.constant 0 : i32
    return %c0_i32, %c0_i32_0 : i32, i32
  }
  func.func @transform_7(%arg0: i32) -> (i32, i32) {
    %c0_i32 = arith.constant 0 : i32
    %c0_i32_0 = arith.constant 0 : i32
    %c0_i32_1 = arith.constant 0 : i32
    return %c0_i32, %c0_i32_0 : i32, i32
  }
  func.func @transform_8(%arg0: i32) -> (i32, i32) {
    %c0_i32 = arith.constant 0 : i32
    %c0_i32_0 = arith.constant 0 : i32
    %c0_i32_1 = arith.constant 0 : i32
    return %c0_i32, %c0_i32_0 : i32, i32
  }
  func.func @transform_9(%arg0: i32) -> (i32, i32) {
    %c0_i32 = arith.constant 0 : i32
    %c0_i32_0 = arith.constant 0 : i32
    %c0_i32_1 = arith.constant 0 : i32
    return %c0_i32, %c0_i32_0 : i32, i32
  }
  func.func @transform_10(%arg0: i32) -> (i32, i32) {
    %c0_i32 = arith.constant 0 : i32
    %c0_i32_0 = arith.constant 0 : i32
    return %arg0, %c0_i32 : i32, i32
  }
}

</mosaic_0001>

<llo_original>
// kernel: tpu_custom_call.1
$region0: #{tpu_custom_call.1}
  #allocation0 [shape = 'u32[]', space=smem, size = 0x4, offset = 0x4, fixed_abs, tag = 'smem constant byte address 0x4 - core index']
  #allocation1 [shape = 'u32[144,128]{1,0:T(1,128)}', space=vmem, size = 0x12000, scoped, tag = 'internal scratch']
  %s0 = inlined_call_operand.hbm [shape: f32[16,256], index: 0, kind: input, shape index: {}]
  %s1 = inlined_call_operand.hbm [shape: bf16[256,512], index: 1, kind: input, shape index: {}]
  %s2 = inlined_call_operand.hbm [shape: bf16[256,256], index: 2, kind: input, shape index: {}]
  %s3 = inlined_call_operand.hbm [shape: bf16[256,1536], index: 3, kind: input, shape index: {}]
  %s4 = inlined_call_operand.hbm [shape: bf16[768,256], index: 4, kind: input, shape index: {}]
  %s5 = inlined_call_operand.vmem [shape: f32[1,256], index: 5, kind: input, shape index: {}]
  %s6 = inlined_call_operand.hbm [shape: f32[1,256], index: 6, kind: input, shape index: {}]
  %s7 = inlined_call_operand.vmem [shape: f32[8,128], index: 7, kind: input, shape index: {}]
  %s8 = inlined_call_operand.vmem [shape: f32[8,128], index: 8, kind: input, shape index: {}]
  %s9 = inlined_call_operand.vmem [shape: f32[8,8], index: 9, kind: input, shape index: {}]
  %s10 = inlined_call_operand.hbm [shape: f32[16,256], index: 10, kind: output, shape index: {}]
  %s11 = sld [smem:[#allocation0]]
  $region97: #{tpu_custom_call.1} parent=0
    _
  %s13 = ssub.s32 1, %s11
  %s14 = scalar_select 0, %s13, %s11
  $region1: #{tpu_custom_call.1} parent=0
    #allocation2 [shape = 'u8[16384]{0}', space=vmem, size = 0x4000, scoped, tag = 'input window, operand 0']
    #allocation3 [shape = 's32[2]{0}', space=sflag, size = 0x8, scoped, tag = 'scoped memory for tpu_custom_call.1']
    #allocation4 [shape = 's32[2]{0}', space=sflag, size = 0x8, scoped, tag = 'scoped memory for tpu_custom_call.1']
    #allocation5 [shape = 'u8[262144]{0}', space=vmem, size = 0x40000, scoped, tag = 'input window, operand 1, single buffered']
    #allocation6 [shape = 's32[1]{0}', space=sflag, size = 0x4, scoped, tag = 'scoped memory for tpu_custom_call.1']
    #allocation7 [shape = 'u8[131072]{0}', space=vmem, size = 0x20000, scoped, tag = 'input window, operand 2, single buffered']
    #allocation8 [shape = 'u8[786432]{0}', space=vmem, size = 0xc0000, scoped, tag = 'input window, operand 3, single buffered']
    #allocation9 [shape = 's32[1]{0}', space=sflag, size = 0x4, scoped, tag = 'scoped memory for tpu_custom_call.1']
    #allocation10 [shape = 'u8[393216]{0}', space=vmem, size = 0x60000, scoped, tag = 'input window, operand 4, single buffered']
    #allocation11 [shape = 'u8[1024]{0}', space=vmem, size = 0x400, scoped, tag = 'input window, operand 6, single buffered']
    #allocation12 [shape = 's32[1]{0}', space=sflag, size = 0x4, scoped, tag = 'scoped memory for tpu_custom_call.1']
    #allocation13 [shape = 'u8[16384]{0}', space=vmem, size = 0x4000, scoped, tag = 'output window, operand 0']
    %15 = vsyncpa [#allocation3], 0
    %s16 = scalar_lea.sflag [#allocation3], 1
    %17 = vsyncpa %s16, 0
    %18 = vsyncpa [#allocation6], 0
    %19 = vsyncpa [#allocation9], 0
    %20 = vsyncpa [#allocation12], 0
    %21 = vsyncpa [#allocation4], 0
    %s22 = scalar_lea.sflag [#allocation4], 1
    %23 = vsyncpa %s22, 0
    loop: start=0, step=1, limit=4
    $region2: #{tpu_custom_call.1} parent=1 // loop_pre_header
      _
    $region3: #{tpu_custom_call.1} parent=1 // loop_header
      %s25 = sphi 0, %s29
      %p26 = scmp.ge.s32.totalorder %s25, 4
      %s35 = sphi 0, %s37
      %s38 = sphi 0, %s35
      %s39 = sphi 0, %s38
      %s55 = sphi 0, %s39
      %s59 = sphi 0, %s59
      %s61 = sphi 0, %s59
      %s62 = sphi 0, %s61
      %s76 = sphi 0, %s62
      %s80 = sphi 0, %s80
      %s82 = sphi 0, %s80
      %s83 = sphi 0, %s82
      %s97 = sphi 0, %s83
      %s101 = sphi 0, %s101
      %s103 = sphi 0, %s101
      %s104 = sphi 0, %s103
      %s118 = sphi 0, %s104
      %s122 = sphi 0, %s122
      %s124 = sphi 0, %s122
      %s125 = sphi 0, %s124
      %s139 = sphi 0, %s125
      %s143 = sphi 0, %s143
      %s145 = sphi 0, %s143
      %s146 = sphi 0, %s145
      %s160 = sphi 0, %s146
      %s164 = sphi 0, %s164
      %s166 = sphi 0, %s164
      %s167 = sphi 0, %s166
      %s181 = sphi 0, %s167
      %s185 = sphi 0, %s185
      %s187 = sphi 0, %s185
      %s188 = sphi 0, %s187
      %s202 = sphi 0, %s188
      %s206 = sphi 0, %s206
      %s208 = sphi 0, %s206
      %s209 = sphi 0, %s208
      %s223 = sphi 0, %s209
      %s227 = sphi 0, %s227
      %s229 = sphi 0, %s227
      %s230 = sphi 0, %s229
      %s244 = sphi 0, %s230
      %s250 = sphi 0, %s252
      %s253 = sphi 0, %s250
      %s254 = sphi 0, %s253
      %s270 = sphi 0, %s254
    $region4: #{tpu_custom_call.1} parent=1 // loop_header_branch
      %28 = sbr.rel (%p26) target = $region8
    $region5: #{tpu_custom_call.1} parent=1 // loop_body
      %s30 = ssub.s32 %s25, 1
      %s31 = ssub.s32 %s25, 2
      %s32 = sadd.s32 %s25, 1
      %s33 = ssub.s32 %s25, %s32
      %p34 = scmp.eq.s32.totalorder %s33, 0
      %s36 = sadd.s32 %s35, 1
      %s37 = scalar_select %p34, %s35, %s36
      %p40 = pneg %p34
      %p41 = scmp.eq.s32.totalorder %s25, 1
      %p42 = por %p40, %p41
      %p43 = scmp.ne.s32.totalorder %s35, %s38
      %p44 = scmp.eq.s32.totalorder %s25, 0
      %p45 = por %p43, %p44
      %p46 = scmp.ne.s32.totalorder %s35, %s38
      %p47 = scmp.eq.s32.totalorder %s30, 1
      %p48 = por %p46, %p47
      %p49 = scmp.ne.s32.totalorder %s38, %s39
      %p50 = scmp.eq.s32.totalorder %s30, 0
      %p51 = por %p49, %p50
      %p52 = scmp.ne.s32.totalorder %s38, %s39
      %p53 = scmp.eq.s32.totalorder %s31, 1
      %p54 = por %p52, %p53
      %p56 = scmp.ne.s32.totalorder %s39, %s55
      %p57 = scmp.eq.s32.totalorder %s31, 0
      %p58 = por %p56, %p57
      %s60 = sadd.s32 %s59, 1
      %p63 = scmp.eq.s32.totalorder %s25, 1
      %p64 = scmp.ne.s32.totalorder %s59, %s61
      %p65 = scmp.eq.s32.totalorder %s25, 0
      %p66 = por %p64, %p65
      %p67 = scmp.ne.s32.totalorder %s59, %s61
      %p68 = scmp.eq.s32.totalorder %s30, 1
      %p69 = por %p67, %p68
      %p70 = scmp.ne.s32.totalorder %s61, %s62
      %p71 = scmp.eq.s32.totalorder %s30, 0
      %p72 = por %p70, %p71
      %p73 = scmp.ne.s32.totalorder %s61, %s62
      %p74 = scmp.eq.s32.totalorder %s31, 1
      %p75 = por %p73, %p74
      %p77 = scmp.ne.s32.totalorder %s62, %s76
      %p78 = scmp.eq.s32.totalorder %s31, 0
      %p79 = por %p77, %p78
      %s81 = sadd.s32 %s80, 1
      %p84 = scmp.eq.s32.totalorder %s25, 1
      %p85 = scmp.ne.s32.totalorder %s80, %s82
      %p86 = scmp.eq.s32.totalorder %s25, 0
      %p87 = por %p85, %p86
      %p88 = scmp.ne.s32.totalorder %s80, %s82
      %p89 = scmp.eq.s32.totalorder %s30, 1
      %p90 = por %p88, %p89
      %p91 = scmp.ne.s32.totalorder %s82, %s83
      %p92 = scmp.eq.s32.totalorder %s30, 0
      %p93 = por %p91, %p92
      %p94 = scmp.ne.s32.totalorder %s82, %s83
      %p95 = scmp.eq.s32.totalorder %s31, 1
      %p96 = por %p94, %p95
      %p98 = scmp.ne.s32.totalorder %s83, %s97
      %p99 = scmp.eq.s32.totalorder %s31, 0
      %p100 = por %p98, %p99
      %s102 = sadd.s32 %s101, 1
      %p105 = scmp.eq.s32.totalorder %s25, 1
      %p106 = scmp.ne.s32.totalorder %s101, %s103
      %p107 = scmp.eq.s32.totalorder %s25, 0
      %p108 = por %p106, %p107
      %p109 = scmp.ne.s32.totalorder %s101, %s103
      %p110 = scmp.eq.s32.totalorder %s30, 1
      %p111 = por %p109, %p110
      %p112 = scmp.ne.s32.totalorder %s103, %s104
      %p113 = scmp.eq.s32.totalorder %s30, 0
      %p114 = por %p112, %p113
      %p115 = scmp.ne.s32.totalorder %s103, %s104
      %p116 = scmp.eq.s32.totalorder %s31, 1
      %p117 = por %p115, %p116
      %p119 = scmp.ne.s32.totalorder %s104, %s118
      %p120 = scmp.eq.s32.totalorder %s31, 0
      %p121 = por %p119, %p120
      %s123 = sadd.s32 %s122, 1
      %p126 = scmp.eq.s32.totalorder %s25, 1
      %p127 = scmp.ne.s32.totalorder %s122, %s124
      %p128 = scmp.eq.s32.totalorder %s25, 0
      %p129 = por %p127, %p128
      %p130 = scmp.ne.s32.totalorder %s122, %s124
      %p131 = scmp.eq.s32.totalorder %s30, 1
      %p132 = por %p130, %p131
      %p133 = scmp.ne.s32.totalorder %s124, %s125
      %p134 = scmp.eq.s32.totalorder %s30, 0
      %p135 = por %p133, %p134
      %p136 = scmp.ne.s32.totalorder %s124, %s125
      %p137 = scmp.eq.s32.totalorder %s31, 1
      %p138 = por %p136, %p137
      %p140 = scmp.ne.s32.totalorder %s125, %s139
      %p141 = scmp.eq.s32.totalorder %s31, 0
      %p142 = por %p140, %p141
      %s144 = sadd.s32 %s143, 1
      %p147 = scmp.eq.s32.totalorder %s25, 1
      %p148 = scmp.ne.s32.totalorder %s143, %s145
      %p149 = scmp.eq.s32.totalorder %s25, 0
      %p150 = por %p148, %p149
      %p151 = scmp.ne.s32.totalorder %s143, %s145
      %p152 = scmp.eq.s32.totalorder %s30, 1
      %p153 = por %p151, %p152
      %p154 = scmp.ne.s32.totalorder %s145, %s146
      %p155 = scmp.eq.s32.totalorder %s30, 0
      %p156 = por %p154, %p155
      %p157 = scmp.ne.s32.totalorder %s145, %s146
      %p158 = scmp.eq.s32.totalorder %s31, 1
      %p159 = por %p157, %p158
      %p161 = scmp.ne.s32.totalorder %s146, %s160
      %p162 = scmp.eq.s32.totalorder %s31, 0
      %p163 = por %p161, %p162
      %s165 = sadd.s32 %s164, 1
      %p168 = scmp.eq.s32.totalorder %s25, 1
      %p169 = scmp.ne.s32.totalorder %s164, %s166
      %p170 = scmp.eq.s32.totalorder %s25, 0
      %p171 = por %p169, %p170
      %p172 = scmp.ne.s32.totalorder %s164, %s166
      %p173 = scmp.eq.s32.totalorder %s30, 1
      %p174 = por %p172, %p173
      %p175 = scmp.ne.s32.totalorder %s166, %s167
      %p176 = scmp.eq.s32.totalorder %s30, 0
      %p177 = por %p175, %p176
      %p178 = scmp.ne.s32.totalorder %s166, %s167
      %p179 = scmp.eq.s32.totalorder %s31, 1
      %p180 = por %p178, %p179
      %p182 = scmp.ne.s32.totalorder %s167, %s181
      %p183 = scmp.eq.s32.totalorder %s31, 0
      %p184 = por %p182, %p183
      %s186 = sadd.s32 %s185, 1
      %p189 = scmp.eq.s32.totalorder %s25, 1
      %p190 = scmp.ne.s32.totalorder %s185, %s187
      %p191 = scmp.eq.s32.totalorder %s25, 0
      %p192 = por %p190, %p191
      %p193 = scmp.ne.s32.totalorder %s185, %s187
      %p194 = scmp.eq.s32.totalorder %s30, 1
      %p195 = por %p193, %p194
      %p196 = scmp.ne.s32.totalorder %s187, %s188
      %p197 = scmp.eq.s32.totalorder %s30, 0
      %p198 = por %p196, %p197
      %p199 = scmp.ne.s32.totalorder %s187, %s188
      %p200 = scmp.eq.s32.totalorder %s31, 1
      %p201 = por %p199, %p200
      %p203 = scmp.ne.s32.totalorder %s188, %s202
      %p204 = scmp.eq.s32.totalorder %s31, 0
      %p205 = por %p203, %p204
      %s207 = sadd.s32 %s206, 1
      %p210 = scmp.eq.s32.totalorder %s25, 1
      %p211 = scmp.ne.s32.totalorder %s206, %s208
      %p212 = scmp.eq.s32.totalorder %s25, 0
      %p213 = por %p211, %p212
      %p214 = scmp.ne.s32.totalorder %s206, %s208
      %p215 = scmp.eq.s32.totalorder %s30, 1
      %p216 = por %p214, %p215
      %p217 = scmp.ne.s32.totalorder %s208, %s209
      %p218 = scmp.eq.s32.totalorder %s30, 0
      %p219 = por %p217, %p218
      %p220 = scmp.ne.s32.totalorder %s208, %s209
      %p221 = scmp.eq.s32.totalorder %s31, 1
      %p222 = por %p220, %p221
      %p224 = scmp.ne.s32.totalorder %s209, %s223
      %p225 = scmp.eq.s32.totalorder %s31, 0
      %p226 = por %p224, %p225
      %s228 = sadd.s32 %s227, 1
      %p231 = scmp.eq.s32.totalorder %s25, 1
      %p232 = scmp.ne.s32.totalorder %s227, %s229
      %p233 = scmp.eq.s32.totalorder %s25, 0
      %p234 = por %p232, %p233
      %p235 = scmp.ne.s32.totalorder %s227, %s229
      %p236 = scmp.eq.s32.totalorder %s30, 1
      %p237 = por %p235, %p236
      %p238 = scmp.ne.s32.totalorder %s229, %s230
      %p239 = scmp.eq.s32.totalorder %s30, 0
      %p240 = por %p238, %p239
      %p241 = scmp.ne.s32.totalorder %s229, %s230
      %p242 = scmp.eq.s32.totalorder %s31, 1
      %p243 = por %p241, %p242
      %p245 = scmp.ne.s32.totalorder %s230, %s244
      %p246 = scmp.eq.s32.totalorder %s31, 0
      %p247 = por %p245, %p246
      %s248 = ssub.s32 %s25, %s32
      %p249 = scmp.eq.s32.totalorder %s248, 0
      %s251 = sadd.s32 %s250, 1
      %s252 = scalar_select %p249, %s250, %s251
      %p255 = pneg %p249
      %p256 = scmp.eq.s32.totalorder %s25, 1
      %p257 = por %p255, %p256
      %p258 = scmp.ne.s32.totalorder %s250, %s253
      %p259 = scmp.eq.s32.totalorder %s25, 0
      %p260 = por %p258, %p259
      %p261 = scmp.ne.s32.totalorder %s250, %s253
      %p262 = scmp.eq.s32.totalorder %s30, 1
      %p263 = por %p261, %p262
      %p264 = scmp.ne.s32.totalorder %s253, %s254
      %p265 = scmp.eq.s32.totalorder %s30, 0
      %p266 = por %p264, %p265
      %p267 = scmp.ne.s32.totalorder %s253, %s254
      %p268 = scmp.eq.s32.totalorder %s31, 1
      %p269 = por %p267, %p268
      %p271 = scmp.ne.s32.totalorder %s254, %s270
      %p272 = scmp.eq.s32.totalorder %s31, 0
      %p273 = por %p271, %p272
      %p274 = scmp.le.s32.totalorder 1, %s25
      %p275 = scmp.lt.s32.totalorder %s25, 3
      %p276 = pnand %p274, %p275
      %p277 = pneg %p276
      // Predicated region
      $region9: #{tpu_custom_call.1} parent=5 // pred_check
        _
      $region10: #{tpu_custom_call.1} parent=5 // pred_check_branch
        %279 = sbr.rel (%p276) target = $region12
      $region11: #{tpu_custom_call.1} parent=5 // pred_region
        %s280 = ssub.s32 %s25, 1
        // Predicated region
        $region13: #{tpu_custom_call.1} parent=11 // pred_check
          %p281 = pneg %p72
        $region14: #{tpu_custom_call.1} parent=11 // pred_check_branch
          %283 = sbr.rel (%p281) target = $region16
        $region15: #{tpu_custom_call.1} parent=11 // pred_region
          %s285 = ssub.s32 8192, 8192
          %286 = vsyncadd [#allocation6], %s285
          %s287 = sshll.u32 [#allocation5], 4
          %s288 = int_to_ptr.vmem [resolvable:$true] %s287
          %293 = dma.hbm_to_vmem [thread:$0]  %s1, 8192, %s288, [#allocation6], 256, 256, 16
        $region16: #{tpu_custom_call.1} parent=11 // pred_fallthru
          _
        // Predicated region
        $region17: #{tpu_custom_call.1} parent=11 // pred_check
          %p294 = pneg %p93
        $region18: #{tpu_custom_call.1} parent=11 // pred_check_branch
          %296 = sbr.rel (%p294) target = $region20
        $region19: #{tpu_custom_call.1} parent=11 // pred_region
          %s298 = ssub.s32 4096, 4096
          %299 = vsyncadd [#allocation6], %s298
          %s300 = sshll.u32 [#allocation7], 4
          %s301 = int_to_ptr.vmem [resolvable:$true] %s300
          %306 = dma.hbm_to_vmem [thread:$0]  %s2, 4096, %s301, [#allocation6], 128, 128, 8
        $region20: #{tpu_custom_call.1} parent=11 // pred_fallthru
          _
        // Predicated region
        $region21: #{tpu_custom_call.1} parent=11 // pred_check
          %p307 = pneg %p114
        $region22: #{tpu_custom_call.1} parent=11 // pred_check_branch
          %309 = sbr.rel (%p307) target = $region24
        $region23: #{tpu_custom_call.1} parent=11 // pred_region
          %s311 = ssub.s32 24576, 24576
          %312 = vsyncadd [#allocation9], %s311
          %s313 = sshll.u32 [#allocation8], 4
          %s314 = int_to_ptr.vmem [resolvable:$true] %s313
          %319 = dma.hbm_to_vmem [thread:$0]  %s3, 24576, %s314, [#allocation9], 768, 768, 48
        $region24: #{tpu_custom_call.1} parent=11 // pred_fallthru
          _
        // Predicated region
        $region25: #{tpu_custom_call.1} parent=11 // pred_check
          %p320 = pneg %p135
        $region26: #{tpu_custom_call.1} parent=11 // pred_check_branch
          %322 = sbr.rel (%p320) target = $region28
        $region27: #{tpu_custom_call.1} parent=11 // pred_region
          %s324 = ssub.s32 12288, 12288
          %325 = vsyncadd [#allocation9], %s324
          %s326 = sshll.u32 [#allocation10], 4
          %s327 = int_to_ptr.vmem [resolvable:$true] %s326
          %332 = dma.hbm_to_vmem [thread:$0]  %s4, 12288, %s327, [#allocation9], 128, 128, 8
        $region28: #{tpu_custom_call.1} parent=11 // pred_fallthru
          _
        // Predicated region
        $region29: #{tpu_custom_call.1} parent=11 // pred_check
          %p333 = pneg %p156
        $region30: #{tpu_custom_call.1} parent=11 // pred_check_branch
          %335 = sbr.rel (%p333) target = $region32
        $region31: #{tpu_custom_call.1} parent=11 // pred_region
          _
        $region32: #{tpu_custom_call.1} parent=11 // pred_fallthru
          _
        // Predicated region
        $region33: #{tpu_custom_call.1} parent=11 // pred_check
          %p336 = pneg %p177
        $region34: #{tpu_custom_call.1} parent=11 // pred_check_branch
          %338 = sbr.rel (%p336) target = $region36
        $region35: #{tpu_custom_call.1} parent=11 // pred_region
          %s340 = ssub.s32 32, 32
          %341 = vsyncadd [#allocation12], %s340
          %s343 = sshll.u32 [#allocation11], 4
          %s344 = int_to_ptr.vmem [resolvable:$true] %s343
          %346 = dma.hbm_to_vmem [thread:$0]  %s6, 32, %s344, [#allocation12]
        $region36: #{tpu_custom_call.1} parent=11 // pred_fallthru
          _
        // Predicated region
        $region37: #{tpu_custom_call.1} parent=11 // pred_check
          %p347 = pneg %p198
        $region38: #{tpu_custom_call.1} parent=11 // pred_check_branch
          %349 = sbr.rel (%p347) target = $region40
        $region39: #{tpu_custom_call.1} parent=11 // pred_region
          _
        $region40: #{tpu_custom_call.1} parent=11 // pred_fallthru
          _
        // Predicated region
        $region41: #{tpu_custom_call.1} parent=11 // pred_check
          %p350 = pneg %p219
        $region42: #{tpu_custom_call.1} parent=11 // pred_check_branch
          %352 = sbr.rel (%p350) target = $region44
        $region43: #{tpu_custom_call.1} parent=11 // pred_region
          _
        $region44: #{tpu_custom_call.1} parent=11 // pred_fallthru
          _
        // Predicated region
        $region45: #{tpu_custom_call.1} parent=11 // pred_check
          %p353 = pneg %p240
        $region46: #{tpu_custom_call.1} parent=11 // pred_check_branch
          %355 = sbr.rel (%p353) target = $region48
        $region47: #{tpu_custom_call.1} parent=11 // pred_region
          _
        $region48: #{tpu_custom_call.1} parent=11 // pred_fallthru
          _
      $region12: #{tpu_custom_call.1} parent=5 // pred_fallthru
        _
      %p356 = scmp.lt.s32.totalorder %s25, 2
      // Predicated region
      $region49: #{tpu_custom_call.1} parent=5 // pred_check
        %p357 = pneg %p356
      $region50: #{tpu_custom_call.1} parent=5 // pred_check_branch
        %359 = sbr.rel (%p357) target = $region52
      $region51: #{tpu_custom_call.1} parent=5 // pred_region
        // Predicated region
        $region53: #{tpu_custom_call.1} parent=51 // pred_check
          %p360 = pneg %p45
        $region54: #{tpu_custom_call.1} parent=51 // pred_check_branch
          %362 = sbr.rel (%p360) target = $region56
        $region55: #{tpu_custom_call.1} parent=51 // pred_region
          %s363 = sand.u32 %s35, 1
          %s364 = scalar_lea.sflag [#allocation3], %s363
          %s365 = sand.u32 %s35, 1
          %s366 = smul.addr %s365, 16
          %s367 = scalar_lea.vmem [#allocation2], %s366
          %s369 = ssub.s32 256, 256
          %370 = vsyncadd %s364, %s369
          %s371 = smul.addr %s25, 2
          %s372 = smul.addr %s371, 128
          %s373 = scalar_lea.hbm %s0, %s372
          %s375 = sshll.u32 %s367, 4
          %s376 = int_to_ptr.vmem [resolvable:$true] %s375
          %378 = dma.hbm_to_vmem [thread:$0]  %s373, 256, %s376, %s364
        $region56: #{tpu_custom_call.1} parent=51 // pred_fallthru
          _
      $region52: #{tpu_custom_call.1} parent=5 // pred_fallthru
        _
      %p379 = scmp.le.s32.totalorder 1, %s25
      %p380 = scmp.lt.s32.totalorder %s25, 3
      %p381 = pnand %p379, %p380
      %p382 = pneg %p381
      // Predicated region
      $region57: #{tpu_custom_call.1} parent=5 // pred_check
        _
      $region58: #{tpu_custom_call.1} parent=5 // pred_check_branch
        %384 = sbr.rel (%p381) target = $region60
      $region59: #{tpu_custom_call.1} parent=5 // pred_region
        %s385 = ssub.s32 %s25, 1
        %s386 = sand.u32 %s38, 1
        %s387 = scalar_lea.sflag [#allocation3], %s386
        %s388 = sand.u32 %s38, 1
        %s389 = smul.addr %s388, 16
        %s390 = scalar_lea.vmem [#allocation2], %s389
        // Predicated region
        $region61: #{tpu_custom_call.1} parent=59 // pred_check
          %p391 = pneg %p51
        $region62: #{tpu_custom_call.1} parent=59 // pred_check_branch
          %393 = sbr.rel (%p391) target = $region64
        $region63: #{tpu_custom_call.1} parent=59 // pred_region
          %394 = dma.done %s387, 256
        $region64: #{tpu_custom_call.1} parent=59 // pred_fallthru
          _
        // Predicated region
        $region65: #{tpu_custom_call.1} parent=59 // pred_check
          %p395 = pneg %p72
        $region66: #{tpu_custom_call.1} parent=59 // pred_check_branch
          %397 = sbr.rel (%p395) target = $region68
        $region67: #{tpu_custom_call.1} parent=59 // pred_region
          %398 = dma.done [#allocation6], 8192
        $region68: #{tpu_custom_call.1} parent=59 // pred_fallthru
          _
        // Predicated region
        $region69: #{tpu_custom_call.1} parent=59 // pred_check
          %p399 = pneg %p93
        $region70: #{tpu_custom_call.1} parent=59 // pred_check_branch
          %401 = sbr.rel (%p399) target = $region72
        $region71: #{tpu_custom_call.1} parent=59 // pred_region
          %402 = dma.done [#allocation6], 4096
        $region72: #{tpu_custom_call.1} parent=59 // pred_fallthru
          _
        // Predicated region
        $region73: #{tpu_custom_call.1} parent=59 // pred_check
          %p403 = pneg %p114
        $region74: #{tpu_custom_call.1} parent=59 // pred_check_branch
          %405 = sbr.rel (%p403) target = $region76
        $region75: #{tpu_custom_call.1} parent=59 // pred_region
          %406 = dma.done [#allocation9], 24576
        $region76: #{tpu_custom_call.1} parent=59 // pred_fallthru
          _
        // Predicated region
        $region77: #{tpu_custom_call.1} parent=59 // pred_check
          %p407 = pneg %p135
        $region78: #{tpu_custom_call.1} parent=59 // pred_check_branch
          %409 = sbr.rel (%p407) target = $region80
        $region79: #{tpu_custom_call.1} parent=59 // pred_region
          %410 = dma.done [#allocation9], 12288
        $region80: #{tpu_custom_call.1} parent=59 // pred_fallthru
          _
        // Predicated region
        $region81: #{tpu_custom_call.1} parent=59 // pred_check
          %p411 = pneg %p177
        $region82: #{tpu_custom_call.1} parent=59 // pred_check_branch
          %413 = sbr.rel (%p411) target = $region84
        $region83: #{tpu_custom_call.1} parent=59 // pred_region
          %414 = dma.done [#allocation12], 32
        $region84: #{tpu_custom_call.1} parent=59 // pred_fallthru
          _
        %s415 = sand.u32 %s38, 1
        %s416 = scalar_lea.sflag [#allocation3], %s415
        %s417 = sand.u32 %s38, 1
        %s418 = smul.addr %s417, 16
        %s419 = scalar_lea.vmem [#allocation2], %s418
        %p420 = pneg %p51
        %p421 = pneg %p48
        %p422 = pneg %p72
        %p423 = pneg %p69
        %p424 = pneg %p93
        %p425 = pneg %p90
        %p426 = pneg %p114
        %p427 = pneg %p111
        %p428 = pneg %p135
        %p429 = pneg %p132
        %p430 = pneg %p156
        %p431 = pneg %p153
        %p432 = pneg %p177
        %p433 = pneg %p174
        %p434 = pneg %p198
        %p435 = pneg %p195
        %p436 = pneg %p219
        %p437 = pneg %p216
        %p438 = pneg %p240
        %p439 = pneg %p237
        %p440 = pneg %p266
        %p441 = pneg %p263
        %s442 = sand.u32 %s253, 1
        %s443 = scalar_lea.sflag [#allocation4], %s442
        %s444 = sand.u32 %s253, 1
        %s445 = smul.addr %s444, 16
        %s446 = scalar_lea.vmem [#allocation13], %s445
        %v448 = vld [vmem:[%s390] sm:$0xff]
        %v449 = vld [vmem:[%s390 + $0x8] sm:$0xff]
        %v450 = vmul.f32 %v448, %v448
        %v451 = vmul.f32 %v449, %v449
        %v452 = vadd.f32 %v450, %v451
        %453 = vadd.xlane.f32.xlu0 %v452
        %v454 = vpop.xlane.xlu0 %453
        %v455 = vrcp.pop 256.0
        %v456 = vmul.f32 %v454, %v455
        %v457 = vadd.f32 %v456, 1e-05
        %v458 = vrsqrt.pop %v457
        %v459 = vmul.f32 %v448, %v458
        %v460 = vmul.f32 %v449, %v458
        %v461 = vld [vmem:[%s5] sm:$0x3]
        %v463 = vlaneseq
        %v464 = vshrl.u32 %v463, 7
        %v465 = vsub.s32 0, %v464
        %v466 = vrot.slane %v461, %v465
        %v467 = vlaneseq
        %v468 = vshrl.u32 %v467, 7
        %v469 = vsub.s32 1, %v468
        %v470 = vrot.slane %v461, %v469
        %v473 = vmul.f32 %v459, %v466
        %v474 = vmul.f32 %v460, %v470
        %v475 = vpack.c.bf16 %v473, %v473
        %v476 = vpack.c.bf16 %v474, %v474
        %v477 = vld [vmem:[#allocation5] sm:$0xff]
        %v478 = vld [vmem:[#allocation5 + $0x8] sm:$0xff]
        %v479 = vld [vmem:[#allocation5 + $0x10] sm:$0xff]
        %v480 = vld [vmem:[#allocation5 + $0x18] sm:$0xff]
        %v481 = vld [vmem:[#allocation5 + $0x20] sm:$0xff]
        %v482 = vld [vmem:[#allocation5 + $0x28] sm:$0xff]
        %v483 = vld [vmem:[#allocation5 + $0x30] sm:$0xff]
        %v484 = vld [vmem:[#allocation5 + $0x38] sm:$0xff]
        %v485 = vld [vmem:[#allocation5 + $0x40] sm:$0xff]
        %v486 = vld [vmem:[#allocation5 + $0x48] sm:$0xff]
        %v487 = vld [vmem:[#allocation5 + $0x50] sm:$0xff]
        %v488 = vld [vmem:[#allocation5 + $0x58] sm:$0xff]
        %v489 = vld [vmem:[#allocation5 + $0x60] sm:$0xff]
        %v490 = vld [vmem:[#allocation5 + $0x68] sm:$0xff]
        %v491 = vld [vmem:[#allocation5 + $0x70] sm:$0xff]
        %v492 = vld [vmem:[#allocation5 + $0x78] sm:$0xff]
        %v493 = vld [vmem:[#allocation5 + $0x80] sm:$0xff]
        %v494 = vld [vmem:[#allocation5 + $0x88] sm:$0xff]
        %v495 = vld [vmem:[#allocation5 + $0x90] sm:$0xff]
        %v496 = vld [vmem:[#allocation5 + $0x98] sm:$0xff]
        %v497 = vld [vmem:[#allocation5 + $0xa0] sm:$0xff]
        %v498 = vld [vmem:[#allocation5 + $0xa8] sm:$0xff]
        %v499 = vld [vmem:[#allocation5 + $0xb0] sm:$0xff]
        %v500 = vld [vmem:[#allocation5 + $0xb8] sm:$0xff]
        %v501 = vld [vmem:[#allocation5 + $0xc0] sm:$0xff]
        %v502 = vld [vmem:[#allocation5 + $0xc8] sm:$0xff]
        %v503 = vld [vmem:[#allocation5 + $0xd0] sm:$0xff]
        %v504 = vld [vmem:[#allocation5 + $0xd8] sm:$0xff]
        %v505 = vld [vmem:[#allocation5 + $0xe0] sm:$0xff]
        %v506 = vld [vmem:[#allocation5 + $0xe8] sm:$0xff]
        %v507 = vld [vmem:[#allocation5 + $0xf0] sm:$0xff]
        %v508 = vld [vmem:[#allocation5 + $0xf8] sm:$0xff]
        %v509 = vld [vmem:[#allocation5 + $0x100] sm:$0xff]
        %v510 = vld [vmem:[#allocation5 + $0x108] sm:$0xff]
        %v511 = vld [vmem:[#allocation5 + $0x110] sm:$0xff]
        %v512 = vld [vmem:[#allocation5 + $0x118] sm:$0xff]
        %v513 = vld [vmem:[#allocation5 + $0x120] sm:$0xff]
        %v514 = vld [vmem:[#allocation5 + $0x128] sm:$0xff]
        %v515 = vld [vmem:[#allocation5 + $0x130] sm:$0xff]
        %v516 = vld [vmem:[#allocation5 + $0x138] sm:$0xff]
        %v517 = vld [vmem:[#allocation5 + $0x140] sm:$0xff]
        %v518 = vld [vmem:[#allocation5 + $0x148] sm:$0xff]
        %v519 = vld [vmem:[#allocation5 + $0x150] sm:$0xff]
        %v520 = vld [vmem:[#allocation5 + $0x158] sm:$0xff]
        %v521 = vld [vmem:[#allocation5 + $0x160] sm:$0xff]
        %v522 = vld [vmem:[#allocation5 + $0x168] sm:$0xff]
        %v523 = vld [vmem:[#allocation5 + $0x170] sm:$0xff]
        %v524 = vld [vmem:[#allocation5 + $0x178] sm:$0xff]
        %v525 = vld [vmem:[#allocation5 + $0x180] sm:$0xff]
        %v526 = vld [vmem:[#allocation5 + $0x188] sm:$0xff]
        %v527 = vld [vmem:[#allocation5 + $0x190] sm:$0xff]
        %v528 = vld [vmem:[#allocation5 + $0x198] sm:$0xff]
        %v529 = vld [vmem:[#allocation5 + $0x1a0] sm:$0xff]
        %v530 = vld [vmem:[#allocation5 + $0x1a8] sm:$0xff]
        %v531 = vld [vmem:[#allocation5 + $0x1b0] sm:$0xff]
        %v532 = vld [vmem:[#allocation5 + $0x1b8] sm:$0xff]
        %v533 = vld [vmem:[#allocation5 + $0x1c0] sm:$0xff]
        %v534 = vld [vmem:[#allocation5 + $0x1c8] sm:$0xff]
        %v535 = vld [vmem:[#allocation5 + $0x1d0] sm:$0xff]
        %v536 = vld [vmem:[#allocation5 + $0x1d8] sm:$0xff]
        %v537 = vld [vmem:[#allocation5 + $0x1e0] sm:$0xff]
        %v538 = vld [vmem:[#allocation5 + $0x1e8] sm:$0xff]
        %v539 = vld [vmem:[#allocation5 + $0x1f0] sm:$0xff]
        %v540 = vld [vmem:[#allocation5 + $0x1f8] sm:$0xff]
        %v605 = vunpack.c.l.b16 %v477
        %v606 = vunpack.c.h.b16 %v477
        %v607 = vunpack.c.l.b16 %v478
        %v608 = vunpack.c.h.b16 %v478
        %v609 = vunpack.c.l.b16 %v479
        %v610 = vunpack.c.h.b16 %v479
        %v611 = vunpack.c.l.b16 %v480
        %v612 = vunpack.c.h.b16 %v480
        %v613 = vunpack.c.l.b16 %v481
        %v614 = vunpack.c.h.b16 %v481
        %v615 = vunpack.c.l.b16 %v482
        %v616 = vunpack.c.h.b16 %v482
        %v617 = vunpack.c.l.b16 %v483
        %v618 = vunpack.c.h.b16 %v483
        %v619 = vunpack.c.l.b16 %v484
        %v620 = vunpack.c.h.b16 %v484
        %v621 = vunpack.c.l.b16 %v485
        %v622 = vunpack.c.h.b16 %v485
        %v623 = vunpack.c.l.b16 %v486
        %v624 = vunpack.c.h.b16 %v486
        %v625 = vunpack.c.l.b16 %v487
        %v626 = vunpack.c.h.b16 %v487
        %v627 = vunpack.c.l.b16 %v488
        %v628 = vunpack.c.h.b16 %v488
        %v629 = vunpack.c.l.b16 %v489
        %v630 = vunpack.c.h.b16 %v489
        %v631 = vunpack.c.l.b16 %v490
        %v632 = vunpack.c.h.b16 %v490
        %v633 = vunpack.c.l.b16 %v491
        %v634 = vunpack.c.h.b16 %v491
        %v635 = vunpack.c.l.b16 %v492
        %v636 = vunpack.c.h.b16 %v492
        %v637 = vunpack.c.l.b16 %v493
        %v638 = vunpack.c.h.b16 %v493
        %v639 = vunpack.c.l.b16 %v494
        %v640 = vunpack.c.h.b16 %v494
        %v641 = vunpack.c.l.b16 %v495
        %v642 = vunpack.c.h.b16 %v495
        %v643 = vunpack.c.l.b16 %v496
        %v644 = vunpack.c.h.b16 %v496
        %v645 = vunpack.c.l.b16 %v497
        %v646 = vunpack.c.h.b16 %v497
        %v647 = vunpack.c.l.b16 %v498
        %v648 = vunpack.c.h.b16 %v498
        %v649 = vunpack.c.l.b16 %v499
        %v650 = vunpack.c.h.b16 %v499
        %v651 = vunpack.c.l.b16 %v500
        %v652 = vunpack.c.h.b16 %v500
        %v653 = vunpack.c.l.b16 %v501
        %v654 = vunpack.c.h.b16 %v501
        %v655 = vunpack.c.l.b16 %v502
        %v656 = vunpack.c.h.b16 %v502
        %v657 = vunpack.c.l.b16 %v503
        %v658 = vunpack.c.h.b16 %v503
        %v659 = vunpack.c.l.b16 %v504
        %v660 = vunpack.c.h.b16 %v504
        %v661 = vunpack.c.l.b16 %v505
        %v662 = vunpack.c.h.b16 %v505
        %v663 = vunpack.c.l.b16 %v506
        %v664 = vunpack.c.h.b16 %v506
        %v665 = vunpack.c.l.b16 %v507
        %v666 = vunpack.c.h.b16 %v507
        %v667 = vunpack.c.l.b16 %v508
        %v668 = vunpack.c.h.b16 %v508
        %v669 = vunpack.c.l.b16 %v509
        %v670 = vunpack.c.h.b16 %v509
        %v671 = vunpack.c.l.b16 %v510
        %v672 = vunpack.c.h.b16 %v510
        %v673 = vunpack.c.l.b16 %v511
        %v674 = vunpack.c.h.b16 %v511
        %v675 = vunpack.c.l.b16 %v512
        %v676 = vunpack.c.h.b16 %v512
        %v677 = vunpack.c.l.b16 %v513
        %v678 = vunpack.c.h.b16 %v513
        %v679 = vunpack.c.l.b16 %v514
        %v680 = vunpack.c.h.b16 %v514
        %v681 = vunpack.c.l.b16 %v515
        %v682 = vunpack.c.h.b16 %v515
        %v683 = vunpack.c.l.b16 %v516
        %v684 = vunpack.c.h.b16 %v516
        %v685 = vunpack.c.l.b16 %v517
        %v686 = vunpack.c.h.b16 %v517
        %v687 = vunpack.c.l.b16 %v518
        %v688 = vunpack.c.h.b16 %v518
        %v689 = vunpack.c.l.b16 %v519
        %v690 = vunpack.c.h.b16 %v519
        %v691 = vunpack.c.l.b16 %v520
        %v692 = vunpack.c.h.b16 %v520
        %v693 = vunpack.c.l.b16 %v521
        %v694 = vunpack.c.h.b16 %v521
        %v695 = vunpack.c.l.b16 %v522
        %v696 = vunpack.c.h.b16 %v522
        %v697 = vunpack.c.l.b16 %v523
        %v698 = vunpack.c.h.b16 %v523
        %v699 = vunpack.c.l.b16 %v524
        %v700 = vunpack.c.h.b16 %v524
        %v701 = vunpack.c.l.b16 %v525
        %v702 = vunpack.c.h.b16 %v525
        %v703 = vunpack.c.l.b16 %v526
        %v704 = vunpack.c.h.b16 %v526
        %v705 = vunpack.c.l.b16 %v527
        %v706 = vunpack.c.h.b16 %v527
        %v707 = vunpack.c.l.b16 %v528
        %v708 = vunpack.c.h.b16 %v528
        %v709 = vunpack.c.l.b16 %v529
        %v710 = vunpack.c.h.b16 %v529
        %v711 = vunpack.c.l.b16 %v530
        %v712 = vunpack.c.h.b16 %v530
        %v713 = vunpack.c.l.b16 %v531
        %v714 = vunpack.c.h.b16 %v531
        %v715 = vunpack.c.l.b16 %v532
        %v716 = vunpack.c.h.b16 %v532
        %v717 = vunpack.c.l.b16 %v533
        %v718 = vunpack.c.h.b16 %v533
        %v719 = vunpack.c.l.b16 %v534
        %v720 = vunpack.c.h.b16 %v534
        %v721 = vunpack.c.l.b16 %v535
        %v722 = vunpack.c.h.b16 %v535
        %v723 = vunpack.c.l.b16 %v536
        %v724 = vunpack.c.h.b16 %v536
        %v725 = vunpack.c.l.b16 %v537
        %v726 = vunpack.c.h.b16 %v537
        %v727 = vunpack.c.l.b16 %v538
        %v728 = vunpack.c.h.b16 %v538
        %v729 = vunpack.c.l.b16 %v539
        %v730 = vunpack.c.h.b16 %v539
        %v731 = vunpack.c.l.b16 %v540
        %v732 = vunpack.c.h.b16 %v540
        %v733 = vpack.c.b16 %v609, %v605
        %v734 = vpack.c.b16 %v610, %v606
        %v735 = vpack.c.b16 %v611, %v607
        %v736 = vpack.c.b16 %v612, %v608
        %v737 = vpack.c.b16 %v617, %v613
        %v738 = vpack.c.b16 %v618, %v614
        %v739 = vpack.c.b16 %v619, %v615
        %v740 = vpack.c.b16 %v620, %v616
        %v741 = vpack.c.b16 %v625, %v621
        %v742 = vpack.c.b16 %v626, %v622
        %v743 = vpack.c.b16 %v627, %v623
        %v744 = vpack.c.b16 %v628, %v624
        %v745 = vpack.c.b16 %v633, %v629
        %v746 = vpack.c.b16 %v634, %v630
        %v747 = vpack.c.b16 %v635, %v631
        %v748 = vpack.c.b16 %v636, %v632
        %v749 = vpack.c.b16 %v641, %v637
        %v750 = vpack.c.b16 %v642, %v638
        %v751 = vpack.c.b16 %v643, %v639
        %v752 = vpack.c.b16 %v644, %v640
        %v753 = vpack.c.b16 %v649, %v645
        %v754 = vpack.c.b16 %v650, %v646
        %v755 = vpack.c.b16 %v651, %v647
        %v756 = vpack.c.b16 %v652, %v648
        %v757 = vpack.c.b16 %v657, %v653
        %v758 = vpack.c.b16 %v658, %v654
        %v759 = vpack.c.b16 %v659, %v655
        %v760 = vpack.c.b16 %v660, %v656
        %v761 = vpack.c.b16 %v665, %v661
        %v762 = vpack.c.b16 %v666, %v662
        %v763 = vpack.c.b16 %v667, %v663
        %v764 = vpack.c.b16 %v668, %v664
        %v765 = vpack.c.b16 %v673, %v669
        %v766 = vpack.c.b16 %v674, %v670
        %v767 = vpack.c.b16 %v675, %v671
        %v768 = vpack.c.b16 %v676, %v672
        %v769 = vpack.c.b16 %v681, %v677
        %v770 = vpack.c.b16 %v682, %v678
        %v771 = vpack.c.b16 %v683, %v679
        %v772 = vpack.c.b16 %v684, %v680
        %v773 = vpack.c.b16 %v689, %v685
        %v774 = vpack.c.b16 %v690, %v686
        %v775 = vpack.c.b16 %v691, %v687
        %v776 = vpack.c.b16 %v692, %v688
        %v777 = vpack.c.b16 %v697, %v693
        %v778 = vpack.c.b16 %v698, %v694
        %v779 = vpack.c.b16 %v699, %v695
        %v780 = vpack.c.b16 %v700, %v696
        %v781 = vpack.c.b16 %v705, %v701
        %v782 = vpack.c.b16 %v706, %v702
        %v783 = vpack.c.b16 %v707, %v703
        %v784 = vpack.c.b16 %v708, %v704
        %v785 = vpack.c.b16 %v713, %v709
        %v786 = vpack.c.b16 %v714, %v710
        %v787 = vpack.c.b16 %v715, %v711
        %v788 = vpack.c.b16 %v716, %v712
        %v789 = vpack.c.b16 %v721, %v717
        %v790 = vpack.c.b16 %v722, %v718
        %v791 = vpack.c.b16 %v723, %v719
        %v792 = vpack.c.b16 %v724, %v720
        %v793 = vpack.c.b16 %v729, %v725
        %v794 = vpack.c.b16 %v730, %v726
        %v795 = vpack.c.b16 %v731, %v727
        %v796 = vpack.c.b16 %v732, %v728
        %861 = vmatprep.subr.bf16.mxu0 %v734
        %862 = vmatpush1.bf16.msra.mxu0 %v733
        %863 = vmatprep.subr.bf16.mxu0 %v738
        %864 = vmatpush1.bf16.msra.mxu0 %v737
        %865 = vmatprep.subr.bf16.mxu0 %v742
        %866 = vmatpush1.bf16.msra.mxu0 %v741
        %867 = vmatprep.subr.bf16.mxu0 %v746
        %868 = vmatpush1.bf16.msra.mxu0 %v745
        %869 = vmatprep.subr.bf16.mxu0 %v750
        %870 = vmatpush1.bf16.msra.mxu0 %v749
        %871 = vmatprep.subr.bf16.mxu0 %v754
        %872 = vmatpush1.bf16.msra.mxu0 %v753
        %873 = vmatprep.subr.bf16.mxu0 %v758
        %874 = vmatpush1.bf16.msra.mxu0 %v757
        %875 = vmatprep.subr.bf16.mxu0 %v762
        %876 = vmatpush1.bf16.msra.mxu0 %v761
        %877 = vmatprep.subr.bf16.mxu0 %v766
        %878 = vmatpush1.bf16.msra.mxu0 %v765
        %879 = vmatprep.subr.bf16.mxu0 %v770
        %880 = vmatpush1.bf16.msra.mxu0 %v769
        %881 = vmatprep.subr.bf16.mxu0 %v774
        %882 = vmatpush1.bf16.msra.mxu0 %v773
        %883 = vmatprep.subr.bf16.mxu0 %v778
        %884 = vmatpush1.bf16.msra.mxu0 %v777
        %885 = vmatprep.subr.bf16.mxu0 %v782
        %886 = vmatpush1.bf16.msra.mxu0 %v781
        %887 = vmatprep.subr.bf16.mxu0 %v786
        %888 = vmatpush1.bf16.msra.mxu0 %v785
        %889 = vmatprep.subr.bf16.mxu0 %v790
        %890 = vmatpush1.bf16.msra.mxu0 %v789
        %891 = vmatprep.subr.bf16.mxu0 %v794
        %892 = vmatpush1.bf16.msra.mxu0 %v793
        %893 = vmatprep.mubr.bf16.mxu0 %v476
        %894 = vmatmul.mubr.bf16.gmra.mrb[0].mxu0 %v475
        %v895 = vpop.f32.mrb[0].mxu0
        %v896 = vadd.f32 0.0, %v895
        %v897 = vpop.f32.mrb[0].mxu0
        %v898 = vadd.f32 0.0, %v897
        %v899 = vpop.f32.mrb[0].mxu0
        %v900 = vpop.f32.mrb[0].mxu0
        %901 = vdwg.mxu0
        %902 = vmatprep.subr.bf16.mxu0 %v736
        %903 = vmatpush1.bf16.msra.mxu0 %v735
        %904 = vmatprep.subr.bf16.mxu0 %v740
        %905 = vmatpush1.bf16.msra.mxu0 %v739
        %906 = vmatprep.subr.bf16.mxu0 %v744
        %907 = vmatpush1.bf16.msra.mxu0 %v743
        %908 = vmatprep.subr.bf16.mxu0 %v748
        %909 = vmatpush1.bf16.msra.mxu0 %v747
        %910 = vmatprep.subr.bf16.mxu0 %v752
        %911 = vmatpush1.bf16.msra.mxu0 %v751
        %912 = vmatprep.subr.bf16.mxu0 %v756
        %913 = vmatpush1.bf16.msra.mxu0 %v755
        %914 = vmatprep.subr.bf16.mxu0 %v760
        %915 = vmatpush1.bf16.msra.mxu0 %v759
        %916 = vmatprep.subr.bf16.mxu0 %v764
        %917 = vmatpush1.bf16.msra.mxu0 %v763
        %918 = vmatprep.subr.bf16.mxu0 %v768
        %919 = vmatpush1.bf16.msra.mxu0 %v767
        %920 = vmatprep.subr.bf16.mxu0 %v772
        %921 = vmatpush1.bf16.msra.mxu0 %v771
        %922 = vmatprep.subr.bf16.mxu0 %v776
        %923 = vmatpush1.bf16.msra.mxu0 %v775
        %924 = vmatprep.subr.bf16.mxu0 %v780
        %925 = vmatpush1.bf16.msra.mxu0 %v779
        %926 = vmatprep.subr.bf16.mxu0 %v784
        %927 = vmatpush1.bf16.msra.mxu0 %v783
        %928 = vmatprep.subr.bf16.mxu0 %v788
        %929 = vmatpush1.bf16.msra.mxu0 %v787
        %930 = vmatprep.subr.bf16.mxu0 %v792
        %931 = vmatpush1.bf16.msra.mxu0 %v791
        %932 = vmatprep.subr.bf16.mxu0 %v796
        %933 = vmatpush1.bf16.msra.mxu0 %v795
        %934 = vmatprep.mubr.bf16.mxu0 %v476
        %935 = vmatmul.mubr.bf16.gmra.mrb[0].mxu0 %v475
        %v936 = vpop.f32.mrb[0].mxu0
        %v937 = vadd.f32 0.0, %v936
        %v938 = vpop.f32.mrb[0].mxu0
        %v939 = vadd.f32 0.0, %v938
        %v940 = vpop.f32.mrb[0].mxu0
        %v941 = vpop.f32.mrb[0].mxu0
        %942 = vdwg.mxu0
        %v943 = vld [vmem:[%s7] sm:$0xff]
        %v944 = vld [vmem:[%s8] sm:$0xff]
        %v945 = vmul.f32 %v896, %v943
        %946 = vrot.lane.b32.xlu0 %v896, 64
        %v947 = vpop.permute.xlu0 %946
        %v948 = vmul.f32 %v947, %v944
        %v949 = vadd.f32 %v945, %v948
        %v950 = vmul.f32 %v898, %v943
        %951 = vrot.lane.b32.xlu0 %v898, 64
        %v952 = vpop.permute.xlu0 %951
        %v953 = vmul.f32 %v952, %v944
        %v954 = vadd.f32 %v950, %v953
        %v955 = vpack.c.bf16 %v949, %v949
        %v956 = vpack.c.bf16 %v954, %v954
        %v957 = vmul.f32 %v937, %v943
        %958 = vrot.lane.b32.xlu0 %v937, 64
        %v959 = vpop.permute.xlu0 %958
        %v960 = vmul.f32 %v959, %v944
        %v961 = vadd.f32 %v957, %v960
        %v962 = vpack.c.bf16 %v961, %v961
        %v963 = vpack.c.bf16 %v939, %v939
        %v964 = vld [vmem:[%s9] sm:$0xff]
        %965 = vmatprep.subr.bf16.mxu0 0
        %966 = vmatpush1.bf16.xpose.msra.mxu0 %v962
        %967 = vmatprep.subr.bf16.mxu0 0
        %968 = vmatpush1.bf16.xpose.msra.mxu0 0
        %969 = vmatprep.subr.bf16.mxu0 0
        %970 = vmatpush1.bf16.xpose.msra.mxu0 0
        %971 = vmatprep.subr.bf16.mxu0 0
        %972 = vmatpush1.bf16.xpose.msra.mxu0 0
        %973 = vmatprep.subr.bf16.mxu0 0
        %974 = vmatpush1.bf16.xpose.msra.mxu0 0
        %975 = vmatprep.subr.bf16.mxu0 0
        %976 = vmatpush1.bf16.xpose.msra.mxu0 0
        %977 = vmatprep.subr.bf16.mxu0 0
        %978 = vmatpush1.bf16.xpose.msra.mxu0 0
        %979 = vmatprep.subr.bf16.mxu0 0
        %980 = vmatpush1.bf16.xpose.msra.mxu0 0
        %981 = vmatprep.subr.bf16.mxu0 0
        %982 = vmatpush1.bf16.xpose.msra.mxu0 0
        %983 = vmatprep.subr.bf16.mxu0 0
        %984 = vmatpush1.bf16.xpose.msra.mxu0 0
        %985 = vmatprep.subr.bf16.mxu0 0
        %986 = vmatpush1.bf16.xpose.msra.mxu0 0
        %987 = vmatprep.subr.bf16.mxu0 0
        %988 = vmatpush1.bf16.xpose.msra.mxu0 0
        %989 = vmatprep.subr.bf16.mxu0 0
        %990 = vmatpush1.bf16.xpose.msra.mxu0 0
        %991 = vmatprep.subr.bf16.mxu0 0
        %992 = vmatpush1.bf16.xpose.msra.mxu0 0
        %993 = vmatprep.subr.bf16.mxu0 0
        %994 = vmatpush1.bf16.xpose.msra.mxu0 0
        %995 = vmatprep.subr.bf16.mxu0 0
        %996 = vmatpush1.bf16.xpose.msra.mxu0 0
        %997 = vmatprep.mubr.bf16.mxu0 0
        %998 = vmatmul.mubr.bf16.gmra.mrb[0].mxu0 %v955
        %v999 = vpop.f32.mrb[0].mxu0
        %v1000 = vadd.f32 %v964, %v999
        %v1001 = vpop.f32.mrb[0].mxu0
        %v1002 = vpop.f32.mrb[0].mxu0
        %v1003 = vpop.f32.mrb[0].mxu0
        %1004 = vdwg.mxu0
        %1005 = vmatprep.subr.bf16.mxu0 0
        %1006 = vmatpush1.bf16.xpose.msra.mxu0 %v962
        %1007 = vmatprep.subr.bf16.mxu0 0
        %1008 = vmatpush1.bf16.xpose.msra.mxu0 0
        %1009 = vmatprep.subr.bf16.mxu0 0
        %1010 = vmatpush1.bf16.xpose.msra.mxu0 0
        %1011 = vmatprep.subr.bf16.mxu0 0
        %1012 = vmatpush1.bf16.xpose.msra.mxu0 0
        %1013 = vmatprep.subr.bf16.mxu0 0
        %1014 = vmatpush1.bf16.xpose.msra.mxu0 0
        %1015 = vmatprep.subr.bf16.mxu0 0
        %1016 = vmatpush1.bf16.xpose.msra.mxu0 0
        %1017 = vmatprep.subr.bf16.mxu0 0
        %1018 = vmatpush1.bf16.xpose.msra.mxu0 0
        %1019 = vmatprep.subr.bf16.mxu0 0
        %1020 = vmatpush1.bf16.xpose.msra.mxu0 0
        %1021 = vmatprep.subr.bf16.mxu0 0
        %1022 = vmatpush1.bf16.xpose.msra.mxu0 0
        %1023 = vmatprep.subr.bf16.mxu0 0
        %1024 = vmatpush1.bf16.xpose.msra.mxu0 0
        %1025 = vmatprep.subr.bf16.mxu0 0
        %1026 = vmatpush1.bf16.xpose.msra.mxu0 0
        %1027 = vmatprep.subr.bf16.mxu0 0
        %1028 = vmatpush1.bf16.xpose.msra.mxu0 0
        %1029 = vmatprep.subr.bf16.mxu0 0
        %1030 = vmatpush1.bf16.xpose.msra.mxu0 0
        %1031 = vmatprep.subr.bf16.mxu0 0
        %1032 = vmatpush1.bf16.xpose.msra.mxu0 0
        %1033 = vmatprep.subr.bf16.mxu0 0
        %1034 = vmatpush1.bf16.xpose.msra.mxu0 0
        %1035 = vmatprep.subr.bf16.mxu0 0
        %1036 = vmatpush1.bf16.xpose.msra.mxu0 0
        %1037 = vmatprep.mubr.bf16.mxu0 0
        %1038 = vmatmul.mubr.bf16.gmra.mrb[0].mxu0 %v956
        %v1039 = vpop.f32.mrb[0].mxu0
        %v1040 = vadd.f32 %v964, %v1039
        %v1041 = vpop.f32.mrb[0].mxu0
        %v1042 = vpop.f32.mrb[0].mxu0
        %v1043 = vpop.f32.mrb[0].mxu0
        %1044 = vdwg.mxu0
        %vm1045 = vcmask 64512
        %v1046 = vsel %vm1045, %v1000, -inf
        %1047 = vmax.xlane.f32.xlu0 %v1046
        %v1048 = vpop.xlane.xlu0 %1047
        %v1049 = vsel %vm1045, %v1040, -inf
        %1050 = vmax.xlane.f32.xlu0 %v1049
        %v1051 = vpop.xlane.xlu0 %1050
        %v1052 = vsub.f32 %v1000, %v1048
        %v1053 = vsub.f32 %v1040, %v1051
        %v1054 = vmul.f32 %v1052, 1.442695
        %v1055 = vpow.pop %v1054
        %v1056 = vmul.f32 %v1053, 1.442695
        %v1057 = vpow.pop %v1056
        %v1058 = vsel %vm1045, %v1055, 0.0
        %1059 = vadd.xlane.f32.xlu0 %v1058
        %v1060 = vpop.xlane.xlu0 %1059
        %v1061 = vsel %vm1045, %v1057, 0.0
        %1062 = vadd.xlane.f32.xlu0 %v1061
        %v1063 = vpop.xlane.xlu0 %1062
        %v1064 = vrcp.pop %v1060
        %v1065 = vrcp.pop %v1063
        %v1066 = vmul.f32 %v1055, %v1064
        %v1067 = vmul.f32 %v1057, %v1065
        %v1068 = vpack.c.bf16 %v1066, %v1066
        %v1069 = vpack.c.bf16 %v1067, %v1067
        %v1071 = vsel %vm1045, %v1068, 0
        %vm1073 = vcmask 1043456
        %v1075 = vsel %vm1073, %v963, 0
        %1077 = vmatprep.subr.bf16.mxu0 0
        %1078 = vmatpush1.bf16.msra.mxu0 %v1075
        %1079 = vmatprep.subr.bf16.mxu0 0
        %1080 = vmatpush1.bf16.msra.mxu0 0
        %1081 = vmatprep.subr.bf16.mxu0 0
        %1082 = vmatpush1.bf16.msra.mxu0 0
        %1083 = vmatprep.subr.bf16.mxu0 0
        %1084 = vmatpush1.bf16.msra.mxu0 0
        %1085 = vmatprep.subr.bf16.mxu0 0
        %1086 = vmatpush1.bf16.msra.mxu0 0
        %1087 = vmatprep.subr.bf16.mxu0 0
        %1088 = vmatpush1.bf16.msra.mxu0 0
        %1089 = vmatprep.subr.bf16.mxu0 0
        %1090 = vmatpush1.bf16.msra.mxu0 0
        %1091 = vmatprep.subr.bf16.mxu0 0
        %1092 = vmatpush1.bf16.msra.mxu0 0
        %1093 = vmatprep.subr.bf16.mxu0 0
        %1094 = vmatpush1.bf16.msra.mxu0 0
        %1095 = vmatprep.subr.bf16.mxu0 0
        %1096 = vmatpush1.bf16.msra.mxu0 0
        %1097 = vmatprep.subr.bf16.mxu0 0
        %1098 = vmatpush1.bf16.msra.mxu0 0
        %1099 = vmatprep.subr.bf16.mxu0 0
        %1100 = vmatpush1.bf16.msra.mxu0 0
        %1101 = vmatprep.subr.bf16.mxu0 0
        %1102 = vmatpush1.bf16.msra.mxu0 0
        %1103 = vmatprep.subr.bf16.mxu0 0
        %1104 = vmatpush1.bf16.msra.mxu0 0
        %1105 = vmatprep.subr.bf16.mxu0 0
        %1106 = vmatpush1.bf16.msra.mxu0 0
        %1107 = vmatprep.subr.bf16.mxu0 0
        %1108 = vmatpush1.bf16.msra.mxu0 0
        %1109 = vmatprep.mubr.bf16.mxu0 0
        %1110 = vmatmul.mubr.bf16.gmra.mrb[0].mxu0 %v1071
        %v1111 = vpop.f32.mrb[0].mxu0
        %v1112 = vadd.f32 0.0, %v1111
        %v1113 = vpop.f32.mrb[0].mxu0
        %v1114 = vpop.f32.mrb[0].mxu0
        %v1115 = vpop.f32.mrb[0].mxu0
        %1116 = vdwg.mxu0
        %v1118 = vsel %vm1045, %v1069, 0
        %1120 = vmatprep.subr.bf16.mxu0 0
        %1121 = vmatpush1.bf16.msra.mxu0 %v1075
        %1122 = vmatprep.subr.bf16.mxu0 0
        %1123 = vmatpush1.bf16.msra.mxu0 0
        %1124 = vmatprep.subr.bf16.mxu0 0
        %1125 = vmatpush1.bf16.msra.mxu0 0
        %1126 = vmatprep.subr.bf16.mxu0 0
        %1127 = vmatpush1.bf16.msra.mxu0 0
        %1128 = vmatprep.subr.bf16.mxu0 0
        %1129 = vmatpush1.bf16.msra.mxu0 0
        %1130 = vmatprep.subr.bf16.mxu0 0
        %1131 = vmatpush1.bf16.msra.mxu0 0
        %1132 = vmatprep.subr.bf16.mxu0 0
        %1133 = vmatpush1.bf16.msra.mxu0 0
        %1134 = vmatprep.subr.bf16.mxu0 0
        %1135 = vmatpush1.bf16.msra.mxu0 0
        %1136 = vmatprep.subr.bf16.mxu0 0
        %1137 = vmatpush1.bf16.msra.mxu0 0
        %1138 = vmatprep.subr.bf16.mxu0 0
        %1139 = vmatpush1.bf16.msra.mxu0 0
        %1140 = vmatprep.subr.bf16.mxu0 0
        %1141 = vmatpush1.bf16.msra.mxu0 0
        %1142 = vmatprep.subr.bf16.mxu0 0
        %1143 = vmatpush1.bf16.msra.mxu0 0
        %1144 = vmatprep.subr.bf16.mxu0 0
        %1145 = vmatpush1.bf16.msra.mxu0 0
        %1146 = vmatprep.subr.bf16.mxu0 0
        %1147 = vmatpush1.bf16.msra.mxu0 0
        %1148 = vmatprep.subr.bf16.mxu0 0
        %1149 = vmatpush1.bf16.msra.mxu0 0
        %1150 = vmatprep.subr.bf16.mxu0 0
        %1151 = vmatpush1.bf16.msra.mxu0 0
        %1152 = vmatprep.mubr.bf16.mxu0 0
        %1153 = vmatmul.mubr.bf16.gmra.mrb[0].mxu0 %v1118
        %v1154 = vpop.f32.mrb[0].mxu0
        %v1155 = vadd.f32 0.0, %v1154
        %v1156 = vpop.f32.mrb[0].mxu0
        %v1157 = vpop.f32.mrb[0].mxu0
        %v1158 = vpop.f32.mrb[0].mxu0
        %1159 = vdwg.mxu0
        %v1160 = vpack.c.bf16 %v1112, %v1112
        %v1161 = vpack.c.bf16 %v1155, %v1155
        %v1162 = vld [vmem:[#allocation7] sm:$0xff]
        %v1163 = vld [vmem:[#allocation7 + $0x8] sm:$0xff]
        %v1164 = vld [vmem:[#allocation7 + $0x10] sm:$0xff]
        %v1165 = vld [vmem:[#allocation7 + $0x18] sm:$0xff]
        %v1166 = vld [vmem:[#allocation7 + $0x20] sm:$0xff]
        %v1167 = vld [vmem:[#allocation7 + $0x28] sm:$0xff]
        %v1168 = vld [vmem:[#allocation7 + $0x30] sm:$0xff]
        %v1169 = vld [vmem:[#allocation7 + $0x38] sm:$0xff]
        %v1170 = vld [vmem:[#allocation7 + $0x40] sm:$0xff]
        %v1171 = vld [vmem:[#allocation7 + $0x48] sm:$0xff]
        %v1172 = vld [vmem:[#allocation7 + $0x50] sm:$0xff]
        %v1173 = vld [vmem:[#allocation7 + $0x58] sm:$0xff]
        %v1174 = vld [vmem:[#allocation7 + $0x60] sm:$0xff]
        %v1175 = vld [vmem:[#allocation7 + $0x68] sm:$0xff]
        %v1176 = vld [vmem:[#allocation7 + $0x70] sm:$0xff]
        %v1177 = vld [vmem:[#allocation7 + $0x78] sm:$0xff]
        %v1178 = vld [vmem:[#allocation7 + $0x80] sm:$0xff]
        %v1179 = vld [vmem:[#allocation7 + $0x88] sm:$0xff]
        %v1180 = vld [vmem:[#allocation7 + $0x90] sm:$0xff]
        %v1181 = vld [vmem:[#allocation7 + $0x98] sm:$0xff]
        %v1182 = vld [vmem:[#allocation7 + $0xa0] sm:$0xff]
        %v1183 = vld [vmem:[#allocation7 + $0xa8] sm:$0xff]
        %v1184 = vld [vmem:[#allocation7 + $0xb0] sm:$0xff]
        %v1185 = vld [vmem:[#allocation7 + $0xb8] sm:$0xff]
        %v1186 = vld [vmem:[#allocation7 + $0xc0] sm:$0xff]
        %v1187 = vld [vmem:[#allocation7 + $0xc8] sm:$0xff]
        %v1188 = vld [vmem:[#allocation7 + $0xd0] sm:$0xff]
        %v1189 = vld [vmem:[#allocation7 + $0xd8] sm:$0xff]
        %v1190 = vld [vmem:[#allocation7 + $0xe0] sm:$0xff]
        %v1191 = vld [vmem:[#allocation7 + $0xe8] sm:$0xff]
        %v1192 = vld [vmem:[#allocation7 + $0xf0] sm:$0xff]
        %v1193 = vld [vmem:[#allocation7 + $0xf8] sm:$0xff]
        %v1226 = vunpack.c.l.b16 %v1162
        %v1227 = vunpack.c.h.b16 %v1162
        %v1228 = vunpack.c.l.b16 %v1163
        %v1229 = vunpack.c.h.b16 %v1163
        %v1230 = vunpack.c.l.b16 %v1164
        %v1231 = vunpack.c.h.b16 %v1164
        %v1232 = vunpack.c.l.b16 %v1165
        %v1233 = vunpack.c.h.b16 %v1165
        %v1234 = vunpack.c.l.b16 %v1166
        %v1235 = vunpack.c.h.b16 %v1166
        %v1236 = vunpack.c.l.b16 %v1167
        %v1237 = vunpack.c.h.b16 %v1167
        %v1238 = vunpack.c.l.b16 %v1168
        %v1239 = vunpack.c.h.b16 %v1168
        %v1240 = vunpack.c.l.b16 %v1169
        %v1241 = vunpack.c.h.b16 %v1169
        %v1242 = vunpack.c.l.b16 %v1170
        %v1243 = vunpack.c.h.b16 %v1170
        %v1244 = vunpack.c.l.b16 %v1171
        %v1245 = vunpack.c.h.b16 %v1171
        %v1246 = vunpack.c.l.b16 %v1172
        %v1247 = vunpack.c.h.b16 %v1172
        %v1248 = vunpack.c.l.b16 %v1173
        %v1249 = vunpack.c.h.b16 %v1173
        %v1250 = vunpack.c.l.b16 %v1174
        %v1251 = vunpack.c.h.b16 %v1174
        %v1252 = vunpack.c.l.b16 %v1175
        %v1253 = vunpack.c.h.b16 %v1175
        %v1254 = vunpack.c.l.b16 %v1176
        %v1255 = vunpack.c.h.b16 %v1176
        %v1256 = vunpack.c.l.b16 %v1177
        %v1257 = vunpack.c.h.b16 %v1177
        %v1258 = vunpack.c.l.b16 %v1178
        %v1259 = vunpack.c.h.b16 %v1178
        %v1260 = vunpack.c.l.b16 %v1179
        %v1261 = vunpack.c.h.b16 %v1179
        %v1262 = vunpack.c.l.b16 %v1180
        %v1263 = vunpack.c.h.b16 %v1180
        %v1264 = vunpack.c.l.b16 %v1181
        %v1265 = vunpack.c.h.b16 %v1181
        %v1266 = vunpack.c.l.b16 %v1182
        %v1267 = vunpack.c.h.b16 %v1182
        %v1268 = vunpack.c.l.b16 %v1183
        %v1269 = vunpack.c.h.b16 %v1183
        %v1270 = vunpack.c.l.b16 %v1184
        %v1271 = vunpack.c.h.b16 %v1184
        %v1272 = vunpack.c.l.b16 %v1185
        %v1273 = vunpack.c.h.b16 %v1185
        %v1274 = vunpack.c.l.b16 %v1186
        %v1275 = vunpack.c.h.b16 %v1186
        %v1276 = vunpack.c.l.b16 %v1187
        %v1277 = vunpack.c.h.b16 %v1187
        %v1278 = vunpack.c.l.b16 %v1188
        %v1279 = vunpack.c.h.b16 %v1188
        %v1280 = vunpack.c.l.b16 %v1189
        %v1281 = vunpack.c.h.b16 %v1189
        %v1282 = vunpack.c.l.b16 %v1190
        %v1283 = vunpack.c.h.b16 %v1190
        %v1284 = vunpack.c.l.b16 %v1191
        %v1285 = vunpack.c.h.b16 %v1191
        %v1286 = vunpack.c.l.b16 %v1192
        %v1287 = vunpack.c.h.b16 %v1192
        %v1288 = vunpack.c.l.b16 %v1193
        %v1289 = vunpack.c.h.b16 %v1193
        %v1290 = vpack.c.b16 %v1228, %v1226
        %v1291 = vpack.c.b16 %v1229, %v1227
        %v1292 = vpack.c.b16 %v1232, %v1230
        %v1293 = vpack.c.b16 %v1233, %v1231
        %v1294 = vpack.c.b16 %v1236, %v1234
        %v1295 = vpack.c.b16 %v1237, %v1235
        %v1296 = vpack.c.b16 %v1240, %v1238
        %v1297 = vpack.c.b16 %v1241, %v1239
        %v1298 = vpack.c.b16 %v1244, %v1242
        %v1299 = vpack.c.b16 %v1245, %v1243
        %v1300 = vpack.c.b16 %v1248, %v1246
        %v1301 = vpack.c.b16 %v1249, %v1247
        %v1302 = vpack.c.b16 %v1252, %v1250
        %v1303 = vpack.c.b16 %v1253, %v1251
        %v1304 = vpack.c.b16 %v1256, %v1254
        %v1305 = vpack.c.b16 %v1257, %v1255
        %v1306 = vpack.c.b16 %v1260, %v1258
        %v1307 = vpack.c.b16 %v1261, %v1259
        %v1308 = vpack.c.b16 %v1264, %v1262
        %v1309 = vpack.c.b16 %v1265, %v1263
        %v1310 = vpack.c.b16 %v1268, %v1266
        %v1311 = vpack.c.b16 %v1269, %v1267
        %v1312 = vpack.c.b16 %v1272, %v1270
        %v1313 = vpack.c.b16 %v1273, %v1271
        %v1314 = vpack.c.b16 %v1276, %v1274
        %v1315 = vpack.c.b16 %v1277, %v1275
        %v1316 = vpack.c.b16 %v1280, %v1278
        %v1317 = vpack.c.b16 %v1281, %v1279
        %v1318 = vpack.c.b16 %v1284, %v1282
        %v1319 = vpack.c.b16 %v1285, %v1283
        %v1320 = vpack.c.b16 %v1288, %v1286
        %v1321 = vpack.c.b16 %v1289, %v1287
        %1354 = vmatprep.subr.bf16.mxu0 %v1291
        %1355 = vmatpush1.bf16.msra.mxu0 %v1290
        %1356 = vmatprep.subr.bf16.mxu0 %v1293
        %1357 = vmatpush1.bf16.msra.mxu0 %v1292
        %1358 = vmatprep.subr.bf16.mxu0 %v1295
        %1359 = vmatpush1.bf16.msra.mxu0 %v1294
        %1360 = vmatprep.subr.bf16.mxu0 %v1297
        %1361 = vmatpush1.bf16.msra.mxu0 %v1296
        %1362 = vmatprep.subr.bf16.mxu0 %v1299
        %1363 = vmatpush1.bf16.msra.mxu0 %v1298
        %1364 = vmatprep.subr.bf16.mxu0 %v1301
        %1365 = vmatpush1.bf16.msra.mxu0 %v1300
        %1366 = vmatprep.subr.bf16.mxu0 %v1303
        %1367 = vmatpush1.bf16.msra.mxu0 %v1302
        %1368 = vmatprep.subr.bf16.mxu0 %v1305
        %1369 = vmatpush1.bf16.msra.mxu0 %v1304
        %1370 = vmatprep.subr.bf16.mxu0 %v1307
        %1371 = vmatpush1.bf16.msra.mxu0 %v1306
        %1372 = vmatprep.subr.bf16.mxu0 %v1309
        %1373 = vmatpush1.bf16.msra.mxu0 %v1308
        %1374 = vmatprep.subr.bf16.mxu0 %v1311
        %1375 = vmatpush1.bf16.msra.mxu0 %v1310
        %1376 = vmatprep.subr.bf16.mxu0 %v1313
        %1377 = vmatpush1.bf16.msra.mxu0 %v1312
        %1378 = vmatprep.subr.bf16.mxu0 %v1315
        %1379 = vmatpush1.bf16.msra.mxu0 %v1314
        %1380 = vmatprep.subr.bf16.mxu0 %v1317
        %1381 = vmatpush1.bf16.msra.mxu0 %v1316
        %1382 = vmatprep.subr.bf16.mxu0 %v1319
        %1383 = vmatpush1.bf16.msra.mxu0 %v1318
        %1384 = vmatprep.subr.bf16.mxu0 %v1321
        %1385 = vmatpush1.bf16.msra.mxu0 %v1320
        %1386 = vmatprep.mubr.bf16.mxu0 %v1161
        %1387 = vmatmul.mubr.bf16.gmra.mrb[0].mxu0 %v1160
        %v1388 = vpop.f32.mrb[0].mxu0
        %v1389 = vadd.f32 0.0, %v1388
        %v1390 = vpop.f32.mrb[0].mxu0
        %v1391 = vadd.f32 0.0, %v1390
        %v1392 = vpop.f32.mrb[0].mxu0
        %v1393 = vpop.f32.mrb[0].mxu0
        %1394 = vdwg.mxu0
        %v1395 = vadd.f32 %v448, %v1389
        %v1396 = vadd.f32 %v449, %v1391
        %v1397 = vmul.f32 %v1395, %v1395
        %v1398 = vmul.f32 %v1396, %v1396
        %v1399 = vadd.f32 %v1397, %v1398
        %1400 = vadd.xlane.f32.xlu0 %v1399
        %v1401 = vpop.xlane.xlu0 %1400
        %v1402 = vmul.f32 %v1401, %v455
        %v1403 = vadd.f32 %v1402, 1e-05
        %v1404 = vrsqrt.pop %v1403
        %v1405 = vmul.f32 %v1395, %v1404
        %v1406 = vmul.f32 %v1396, %v1404
        %v1407 = vld [vmem:[#allocation11] sm:$0x3]
        %v1409 = vlaneseq
        %v1410 = vshrl.u32 %v1409, 7
        %v1411 = vsub.s32 0, %v1410
        %v1412 = vrot.slane %v1407, %v1411
        %v1413 = vlaneseq
        %v1414 = vshrl.u32 %v1413, 7
        %v1415 = vsub.s32 1, %v1414
        %v1416 = vrot.slane %v1407, %v1415
        %v1419 = vmul.f32 %v1405, %v1412
        %v1420 = vmul.f32 %v1406, %v1416
        %v1421 = vpack.c.bf16 %v1419, %v1419
        %v1422 = vpack.c.bf16 %v1420, %v1420
        %v1423 = vld [vmem:[#allocation8] sm:$0xff]
        %v1424 = vld [vmem:[#allocation8 + $0x8] sm:$0xff]
        %v1425 = vld [vmem:[#allocation8 + $0x10] sm:$0xff]
        %v1426 = vld [vmem:[#allocation8 + $0x18] sm:$0xff]
        %v1427 = vld [vmem:[#allocation8 + $0x20] sm:$0xff]
        %v1428 = vld [vmem:[#allocation8 + $0x28] sm:$0xff]
        %v1429 = vld [vmem:[#allocation8 + $0x30] sm:$0xff]
        %v1430 = vld [vmem:[#allocation8 + $0x38] sm:$0xff]
        %v1431 = vld [vmem:[#allocation8 + $0x40] sm:$0xff]
        %v1432 = vld [vmem:[#allocation8 + $0x48] sm:$0xff]
        %v1433 = vld [vmem:[#allocation8 + $0x50] sm:$0xff]
        %v1434 = vld [vmem:[#allocation8 + $0x58] sm:$0xff]
        %v1435 = vld [vmem:[#allocation8 + $0x60] sm:$0xff]
        %v1436 = vld [vmem:[#allocation8 + $0x68] sm:$0xff]
        %v1437 = vld [vmem:[#allocation8 + $0x70] sm:$0xff]
        %v1438 = vld [vmem:[#allocation8 + $0x78] sm:$0xff]
        %v1439 = vld [vmem:[#allocation8 + $0x80] sm:$0xff]
        %v1440 = vld [vmem:[#allocation8 + $0x88] sm:$0xff]
        %v1441 = vld [vmem:[#allocation8 + $0x90] sm:$0xff]
        %v1442 = vld [vmem:[#allocation8 + $0x98] sm:$0xff]
        %v1443 = vld [vmem:[#allocation8 + $0xa0] sm:$0xff]
        %v1444 = vld [vmem:[#allocation8 + $0xa8] sm:$0xff]
        %v1445 = vld [vmem:[#allocation8 + $0xb0] sm:$0xff]
        %v1446 = vld [vmem:[#allocation8 + $0xb8] sm:$0xff]
        %v1447 = vld [vmem:[#allocation8 + $0xc0] sm:$0xff]
        %v1448 = vld [vmem:[#allocation8 + $0xc8] sm:$0xff]
        %v1449 = vld [vmem:[#allocation8 + $0xd0] sm:$0xff]
        %v1450 = vld [vmem:[#allocation8 + $0xd8] sm:$0xff]
        %v1451 = vld [vmem:[#allocation8 + $0xe0] sm:$0xff]
        %v1452 = vld [vmem:[#allocation8 + $0xe8] sm:$0xff]
        %v1453 = vld [vmem:[#allocation8 + $0xf0] sm:$0xff]
        %v1454 = vld [vmem:[#allocation8 + $0xf8] sm:$0xff]
        %v1455 = vld [vmem:[#allocation8 + $0x100] sm:$0xff]
        %v1456 = vld [vmem:[#allocation8 + $0x108] sm:$0xff]
        %v1457 = vld [vmem:[#allocation8 + $0x110] sm:$0xff]
        %v1458 = vld [vmem:[#allocation8 + $0x118] sm:$0xff]
        %v1459 = vld [vmem:[#allocation8 + $0x120] sm:$0xff]
        %v1460 = vld [vmem:[#allocation8 + $0x128] sm:$0xff]
        %v1461 = vld [vmem:[#allocation8 + $0x130] sm:$0xff]
        %v1462 = vld [vmem:[#allocation8 + $0x138] sm:$0xff]
        %v1463 = vld [vmem:[#allocation8 + $0x140] sm:$0xff]
        %v1464 = vld [vmem:[#allocation8 + $0x148] sm:$0xff]
        %v1465 = vld [vmem:[#allocation8 + $0x150] sm:$0xff]
        %v1466 = vld [vmem:[#allocation8 + $0x158] sm:$0xff]
        %v1467 = vld [vmem:[#allocation8 + $0x160] sm:$0xff]
        %v1468 = vld [vmem:[#allocation8 + $0x168] sm:$0xff]
        %v1469 = vld [vmem:[#allocation8 + $0x170] sm:$0xff]
        %v1470 = vld [vmem:[#allocation8 + $0x178] sm:$0xff]
        %v1471 = vld [vmem:[#allocation8 + $0x180] sm:$0xff]
        %v1472 = vld [vmem:[#allocation8 + $0x188] sm:$0xff]
        %v1473 = vld [vmem:[#allocation8 + $0x190] sm:$0xff]
        %v1474 = vld [vmem:[#allocation8 + $0x198] sm:$0xff]
        %v1475 = vld [vmem:[#allocation8 + $0x1a0] sm:$0xff]
        %v1476 = vld [vmem:[#allocation8 + $0x1a8] sm:$0xff]
        %v1477 = vld [vmem:[#allocation8 + $0x1b0] sm:$0xff]
        %v1478 = vld [vmem:[#allocation8 + $0x1b8] sm:$0xff]
        %v1479 = vld [vmem:[#allocation8 + $0x1c0] sm:$0xff]
        %v1480 = vld [vmem:[#allocation8 + $0x1c8] sm:$0xff]
        %v1481 = vld [vmem:[#allocation8 + $0x1d0] sm:$0xff]
        %v1482 = vld [vmem:[#allocation8 + $0x1d8] sm:$0xff]
        %v1483 = vld [vmem:[#allocation8 + $0x1e0] sm:$0xff]
        %v1484 = vld [vmem:[#allocation8 + $0x1e8] sm:$0xff]
        %v1485 = vld [vmem:[#allocation8 + $0x1f0] sm:$0xff]
        %v1486 = vld [vmem:[#allocation8 + $0x1f8] sm:$0xff]
        %v1487 = vld [vmem:[#allocation8 + $0x200] sm:$0xff]
        %v1488 = vld [vmem:[#allocation8 + $0x208] sm:$0xff]
        %v1489 = vld [vmem:[#allocation8 + $0x210] sm:$0xff]
        %v1490 = vld [vmem:[#allocation8 + $0x218] sm:$0xff]
        %v1491 = vld [vmem:[#allocation8 + $0x220] sm:$0xff]
        %v1492 = vld [vmem:[#allocation8 + $0x228] sm:$0xff]
        %v1493 = vld [vmem:[#allocation8 + $0x230] sm:$0xff]
        %v1494 = vld [vmem:[#allocation8 + $0x238] sm:$0xff]
        %v1495 = vld [vmem:[#allocation8 + $0x240] sm:$0xff]
        %v1496 = vld [vmem:[#allocation8 + $0x248] sm:$0xff]
        %v1497 = vld [vmem:[#allocation8 + $0x250] sm:$0xff]
        %v1498 = vld [vmem:[#allocation8 + $0x258] sm:$0xff]
        %v1499 = vld [vmem:[#allocation8 + $0x260] sm:$0xff]
        %v1500 = vld [vmem:[#allocation8 + $0x268] sm:$0xff]
        %v1501 = vld [vmem:[#allocation8 + $0x270] sm:$0xff]
        %v1502 = vld [vmem:[#allocation8 + $0x278] sm:$0xff]
        %v1503 = vld [vmem:[#allocation8 + $0x280] sm:$0xff]
        %v1504 = vld [vmem:[#allocation8 + $0x288] sm:$0xff]
        %v1505 = vld [vmem:[#allocation8 + $0x290] sm:$0xff]
        %v1506 = vld [vmem:[#allocation8 + $0x298] sm:$0xff]
        %v1507 = vld [vmem:[#allocation8 + $0x2a0] sm:$0xff]
        %v1508 = vld [vmem:[#allocation8 + $0x2a8] sm:$0xff]
        %v1509 = vld [vmem:[#allocation8 + $0x2b0] sm:$0xff]
        %v1510 = vld [vmem:[#allocation8 + $0x2b8] sm:$0xff]
        %v1511 = vld [vmem:[#allocation8 + $0x2c0] sm:$0xff]
        %v1512 = vld [vmem:[#allocation8 + $0x2c8] sm:$0xff]
        %v1513 = vld [vmem:[#allocation8 + $0x2d0] sm:$0xff]
        %v1514 = vld [vmem:[#allocation8 + $0x2d8] sm:$0xff]
        %v1515 = vld [vmem:[#allocation8 + $0x2e0] sm:$0xff]
        %v1516 = vld [vmem:[#allocation8 + $0x2e8] sm:$0xff]
        %v1517 = vld [vmem:[#allocation8 + $0x2f0] sm:$0xff]
        %v1518 = vld [vmem:[#allocation8 + $0x2f8] sm:$0xff]
        %v1519 = vld [vmem:[#allocation8 + $0x300] sm:$0xff]
        %v1520 = vld [vmem:[#allocation8 + $0x308] sm:$0xff]
        %v1521 = vld [vmem:[#allocation8 + $0x310] sm:$0xff]
        %v1522 = vld [vmem:[#allocation8 + $0x318] sm:$0xff]
        %v1523 = vld [vmem:[#allocation8 + $0x320] sm:$0xff]
        %v1524 = vld [vmem:[#allocation8 + $0x328] sm:$0xff]
        %v1525 = vld [vmem:[#allocation8 + $0x330] sm:$0xff]
        %v1526 = vld [vmem:[#allocation8 + $0x338] sm:$0xff]
        %v1527 = vld [vmem:[#allocation8 + $0x340] sm:$0xff]
        %v1528 = vld [vmem:[#allocation8 + $0x348] sm:$0xff]
        %v1529 = vld [vmem:[#allocation8 + $0x350] sm:$0xff]
        %v1530 = vld [vmem:[#allocation8 + $0x358] sm:$0xff]
        %v1531 = vld [vmem:[#allocation8 + $0x360] sm:$0xff]
        %v1532 = vld [vmem:[#allocation8 + $0x368] sm:$0xff]
        %v1533 = vld [vmem:[#allocation8 + $0x370] sm:$0xff]
        %v1534 = vld [vmem:[#allocation8 + $0x378] sm:$0xff]
        %v1535 = vld [vmem:[#allocation8 + $0x380] sm:$0xff]
        %v1536 = vld [vmem:[#allocation8 + $0x388] sm:$0xff]
        %v1537 = vld [vmem:[#allocation8 + $0x390] sm:$0xff]
        %v1538 = vld [vmem:[#allocation8 + $0x398] sm:$0xff]
        %v1539 = vld [vmem:[#allocation8 + $0x3a0] sm:$0xff]
        %v1540 = vld [vmem:[#allocation8 + $0x3a8] sm:$0xff]
        %v1541 = vld [vmem:[#allocation8 + $0x3b0] sm:$0xff]
        %v1542 = vld [vmem:[#allocation8 + $0x3b8] sm:$0xff]
        %v1543 = vld [vmem:[#allocation8 + $0x3c0] sm:$0xff]
        %v1544 = vld [vmem:[#allocation8 + $0x3c8] sm:$0xff]
        %v1545 = vld [vmem:[#allocation8 + $0x3d0] sm:$0xff]
        %v1546 = vld [vmem:[#allocation8 + $0x3d8] sm:$0xff]
        %v1547 = vld [vmem:[#allocation8 + $0x3e0] sm:$0xff]
        %v1548 = vld [vmem:[#allocation8 + $0x3e8] sm:$0xff]
        %v1549 = vld [vmem:[#allocation8 + $0x3f0] sm:$0xff]
        %v1550 = vld [vmem:[#allocation8 + $0x3f8] sm:$0xff]
        %v1551 = vld [vmem:[#allocation8 + $0x400] sm:$0xff]
        %v1552 = vld [vmem:[#allocation8 + $0x408] sm:$0xff]
        %v1553 = vld [vmem:[#allocation8 + $0x410] sm:$0xff]
        %v1554 = vld [vmem:[#allocation8 + $0x418] sm:$0xff]
        %v1555 = vld [vmem:[#allocation8 + $0x420] sm:$0xff]
        %v1556 = vld [vmem:[#allocation8 + $0x428] sm:$0xff]
        %v1557 = vld [vmem:[#allocation8 + $0x430] sm:$0xff]
        %v1558 = vld [vmem:[#allocation8 + $0x438] sm:$0xff]
        %v1559 = vld [vmem:[#allocation8 + $0x440] sm:$0xff]
        %v1560 = vld [vmem:[#allocation8 + $0x448] sm:$0xff]
        %v1561 = vld [vmem:[#allocation8 + $0x450] sm:$0xff]
        %v1562 = vld [vmem:[#allocation8 + $0x458] sm:$0xff]
        %v1563 = vld [vmem:[#allocation8 + $0x460] sm:$0xff]
        %v1564 = vld [vmem:[#allocation8 + $0x468] sm:$0xff]
        %v1565 = vld [vmem:[#allocation8 + $0x470] sm:$0xff]
        %v1566 = vld [vmem:[#allocation8 + $0x478] sm:$0xff]
        %v1567 = vld [vmem:[#allocation8 + $0x480] sm:$0xff]
        %v1568 = vld [vmem:[#allocation8 + $0x488] sm:$0xff]
        %v1569 = vld [vmem:[#allocation8 + $0x490] sm:$0xff]
        %v1570 = vld [vmem:[#allocation8 + $0x498] sm:$0xff]
        %v1571 = vld [vmem:[#allocation8 + $0x4a0] sm:$0xff]
        %v1572 = vld [vmem:[#allocation8 + $0x4a8] sm:$0xff]
        %v1573 = vld [vmem:[#allocation8 + $0x4b0] sm:$0xff]
        %v1574 = vld [vmem:[#allocation8 + $0x4b8] sm:$0xff]
        %v1575 = vld [vmem:[#allocation8 + $0x4c0] sm:$0xff]
        %v1576 = vld [vmem:[#allocation8 + $0x4c8] sm:$0xff]
        %v1577 = vld [vmem:[#allocation8 + $0x4d0] sm:$0xff]
        %v1578 = vld [vmem:[#allocation8 + $0x4d8] sm:$0xff]
        %v1579 = vld [vmem:[#allocation8 + $0x4e0] sm:$0xff]
        %v1580 = vld [vmem:[#allocation8 + $0x4e8] sm:$0xff]
        %v1581 = vld [vmem:[#allocation8 + $0x4f0] sm:$0xff]
        %v1582 = vld [vmem:[#allocation8 + $0x4f8] sm:$0xff]
        %v1583 = vld [vmem:[#allocation8 + $0x500] sm:$0xff]
        %v1584 = vld [vmem:[#allocation8 + $0x508] sm:$0xff]
        %v1585 = vld [vmem:[#allocation8 + $0x510] sm:$0xff]
        %v1586 = vld [vmem:[#allocation8 + $0x518] sm:$0xff]
        %v1587 = vld [vmem:[#allocation8 + $0x520] sm:$0xff]
        %v1588 = vld [vmem:[#allocation8 + $0x528] sm:$0xff]
        %v1589 = vld [vmem:[#allocation8 + $0x530] sm:$0xff]
        %v1590 = vld [vmem:[#allocation8 + $0x538] sm:$0xff]
        %v1591 = vld [vmem:[#allocation8 + $0x540] sm:$0xff]
        %v1592 = vld [vmem:[#allocation8 + $0x548] sm:$0xff]
        %v1593 = vld [vmem:[#allocation8 + $0x550] sm:$0xff]
        %v1594 = vld [vmem:[#allocation8 + $0x558] sm:$0xff]
        %v1595 = vld [vmem:[#allocation8 + $0x560] sm:$0xff]
        %v1596 = vld [vmem:[#allocation8 + $0x568] sm:$0xff]
        %v1597 = vld [vmem:[#allocation8 + $0x570] sm:$0xff]
        %v1598 = vld [vmem:[#allocation8 + $0x578] sm:$0xff]
        %v1599 = vld [vmem:[#allocation8 + $0x580] sm:$0xff]
        %v1600 = vld [vmem:[#allocation8 + $0x588] sm:$0xff]
        %v1601 = vld [vmem:[#allocation8 + $0x590] sm:$0xff]
        %v1602 = vld [vmem:[#allocation8 + $0x598] sm:$0xff]
        %v1603 = vld [vmem:[#allocation8 + $0x5a0] sm:$0xff]
        %v1604 = vld [vmem:[#allocation8 + $0x5a8] sm:$0xff]
        %v1605 = vld [vmem:[#allocation8 + $0x5b0] sm:$0xff]
        %v1606 = vld [vmem:[#allocation8 + $0x5b8] sm:$0xff]
        %v1607 = vld [vmem:[#allocation8 + $0x5c0] sm:$0xff]
        %v1608 = vld [vmem:[#allocation8 + $0x5c8] sm:$0xff]
        %v1609 = vld [vmem:[#allocation8 + $0x5d0] sm:$0xff]
        %v1610 = vld [vmem:[#allocation8 + $0x5d8] sm:$0xff]
        %v1611 = vld [vmem:[#allocation8 + $0x5e0] sm:$0xff]
        %v1612 = vld [vmem:[#allocation8 + $0x5e8] sm:$0xff]
        %v1613 = vld [vmem:[#allocation8 + $0x5f0] sm:$0xff]
        %v1614 = vld [vmem:[#allocation8 + $0x5f8] sm:$0xff]
        %v1807 = vunpack.c.l.b16 %v1423
        %v1808 = vunpack.c.h.b16 %v1423
        %v1809 = vunpack.c.l.b16 %v1424
        %v1810 = vunpack.c.h.b16 %v1424
        %v1811 = vunpack.c.l.b16 %v1425
        %v1812 = vunpack.c.h.b16 %v1425
        %v1813 = vunpack.c.l.b16 %v1426
        %v1814 = vunpack.c.h.b16 %v1426
        %v1815 = vunpack.c.l.b16 %v1427
        %v1816 = vunpack.c.h.b16 %v1427
        %v1817 = vunpack.c.l.b16 %v1428
        %v1818 = vunpack.c.h.b16 %v1428
        %v1819 = vunpack.c.l.b16 %v1429
        %v1820 = vunpack.c.h.b16 %v1429
        %v1821 = vunpack.c.l.b16 %v1430
        %v1822 = vunpack.c.h.b16 %v1430
        %v1823 = vunpack.c.l.b16 %v1431
        %v1824 = vunpack.c.h.b16 %v1431
        %v1825 = vunpack.c.l.b16 %v1432
        %v1826 = vunpack.c.h.b16 %v1432
        %v1827 = vunpack.c.l.b16 %v1433
        %v1828 = vunpack.c.h.b16 %v1433
        %v1829 = vunpack.c.l.b16 %v1434
        %v1830 = vunpack.c.h.b16 %v1434
        %v1831 = vunpack.c.l.b16 %v1435
        %v1832 = vunpack.c.h.b16 %v1435
        %v1833 = vunpack.c.l.b16 %v1436
        %v1834 = vunpack.c.h.b16 %v1436
        %v1835 = vunpack.c.l.b16 %v1437
        %v1836 = vunpack.c.h.b16 %v1437
        %v1837 = vunpack.c.l.b16 %v1438
        %v1838 = vunpack.c.h.b16 %v1438
        %v1839 = vunpack.c.l.b16 %v1439
        %v1840 = vunpack.c.h.b16 %v1439
        %v1841 = vunpack.c.l.b16 %v1440
        %v1842 = vunpack.c.h.b16 %v1440
        %v1843 = vunpack.c.l.b16 %v1441
        %v1844 = vunpack.c.h.b16 %v1441
        %v1845 = vunpack.c.l.b16 %v1442
        %v1846 = vunpack.c.h.b16 %v1442
        %v1847 = vunpack.c.l.b16 %v1443
        %v1848 = vunpack.c.h.b16 %v1443
        %v1849 = vunpack.c.l.b16 %v1444
        %v1850 = vunpack.c.h.b16 %v1444
        %v1851 = vunpack.c.l.b16 %v1445
        %v1852 = vunpack.c.h.b16 %v1445
        %v1853 = vunpack.c.l.b16 %v1446
        %v1854 = vunpack.c.h.b16 %v1446
        %v1855 = vunpack.c.l.b16 %v1447
        %v1856 = vunpack.c.h.b16 %v1447
        %v1857 = vunpack.c.l.b16 %v1448
        %v1858 = vunpack.c.h.b16 %v1448
        %v1859 = vunpack.c.l.b16 %v1449
        %v1860 = vunpack.c.h.b16 %v1449
        %v1861 = vunpack.c.l.b16 %v1450
        %v1862 = vunpack.c.h.b16 %v1450
        %v1863 = vunpack.c.l.b16 %v1451
        %v1864 = vunpack.c.h.b16 %v1451
        %v1865 = vunpack.c.l.b16 %v1452
        %v1866 = vunpack.c.h.b16 %v1452
        %v1867 = vunpack.c.l.b16 %v1453
        %v1868 = vunpack.c.h.b16 %v1453
        %v1869 = vunpack.c.l.b16 %v1454
        %v1870 = vunpack.c.h.b16 %v1454
        %v1871 = vunpack.c.l.b16 %v1455
        %v1872 = vunpack.c.h.b16 %v1455
        %v1873 = vunpack.c.l.b16 %v1456
        %v1874 = vunpack.c.h.b16 %v1456
        %v1875 = vunpack.c.l.b16 %v1457
        %v1876 = vunpack.c.h.b16 %v1457
        %v1877 = vunpack.c.l.b16 %v1458
        %v1878 = vunpack.c.h.b16 %v1458
        %v1879 = vunpack.c.l.b16 %v1459
        %v1880 = vunpack.c.h.b16 %v1459
        %v1881 = vunpack.c.l.b16 %v1460
        %v1882 = vunpack.c.h.b16 %v1460
        %v1883 = vunpack.c.l.b16 %v1461
        %v1884 = vunpack.c.h.b16 %v1461
        %v1885 = vunpack.c.l.b16 %v1462
        %v1886 = vunpack.c.h.b16 %v1462
        %v1887 = vunpack.c.l.b16 %v1463
        %v1888 = vunpack.c.h.b16 %v1463
        %v1889 = vunpack.c.l.b16 %v1464
        %v1890 = vunpack.c.h.b16 %v1464
        %v1891 = vunpack.c.l.b16 %v1465
        %v1892 = vunpack.c.h.b16 %v1465
        %v1893 = vunpack.c.l.b16 %v1466
        %v1894 = vunpack.c.h.b16 %v1466
        %v1895 = vunpack.c.l.b16 %v1467
        %v1896 = vunpack.c.h.b16 %v1467
        %v1897 = vunpack.c.l.b16 %v1468
        %v1898 = vunpack.c.h.b16 %v1468
        %v1899 = vunpack.c.l.b16 %v1469
        %v1900 = vunpack.c.h.b16 %v1469
        %v1901 = vunpack.c.l.b16 %v1470
        %v1902 = vunpack.c.h.b16 %v1470
        %v1903 = vunpack.c.l.b16 %v1471
        %v1904 = vunpack.c.h.b16 %v1471
        %v1905 = vunpack.c.l.b16 %v1472
        %v1906 = vunpack.c.h.b16 %v1472
        %v1907 = vunpack.c.l.b16 %v1473
        %v1908 = vunpack.c.h.b16 %v1473
        %v1909 = vunpack.c.l.b16 %v1474
        %v1910 = vunpack.c.h.b16 %v1474
        %v1911 = vunpack.c.l.b16 %v1475
        %v1912 = vunpack.c.h.b16 %v1475
        %v1913 = vunpack.c.l.b16 %v1476
        %v1914 = vunpack.c.h.b16 %v1476
        %v1915 = vunpack.c.l.b16 %v1477
        %v1916 = vunpack.c.h.b16 %v1477
        %v1917 = vunpack.c.l.b16 %v1478
        %v1918 = vunpack.c.h.b16 %v1478
        %v1919 = vunpack.c.l.b16 %v1479
        %v1920 = vunpack.c.h.b16 %v1479
        %v1921 = vunpack.c.l.b16 %v1480
        %v1922 = vunpack.c.h.b16 %v1480
        %v1923 = vunpack.c.l.b16 %v1481
        %v1924 = vunpack.c.h.b16 %v1481
        %v1925 = vunpack.c.l.b16 %v1482
        %v1926 = vunpack.c.h.b16 %v1482
        %v1927 = vunpack.c.l.b16 %v1483
        %v1928 = vunpack.c.h.b16 %v1483
        %v1929 = vunpack.c.l.b16 %v1484
        %v1930 = vunpack.c.h.b16 %v1484
        %v1931 = vunpack.c.l.b16 %v1485
        %v1932 = vunpack.c.h.b16 %v1485
        %v1933 = vunpack.c.l.b16 %v1486
        %v1934 = vunpack.c.h.b16 %v1486
        %v1935 = vunpack.c.l.b16 %v1487
        %v1936 = vunpack.c.h.b16 %v1487
        %v1937 = vunpack.c.l.b16 %v1488
        %v1938 = vunpack.c.h.b16 %v1488
        %v1939 = vunpack.c.l.b16 %v1489
        %v1940 = vunpack.c.h.b16 %v1489
        %v1941 = vunpack.c.l.b16 %v1490
        %v1942 = vunpack.c.h.b16 %v1490
        %v1943 = vunpack.c.l.b16 %v1491
        %v1944 = vunpack.c.h.b16 %v1491
        %v1945 = vunpack.c.l.b16 %v1492
        %v1946 = vunpack.c.h.b16 %v1492
        %v1947 = vunpack.c.l.b16 %v1493
        %v1948 = vunpack.c.h.b16 %v1493
        %v1949 = vunpack.c.l.b16 %v1494
        %v1950 = vunpack.c.h.b16 %v1494
        %v1951 = vunpack.c.l.b16 %v1495
        %v1952 = vunpack.c.h.b16 %v1495
        %v1953 = vunpack.c.l.b16 %v1496
        %v1954 = vunpack.c.h.b16 %v1496
        %v1955 = vunpack.c.l.b16 %v1497
        %v1956 = vunpack.c.h.b16 %v1497
        %v1957 = vunpack.c.l.b16 %v1498
        %v1958 = vunpack.c.h.b16 %v1498
        %v1959 = vunpack.c.l.b16 %v1499
        %v1960 = vunpack.c.h.b16 %v1499
        %v1961 = vunpack.c.l.b16 %v1500
        %v1962 = vunpack.c.h.b16 %v1500
        %v1963 = vunpack.c.l.b16 %v1501
        %v1964 = vunpack.c.h.b16 %v1501
        %v1965 = vunpack.c.l.b16 %v1502
        %v1966 = vunpack.c.h.b16 %v1502
        %v1967 = vunpack.c.l.b16 %v1503
        %v1968 = vunpack.c.h.b16 %v1503
        %v1969 = vunpack.c.l.b16 %v1504
        %v1970 = vunpack.c.h.b16 %v1504
        %v1971 = vunpack.c.l.b16 %v1505
        %v1972 = vunpack.c.h.b16 %v1505
        %v1973 = vunpack.c.l.b16 %v1506
        %v1974 = vunpack.c.h.b16 %v1506
        %v1975 = vunpack.c.l.b16 %v1507
        %v1976 = vunpack.c.h.b16 %v1507
        %v1977 = vunpack.c.l.b16 %v1508
        %v1978 = vunpack.c.h.b16 %v1508
        %v1979 = vunpack.c.l.b16 %v1509
        %v1980 = vunpack.c.h.b16 %v1509
        %v1981 = vunpack.c.l.b16 %v1510
        %v1982 = vunpack.c.h.b16 %v1510
        %v1983 = vunpack.c.l.b16 %v1511
        %v1984 = vunpack.c.h.b16 %v1511
        %v1985 = vunpack.c.l.b16 %v1512
        %v1986 = vunpack.c.h.b16 %v1512
        %v1987 = vunpack.c.l.b16 %v1513
        %v1988 = vunpack.c.h.b16 %v1513
        %v1989 = vunpack.c.l.b16 %v1514
        %v1990 = vunpack.c.h.b16 %v1514
        %v1991 = vunpack.c.l.b16 %v1515
        %v1992 = vunpack.c.h.b16 %v1515
        %v1993 = vunpack.c.l.b16 %v1516
        %v1994 = vunpack.c.h.b16 %v1516
        %v1995 = vunpack.c.l.b16 %v1517
        %v1996 = vunpack.c.h.b16 %v1517
        %v1997 = vunpack.c.l.b16 %v1518
        %v1998 = vunpack.c.h.b16 %v1518
        %v1999 = vunpack.c.l.b16 %v1519
        %v2000 = vunpack.c.h.b16 %v1519
        %v2001 = vunpack.c.l.b16 %v1520
        %v2002 = vunpack.c.h.b16 %v1520
        %v2003 = vunpack.c.l.b16 %v1521
        %v2004 = vunpack.c.h.b16 %v1521
        %v2005 = vunpack.c.l.b16 %v1522
        %v2006 = vunpack.c.h.b16 %v1522
        %v2007 = vunpack.c.l.b16 %v1523
        %v2008 = vunpack.c.h.b16 %v1523
        %v2009 = vunpack.c.l.b16 %v1524
        %v2010 = vunpack.c.h.b16 %v1524
        %v2011 = vunpack.c.l.b16 %v1525
        %v2012 = vunpack.c.h.b16 %v1525
        %v2013 = vunpack.c.l.b16 %v1526
        %v2014 = vunpack.c.h.b16 %v1526
        %v2015 = vunpack.c.l.b16 %v1527
        %v2016 = vunpack.c.h.b16 %v1527
        %v2017 = vunpack.c.l.b16 %v1528
        %v2018 = vunpack.c.h.b16 %v1528
        %v2019 = vunpack.c.l.b16 %v1529
        %v2020 = vunpack.c.h.b16 %v1529
        %v2021 = vunpack.c.l.b16 %v1530
        %v2022 = vunpack.c.h.b16 %v1530
        %v2023 = vunpack.c.l.b16 %v1531
        %v2024 = vunpack.c.h.b16 %v1531
        %v2025 = vunpack.c.l.b16 %v1532
        %v2026 = vunpack.c.h.b16 %v1532
        %v2027 = vunpack.c.l.b16 %v1533
        %v2028 = vunpack.c.h.b16 %v1533
        %v2029 = vunpack.c.l.b16 %v1534
        %v2030 = vunpack.c.h.b16 %v1534
        %v2031 = vunpack.c.l.b16 %v1535
        %v2032 = vunpack.c.h.b16 %v1535
        %v2033 = vunpack.c.l.b16 %v1536
        %v2034 = vunpack.c.h.b16 %v1536
        %v2035 = vunpack.c.l.b16 %v1537
        %v2036 = vunpack.c.h.b16 %v1537
        %v2037 = vunpack.c.l.b16 %v1538
        %v2038 = vunpack.c.h.b16 %v1538
        %v2039 = vunpack.c.l.b16 %v1539
        %v2040 = vunpack.c.h.b16 %v1539
        %v2041 = vunpack.c.l.b16 %v1540
        %v2042 = vunpack.c.h.b16 %v1540
        %v2043 = vunpack.c.l.b16 %v1541
        %v2044 = vunpack.c.h.b16 %v1541
        %v2045 = vunpack.c.l.b16 %v1542
        %v2046 = vunpack.c.h.b16 %v1542
        %v2047 = vunpack.c.l.b16 %v1543
        %v2048 = vunpack.c.h.b16 %v1543
        %v2049 = vunpack.c.l.b16 %v1544
        %v2050 = vunpack.c.h.b16 %v1544
        %v2051 = vunpack.c.l.b16 %v1545
        %v2052 = vunpack.c.h.b16 %v1545
        %v2053 = vunpack.c.l.b16 %v1546
        %v2054 = vunpack.c.h.b16 %v1546
        %v2055 = vunpack.c.l.b16 %v1547
        %v2056 = vunpack.c.h.b16 %v1547
        %v2057 = vunpack.c.l.b16 %v1548
        %v2058 = vunpack.c.h.b16 %v1548
        %v2059 = vunpack.c.l.b16 %v1549
        %v2060 = vunpack.c.h.b16 %v1549
        %v2061 = vunpack.c.l.b16 %v1550
        %v2062 = vunpack.c.h.b16 %v1550
        %v2063 = vunpack.c.l.b16 %v1551
        %v2064 = vunpack.c.h.b16 %v1551
        %v2065 = vunpack.c.l.b16 %v1552
        %v2066 = vunpack.c.h.b16 %v1552
        %v2067 = vunpack.c.l.b16 %v1553
        %v2068 = vunpack.c.h.b16 %v1553
        %v2069 = vunpack.c.l.b16 %v1554
        %v2070 = vunpack.c.h.b16 %v1554
        %v2071 = vunpack.c.l.b16 %v1555
        %v2072 = vunpack.c.h.b16 %v1555
        %v2073 = vunpack.c.l.b16 %v1556
        %v2074 = vunpack.c.h.b16 %v1556
        %v2075 = vunpack.c.l.b16 %v1557
        %v2076 = vunpack.c.h.b16 %v1557
        %v2077 = vunpack.c.l.b16 %v1558
        %v2078 = vunpack.c.h.b16 %v1558
        %v2079 = vunpack.c.l.b16 %v1559
        %v2080 = vunpack.c.h.b16 %v1559
        %v2081 = vunpack.c.l.b16 %v1560
        %v2082 = vunpack.c.h.b16 %v1560
        %v2083 = vunpack.c.l.b16 %v1561
        %v2084 = vunpack.c.h.b16 %v1561
        %v2085 = vunpack.c.l.b16 %v1562
        %v2086 = vunpack.c.h.b16 %v1562
        %v2087 = vunpack.c.l.b16 %v1563
        %v2088 = vunpack.c.h.b16 %v1563
        %v2089 = vunpack.c.l.b16 %v1564
        %v2090 = vunpack.c.h.b16 %v1564
        %v2091 = vunpack.c.l.b16 %v1565
        %v2092 = vunpack.c.h.b16 %v1565
        %v2093 = vunpack.c.l.b16 %v1566
        %v2094 = vunpack.c.h.b16 %v1566
        %v2095 = vunpack.c.l.b16 %v1567
        %v2096 = vunpack.c.h.b16 %v1567
        %v2097 = vunpack.c.l.b16 %v1568
        %v2098 = vunpack.c.h.b16 %v1568
        %v2099 = vunpack.c.l.b16 %v1569
        %v2100 = vunpack.c.h.b16 %v1569
        %v2101 = vunpack.c.l.b16 %v1570
        %v2102 = vunpack.c.h.b16 %v1570
        %v2103 = vunpack.c.l.b16 %v1571
        %v2104 = vunpack.c.h.b16 %v1571
        %v2105 = vunpack.c.l.b16 %v1572
        %v2106 = vunpack.c.h.b16 %v1572
        %v2107 = vunpack.c.l.b16 %v1573
        %v2108 = vunpack.c.h.b16 %v1573
        %v2109 = vunpack.c.l.b16 %v1574
        %v2110 = vunpack.c.h.b16 %v1574
        %v2111 = vunpack.c.l.b16 %v1575
        %v2112 = vunpack.c.h.b16 %v1575
        %v2113 = vunpack.c.l.b16 %v1576
        %v2114 = vunpack.c.h.b16 %v1576
        %v2115 = vunpack.c.l.b16 %v1577
        %v2116 = vunpack.c.h.b16 %v1577
        %v2117 = vunpack.c.l.b16 %v1578
        %v2118 = vunpack.c.h.b16 %v1578
        %v2119 = vunpack.c.l.b16 %v1579
        %v2120 = vunpack.c.h.b16 %v1579
        %v2121 = vunpack.c.l.b16 %v1580
        %v2122 = vunpack.c.h.b16 %v1580
        %v2123 = vunpack.c.l.b16 %v1581
        %v2124 = vunpack.c.h.b16 %v1581
        %v2125 = vunpack.c.l.b16 %v1582
        %v2126 = vunpack.c.h.b16 %v1582
        %v2127 = vunpack.c.l.b16 %v1583
        %v2128 = vunpack.c.h.b16 %v1583
        %v2129 = vunpack.c.l.b16 %v1584
        %v2130 = vunpack.c.h.b16 %v1584
        %v2131 = vunpack.c.l.b16 %v1585
        %v2132 = vunpack.c.h.b16 %v1585
        %v2133 = vunpack.c.l.b16 %v1586
        %v2134 = vunpack.c.h.b16 %v1586
        %v2135 = vunpack.c.l.b16 %v1587
        %v2136 = vunpack.c.h.b16 %v1587
        %v2137 = vunpack.c.l.b16 %v1588
        %v2138 = vunpack.c.h.b16 %v1588
        %v2139 = vunpack.c.l.b16 %v1589
        %v2140 = vunpack.c.h.b16 %v1589
        %v2141 = vunpack.c.l.b16 %v1590
        %v2142 = vunpack.c.h.b16 %v1590
        %v2143 = vunpack.c.l.b16 %v1591
        %v2144 = vunpack.c.h.b16 %v1591
        %v2145 = vunpack.c.l.b16 %v1592
        %v2146 = vunpack.c.h.b16 %v1592
        %v2147 = vunpack.c.l.b16 %v1593
        %v2148 = vunpack.c.h.b16 %v1593
        %v2149 = vunpack.c.l.b16 %v1594
        %v2150 = vunpack.c.h.b16 %v1594
        %v2151 = vunpack.c.l.b16 %v1595
        %v2152 = vunpack.c.h.b16 %v1595
        %v2153 = vunpack.c.l.b16 %v1596
        %v2154 = vunpack.c.h.b16 %v1596
        %v2155 = vunpack.c.l.b16 %v1597
        %v2156 = vunpack.c.h.b16 %v1597
        %v2157 = vunpack.c.l.b16 %v1598
        %v2158 = vunpack.c.h.b16 %v1598
        %v2159 = vunpack.c.l.b16 %v1599
        %v2160 = vunpack.c.h.b16 %v1599
        %v2161 = vunpack.c.l.b16 %v1600
        %v2162 = vunpack.c.h.b16 %v1600
        %v2163 = vunpack.c.l.b16 %v1601
        %v2164 = vunpack.c.h.b16 %v1601
        %v2165 = vunpack.c.l.b16 %v1602
        %v2166 = vunpack.c.h.b16 %v1602
        %v2167 = vunpack.c.l.b16 %v1603
        %v2168 = vunpack.c.h.b16 %v1603
        %v2169 = vunpack.c.l.b16 %v1604
        %v2170 = vunpack.c.h.b16 %v1604
        %v2171 = vunpack.c.l.b16 %v1605
        %v2172 = vunpack.c.h.b16 %v1605
        %v2173 = vunpack.c.l.b16 %v1606
        %v2174 = vunpack.c.h.b16 %v1606
        %v2175 = vunpack.c.l.b16 %v1607
        %v2176 = vunpack.c.h.b16 %v1607
        %v2177 = vunpack.c.l.b16 %v1608
        %v2178 = vunpack.c.h.b16 %v1608
        %v2179 = vunpack.c.l.b16 %v1609
        %v2180 = vunpack.c.h.b16 %v1609
        %v2181 = vunpack.c.l.b16 %v1610
        %v2182 = vunpack.c.h.b16 %v1610
        %v2183 = vunpack.c.l.b16 %v1611
        %v2184 = vunpack.c.h.b16 %v1611
        %v2185 = vunpack.c.l.b16 %v1612
        %v2186 = vunpack.c.h.b16 %v1612
        %v2187 = vunpack.c.l.b16 %v1613
        %v2188 = vunpack.c.h.b16 %v1613
        %v2189 = vunpack.c.l.b16 %v1614
        %v2190 = vunpack.c.h.b16 %v1614
        %v2191 = vpack.c.b16 %v1819, %v1807
        %v2192 = vpack.c.b16 %v1820, %v1808
        %v2193 = vpack.c.b16 %v1821, %v1809
        %v2194 = vpack.c.b16 %v1822, %v1810
        %v2195 = vpack.c.b16 %v1823, %v1811
        %v2196 = vpack.c.b16 %v1824, %v1812
        %v2197 = vpack.c.b16 %v1825, %v1813
        %v2198 = vpack.c.b16 %v1826, %v1814
        %v2199 = vpack.c.b16 %v1827, %v1815
        %v2200 = vpack.c.b16 %v1828, %v1816
        %v2201 = vpack.c.b16 %v1829, %v1817
        %v2202 = vpack.c.b16 %v1830, %v1818
        %v2203 = vpack.c.b16 %v1843, %v1831
        %v2204 = vpack.c.b16 %v1844, %v1832
        %v2205 = vpack.c.b16 %v1845, %v1833
        %v2206 = vpack.c.b16 %v1846, %v1834
        %v2207 = vpack.c.b16 %v1847, %v1835
        %v2208 = vpack.c.b16 %v1848, %v1836
        %v2209 = vpack.c.b16 %v1849, %v1837
        %v2210 = vpack.c.b16 %v1850, %v1838
        %v2211 = vpack.c.b16 %v1851, %v1839
        %v2212 = vpack.c.b16 %v1852, %v1840
        %v2213 = vpack.c.b16 %v1853, %v1841
        %v2214 = vpack.c.b16 %v1854, %v1842
        %v2215 = vpack.c.b16 %v1867, %v1855
        %v2216 = vpack.c.b16 %v1868, %v1856
        %v2217 = vpack.c.b16 %v1869, %v1857
        %v2218 = vpack.c.b16 %v1870, %v1858
        %v2219 = vpack.c.b16 %v1871, %v1859
        %v2220 = vpack.c.b16 %v1872, %v1860
        %v2221 = vpack.c.b16 %v1873, %v1861
        %v2222 = vpack.c.b16 %v1874, %v1862
        %v2223 = vpack.c.b16 %v1875, %v1863
        %v2224 = vpack.c.b16 %v1876, %v1864
        %v2225 = vpack.c.b16 %v1877, %v1865
        %v2226 = vpack.c.b16 %v1878, %v1866
        %v2227 = vpack.c.b16 %v1891, %v1879
        %v2228 = vpack.c.b16 %v1892, %v1880
        %v2229 = vpack.c.b16 %v1893, %v1881
        %v2230 = vpack.c.b16 %v1894, %v1882
        %v2231 = vpack.c.b16 %v1895, %v1883
        %v2232 = vpack.c.b16 %v1896, %v1884
        %v2233 = vpack.c.b16 %v1897, %v1885
        %v2234 = vpack.c.b16 %v1898, %v1886
        %v2235 = vpack.c.b16 %v1899, %v1887
        %v2236 = vpack.c.b16 %v1900, %v1888
        %v2237 = vpack.c.b16 %v1901, %v1889
        %v2238 = vpack.c.b16 %v1902, %v1890
        %v2239 = vpack.c.b16 %v1915, %v1903
        %v2240 = vpack.c.b16 %v1916, %v1904
        %v2241 = vpack.c.b16 %v1917, %v1905
        %v2242 = vpack.c.b16 %v1918, %v1906
        %v2243 = vpack.c.b16 %v1919, %v1907
        %v2244 = vpack.c.b16 %v1920, %v1908
        %v2245 = vpack.c.b16 %v1921, %v1909
        %v2246 = vpack.c.b16 %v1922, %v1910
        %v2247 = vpack.c.b16 %v1923, %v1911
        %v2248 = vpack.c.b16 %v1924, %v1912
        %v2249 = vpack.c.b16 %v1925, %v1913
        %v2250 = vpack.c.b16 %v1926, %v1914
        %v2251 = vpack.c.b16 %v1939, %v1927
        %v2252 = vpack.c.b16 %v1940, %v1928
        %v2253 = vpack.c.b16 %v1941, %v1929
        %v2254 = vpack.c.b16 %v1942, %v1930
        %v2255 = vpack.c.b16 %v1943, %v1931
        %v2256 = vpack.c.b16 %v1944, %v1932
        %v2257 = vpack.c.b16 %v1945, %v1933
        %v2258 = vpack.c.b16 %v1946, %v1934
        %v2259 = vpack.c.b16 %v1947, %v1935
        %v2260 = vpack.c.b16 %v1948, %v1936
        %v2261 = vpack.c.b16 %v1949, %v1937
        %v2262 = vpack.c.b16 %v1950, %v1938
        %v2263 = vpack.c.b16 %v1963, %v1951
        %v2264 = vpack.c.b16 %v1964, %v1952
        %v2265 = vpack.c.b16 %v1965, %v1953
        %v2266 = vpack.c.b16 %v1966, %v1954
        %v2267 = vpack.c.b16 %v1967, %v1955
        %v2268 = vpack.c.b16 %v1968, %v1956
        %v2269 = vpack.c.b16 %v1969, %v1957
        %v2270 = vpack.c.b16 %v1970, %v1958
        %v2271 = vpack.c.b16 %v1971, %v1959
        %v2272 = vpack.c.b16 %v1972, %v1960
        %v2273 = vpack.c.b16 %v1973, %v1961
        %v2274 = vpack.c.b16 %v1974, %v1962
        %v2275 = vpack.c.b16 %v1987, %v1975
        %v2276 = vpack.c.b16 %v1988, %v1976
        %v2277 = vpack.c.b16 %v1989, %v1977
        %v2278 = vpack.c.b16 %v1990, %v1978
        %v2279 = vpack.c.b16 %v1991, %v1979
        %v2280 = vpack.c.b16 %v1992, %v1980
        %v2281 = vpack.c.b16 %v1993, %v1981
        %v2282 = vpack.c.b16 %v1994, %v1982
        %v2283 = vpack.c.b16 %v1995, %v1983
        %v2284 = vpack.c.b16 %v1996, %v1984
        %v2285 = vpack.c.b16 %v1997, %v1985
        %v2286 = vpack.c.b16 %v1998, %v1986
        %v2287 = vpack.c.b16 %v2011, %v1999
        %v2288 = vpack.c.b16 %v2012, %v2000
        %v2289 = vpack.c.b16 %v2013, %v2001
        %v2290 = vpack.c.b16 %v2014, %v2002
        %v2291 = vpack.c.b16 %v2015, %v2003
        %v2292 = vpack.c.b16 %v2016, %v2004
        %v2293 = vpack.c.b16 %v2017, %v2005
        %v2294 = vpack.c.b16 %v2018, %v2006
        %v2295 = vpack.c.b16 %v2019, %v2007
        %v2296 = vpack.c.b16 %v2020, %v2008
        %v2297 = vpack.c.b16 %v2021, %v2009
        %v2298 = vpack.c.b16 %v2022, %v2010
        %v2299 = vpack.c.b16 %v2035, %v2023
        %v2300 = vpack.c.b16 %v2036, %v2024
        %v2301 = vpack.c.b16 %v2037, %v2025
        %v2302 = vpack.c.b16 %v2038, %v2026
        %v2303 = vpack.c.b16 %v2039, %v2027
        %v2304 = vpack.c.b16 %v2040, %v2028
        %v2305 = vpack.c.b16 %v2041, %v2029
        %v2306 = vpack.c.b16 %v2042, %v2030
        %v2307 = vpack.c.b16 %v2043, %v2031
        %v2308 = vpack.c.b16 %v2044, %v2032
        %v2309 = vpack.c.b16 %v2045, %v2033
        %v2310 = vpack.c.b16 %v2046, %v2034
        %v2311 = vpack.c.b16 %v2059, %v2047
        %v2312 = vpack.c.b16 %v2060, %v2048
        %v2313 = vpack.c.b16 %v2061, %v2049
        %v2314 = vpack.c.b16 %v2062, %v2050
        %v2315 = vpack.c.b16 %v2063, %v2051
        %v2316 = vpack.c.b16 %v2064, %v2052
        %v2317 = vpack.c.b16 %v2065, %v2053
        %v2318 = vpack.c.b16 %v2066, %v2054
        %v2319 = vpack.c.b16 %v2067, %v2055
        %v2320 = vpack.c.b16 %v2068, %v2056
        %v2321 = vpack.c.b16 %v2069, %v2057
        %v2322 = vpack.c.b16 %v2070, %v2058
        %v2323 = vpack.c.b16 %v2083, %v2071
        %v2324 = vpack.c.b16 %v2084, %v2072
        %v2325 = vpack.c.b16 %v2085, %v2073
        %v2326 = vpack.c.b16 %v2086, %v2074
        %v2327 = vpack.c.b16 %v2087, %v2075
        %v2328 = vpack.c.b16 %v2088, %v2076
        %v2329 = vpack.c.b16 %v2089, %v2077
        %v2330 = vpack.c.b16 %v2090, %v2078
        %v2331 = vpack.c.b16 %v2091, %v2079
        %v2332 = vpack.c.b16 %v2092, %v2080
        %v2333 = vpack.c.b16 %v2093, %v2081
        %v2334 = vpack.c.b16 %v2094, %v2082
        %v2335 = vpack.c.b16 %v2107, %v2095
        %v2336 = vpack.c.b16 %v2108, %v2096
        %v2337 = vpack.c.b16 %v2109, %v2097
        %v2338 = vpack.c.b16 %v2110, %v2098
        %v2339 = vpack.c.b16 %v2111, %v2099
        %v2340 = vpack.c.b16 %v2112, %v2100
        %v2341 = vpack.c.b16 %v2113, %v2101
        %v2342 = vpack.c.b16 %v2114, %v2102
        %v2343 = vpack.c.b16 %v2115, %v2103
        %v2344 = vpack.c.b16 %v2116, %v2104
        %v2345 = vpack.c.b16 %v2117, %v2105
        %v2346 = vpack.c.b16 %v2118, %v2106
        %v2347 = vpack.c.b16 %v2131, %v2119
        %v2348 = vpack.c.b16 %v2132, %v2120
        %v2349 = vpack.c.b16 %v2133, %v2121
        %v2350 = vpack.c.b16 %v2134, %v2122
        %v2351 = vpack.c.b16 %v2135, %v2123
        %v2352 = vpack.c.b16 %v2136, %v2124
        %v2353 = vpack.c.b16 %v2137, %v2125
        %v2354 = vpack.c.b16 %v2138, %v2126
        %v2355 = vpack.c.b16 %v2139, %v2127
        %v2356 = vpack.c.b16 %v2140, %v2128
        %v2357 = vpack.c.b16 %v2141, %v2129
        %v2358 = vpack.c.b16 %v2142, %v2130
        %v2359 = vpack.c.b16 %v2155, %v2143
        %v2360 = vpack.c.b16 %v2156, %v2144
        %v2361 = vpack.c.b16 %v2157, %v2145
        %v2362 = vpack.c.b16 %v2158, %v2146
        %v2363 = vpack.c.b16 %v2159, %v2147
        %v2364 = vpack.c.b16 %v2160, %v2148
        %v2365 = vpack.c.b16 %v2161, %v2149
        %v2366 = vpack.c.b16 %v2162, %v2150
        %v2367 = vpack.c.b16 %v2163, %v2151
        %v2368 = vpack.c.b16 %v2164, %v2152
        %v2369 = vpack.c.b16 %v2165, %v2153
        %v2370 = vpack.c.b16 %v2166, %v2154
        %v2371 = vpack.c.b16 %v2179, %v2167
        %v2372 = vpack.c.b16 %v2180, %v2168
        %v2373 = vpack.c.b16 %v2181, %v2169
        %v2374 = vpack.c.b16 %v2182, %v2170
        %v2375 = vpack.c.b16 %v2183, %v2171
        %v2376 = vpack.c.b16 %v2184, %v2172
        %v2377 = vpack.c.b16 %v2185, %v2173
        %v2378 = vpack.c.b16 %v2186, %v2174
        %v2379 = vpack.c.b16 %v2187, %v2175
        %v2380 = vpack.c.b16 %v2188, %v2176
        %v2381 = vpack.c.b16 %v2189, %v2177
        %v2382 = vpack.c.b16 %v2190, %v2178
        %2575 = vmatprep.subr.bf16.mxu0 %v2192
        %2576 = vmatpush1.bf16.msra.mxu0 %v2191
        %2577 = vmatprep.subr.bf16.mxu0 %v2204
        %2578 = vmatpush1.bf16.msra.mxu0 %v2203
        %2579 = vmatprep.subr.bf16.mxu0 %v2216
        %2580 = vmatpush1.bf16.msra.mxu0 %v2215
        %2581 = vmatprep.subr.bf16.mxu0 %v2228
        %2582 = vmatpush1.bf16.msra.mxu0 %v2227
        %2583 = vmatprep.subr.bf16.mxu0 %v2240
        %2584 = vmatpush1.bf16.msra.mxu0 %v2239
        %2585 = vmatprep.subr.bf16.mxu0 %v2252
        %2586 = vmatpush1.bf16.msra.mxu0 %v2251
        %2587 = vmatprep.subr.bf16.mxu0 %v2264
        %2588 = vmatpush1.bf16.msra.mxu0 %v2263
        %2589 = vmatprep.subr.bf16.mxu0 %v2276
        %2590 = vmatpush1.bf16.msra.mxu0 %v2275
        %2591 = vmatprep.subr.bf16.mxu0 %v2288
        %2592 = vmatpush1.bf16.msra.mxu0 %v2287
        %2593 = vmatprep.subr.bf16.mxu0 %v2300
        %2594 = vmatpush1.bf16.msra.mxu0 %v2299
        %2595 = vmatprep.subr.bf16.mxu0 %v2312
        %2596 = vmatpush1.bf16.msra.mxu0 %v2311
        %2597 = vmatprep.subr.bf16.mxu0 %v2324
        %2598 = vmatpush1.bf16.msra.mxu0 %v2323
        %2599 = vmatprep.subr.bf16.mxu0 %v2336
        %2600 = vmatpush1.bf16.msra.mxu0 %v2335
        %2601 = vmatprep.subr.bf16.mxu0 %v2348
        %2602 = vmatpush1.bf16.msra.mxu0 %v2347
        %2603 = vmatprep.subr.bf16.mxu0 %v2360
        %2604 = vmatpush1.bf16.msra.mxu0 %v2359
        %2605 = vmatprep.subr.bf16.mxu0 %v2372
        %2606 = vmatpush1.bf16.msra.mxu0 %v2371
        %2607 = vmatprep.mubr.bf16.mxu0 %v1422
        %2608 = vmatmul.mubr.bf16.gmra.mrb[0].mxu0 %v1421
        %v2609 = vpop.f32.mrb[0].mxu0
        %v2610 = vadd.f32 0.0, %v2609
        %v2611 = vpop.f32.mrb[0].mxu0
        %v2612 = vadd.f32 0.0, %v2611
        %v2613 = vpop.f32.mrb[0].mxu0
        %v2614 = vpop.f32.mrb[0].mxu0
        %2615 = vdwg.mxu0
        %2616 = vmatprep.subr.bf16.mxu0 %v2194
        %2617 = vmatpush1.bf16.msra.mxu0 %v2193
        %2618 = vmatprep.subr.bf16.mxu0 %v2206
        %2619 = vmatpush1.bf16.msra.mxu0 %v2205
        %2620 = vmatprep.subr.bf16.mxu0 %v2218
        %2621 = vmatpush1.bf16.msra.mxu0 %v2217
        %2622 = vmatprep.subr.bf16.mxu0 %v2230
        %2623 = vmatpush1.bf16.msra.mxu0 %v2229
        %2624 = vmatprep.subr.bf16.mxu0 %v2242
        %2625 = vmatpush1.bf16.msra.mxu0 %v2241
        %2626 = vmatprep.subr.bf16.mxu0 %v2254
        %2627 = vmatpush1.bf16.msra.mxu0 %v2253
        %2628 = vmatprep.subr.bf16.mxu0 %v2266
        %2629 = vmatpush1.bf16.msra.mxu0 %v2265
        %2630 = vmatprep.subr.bf16.mxu0 %v2278
        %2631 = vmatpush1.bf16.msra.mxu0 %v2277
        %2632 = vmatprep.subr.bf16.mxu0 %v2290
        %2633 = vmatpush1.bf16.msra.mxu0 %v2289
        %2634 = vmatprep.subr.bf16.mxu0 %v2302
        %2635 = vmatpush1.bf16.msra.mxu0 %v2301
        %2636 = vmatprep.subr.bf16.mxu0 %v2314
        %2637 = vmatpush1.bf16.msra.mxu0 %v2313
        %2638 = vmatprep.subr.bf16.mxu0 %v2326
        %2639 = vmatpush1.bf16.msra.mxu0 %v2325
        %2640 = vmatprep.subr.bf16.mxu0 %v2338
        %2641 = vmatpush1.bf16.msra.mxu0 %v2337
        %2642 = vmatprep.subr.bf16.mxu0 %v2350
        %2643 = vmatpush1.bf16.msra.mxu0 %v2349
        %2644 = vmatprep.subr.bf16.mxu0 %v2362
        %2645 = vmatpush1.bf16.msra.mxu0 %v2361
        %2646 = vmatprep.subr.bf16.mxu0 %v2374
        %2647 = vmatpush1.bf16.msra.mxu0 %v2373
        %2648 = vmatprep.mubr.bf16.mxu0 %v1422
        %2649 = vmatmul.mubr.bf16.gmra.mrb[0].mxu0 %v1421
        %v2650 = vpop.f32.mrb[0].mxu0
        %v2651 = vadd.f32 0.0, %v2650
        %v2652 = vpop.f32.mrb[0].mxu0
        %v2653 = vadd.f32 0.0, %v2652
        %v2654 = vpop.f32.mrb[0].mxu0
        %v2655 = vpop.f32.mrb[0].mxu0
        %2656 = vdwg.mxu0
        %2657 = vmatprep.subr.bf16.mxu0 %v2196
        %2658 = vmatpush1.bf16.msra.mxu0 %v2195
        %2659 = vmatprep.subr.bf16.mxu0 %v2208
        %2660 = vmatpush1.bf16.msra.mxu0 %v2207
        %2661 = vmatprep.subr.bf16.mxu0 %v2220
        %2662 = vmatpush1.bf16.msra.mxu0 %v2219
        %2663 = vmatprep.subr.bf16.mxu0 %v2232
        %2664 = vmatpush1.bf16.msra.mxu0 %v2231
        %2665 = vmatprep.subr.bf16.mxu0 %v2244
        %2666 = vmatpush1.bf16.msra.mxu0 %v2243
        %2667 = vmatprep.subr.bf16.mxu0 %v2256
        %2668 = vmatpush1.bf16.msra.mxu0 %v2255
        %2669 = vmatprep.subr.bf16.mxu0 %v2268
        %2670 = vmatpush1.bf16.msra.mxu0 %v2267
        %2671 = vmatprep.subr.bf16.mxu0 %v2280
        %2672 = vmatpush1.bf16.msra.mxu0 %v2279
        %2673 = vmatprep.subr.bf16.mxu0 %v2292
        %2674 = vmatpush1.bf16.msra.mxu0 %v2291
        %2675 = vmatprep.subr.bf16.mxu0 %v2304
        %2676 = vmatpush1.bf16.msra.mxu0 %v2303
        %2677 = vmatprep.subr.bf16.mxu0 %v2316
        %2678 = vmatpush1.bf16.msra.mxu0 %v2315
        %2679 = vmatprep.subr.bf16.mxu0 %v2328
        %2680 = vmatpush1.bf16.msra.mxu0 %v2327
        %2681 = vmatprep.subr.bf16.mxu0 %v2340
        %2682 = vmatpush1.bf16.msra.mxu0 %v2339
        %2683 = vmatprep.subr.bf16.mxu0 %v2352
        %2684 = vmatpush1.bf16.msra.mxu0 %v2351
        %2685 = vmatprep.subr.bf16.mxu0 %v2364
        %2686 = vmatpush1.bf16.msra.mxu0 %v2363
        %2687 = vmatprep.subr.bf16.mxu0 %v2376
        %2688 = vmatpush1.bf16.msra.mxu0 %v2375
        %2689 = vmatprep.mubr.bf16.mxu0 %v1422
        %2690 = vmatmul.mubr.bf16.gmra.mrb[0].mxu0 %v1421
        %v2691 = vpop.f32.mrb[0].mxu0
        %v2692 = vadd.f32 0.0, %v2691
        %v2693 = vpop.f32.mrb[0].mxu0
        %v2694 = vadd.f32 0.0, %v2693
        %v2695 = vpop.f32.mrb[0].mxu0
        %v2696 = vpop.f32.mrb[0].mxu0
        %2697 = vdwg.mxu0
        %2698 = vmatprep.subr.bf16.mxu0 %v2198
        %2699 = vmatpush1.bf16.msra.mxu0 %v2197
        %2700 = vmatprep.subr.bf16.mxu0 %v2210
        %2701 = vmatpush1.bf16.msra.mxu0 %v2209
        %2702 = vmatprep.subr.bf16.mxu0 %v2222
        %2703 = vmatpush1.bf16.msra.mxu0 %v2221
        %2704 = vmatprep.subr.bf16.mxu0 %v2234
        %2705 = vmatpush1.bf16.msra.mxu0 %v2233
        %2706 = vmatprep.subr.bf16.mxu0 %v2246
        %2707 = vmatpush1.bf16.msra.mxu0 %v2245
        %2708 = vmatprep.subr.bf16.mxu0 %v2258
        %2709 = vmatpush1.bf16.msra.mxu0 %v2257
        %2710 = vmatprep.subr.bf16.mxu0 %v2270
        %2711 = vmatpush1.bf16.msra.mxu0 %v2269
        %2712 = vmatprep.subr.bf16.mxu0 %v2282
        %2713 = vmatpush1.bf16.msra.mxu0 %v2281
        %2714 = vmatprep.subr.bf16.mxu0 %v2294
        %2715 = vmatpush1.bf16.msra.mxu0 %v2293
        %2716 = vmatprep.subr.bf16.mxu0 %v2306
        %2717 = vmatpush1.bf16.msra.mxu0 %v2305
        %2718 = vmatprep.subr.bf16.mxu0 %v2318
        %2719 = vmatpush1.bf16.msra.mxu0 %v2317
        %2720 = vmatprep.subr.bf16.mxu0 %v2330
        %2721 = vmatpush1.bf16.msra.mxu0 %v2329
        %2722 = vmatprep.subr.bf16.mxu0 %v2342
        %2723 = vmatpush1.bf16.msra.mxu0 %v2341
        %2724 = vmatprep.subr.bf16.mxu0 %v2354
        %2725 = vmatpush1.bf16.msra.mxu0 %v2353
        %2726 = vmatprep.subr.bf16.mxu0 %v2366
        %2727 = vmatpush1.bf16.msra.mxu0 %v2365
        %2728 = vmatprep.subr.bf16.mxu0 %v2378
        %2729 = vmatpush1.bf16.msra.mxu0 %v2377
        %2730 = vmatprep.mubr.bf16.mxu0 %v1422
        %2731 = vmatmul.mubr.bf16.gmra.mrb[0].mxu0 %v1421
        %v2732 = vpop.f32.mrb[0].mxu0
        %v2733 = vadd.f32 0.0, %v2732
        %v2734 = vpop.f32.mrb[0].mxu0
        %v2735 = vadd.f32 0.0, %v2734
        %v2736 = vpop.f32.mrb[0].mxu0
        %v2737 = vpop.f32.mrb[0].mxu0
        %2738 = vdwg.mxu0
        %2739 = vmatprep.subr.bf16.mxu0 %v2200
        %2740 = vmatpush1.bf16.msra.mxu0 %v2199
        %2741 = vmatprep.subr.bf16.mxu0 %v2212
        %2742 = vmatpush1.bf16.msra.mxu0 %v2211
        %2743 = vmatprep.subr.bf16.mxu0 %v2224
        %2744 = vmatpush1.bf16.msra.mxu0 %v2223
        %2745 = vmatprep.subr.bf16.mxu0 %v2236
        %2746 = vmatpush1.bf16.msra.mxu0 %v2235
        %2747 = vmatprep.subr.bf16.mxu0 %v2248
        %2748 = vmatpush1.bf16.msra.mxu0 %v2247
        %2749 = vmatprep.subr.bf16.mxu0 %v2260
        %2750 = vmatpush1.bf16.msra.mxu0 %v2259
        %2751 = vmatprep.subr.bf16.mxu0 %v2272
        %2752 = vmatpush1.bf16.msra.mxu0 %v2271
        %2753 = vmatprep.subr.bf16.mxu0 %v2284
        %2754 = vmatpush1.bf16.msra.mxu0 %v2283
        %2755 = vmatprep.subr.bf16.mxu0 %v2296
        %2756 = vmatpush1.bf16.msra.mxu0 %v2295
        %2757 = vmatprep.subr.bf16.mxu0 %v2308
        %2758 = vmatpush1.bf16.msra.mxu0 %v2307
        %2759 = vmatprep.subr.bf16.mxu0 %v2320
        %2760 = vmatpush1.bf16.msra.mxu0 %v2319
        %2761 = vmatprep.subr.bf16.mxu0 %v2332
        %2762 = vmatpush1.bf16.msra.mxu0 %v2331
        %2763 = vmatprep.subr.bf16.mxu0 %v2344
        %2764 = vmatpush1.bf16.msra.mxu0 %v2343
        %2765 = vmatprep.subr.bf16.mxu0 %v2356
        %2766 = vmatpush1.bf16.msra.mxu0 %v2355
        %2767 = vmatprep.subr.bf16.mxu0 %v2368
        %2768 = vmatpush1.bf16.msra.mxu0 %v2367
        %2769 = vmatprep.subr.bf16.mxu0 %v2380
        %2770 = vmatpush1.bf16.msra.mxu0 %v2379
        %2771 = vmatprep.mubr.bf16.mxu0 %v1422
        %2772 = vmatmul.mubr.bf16.gmra.mrb[0].mxu0 %v1421
        %v2773 = vpop.f32.mrb[0].mxu0
        %v2774 = vadd.f32 0.0, %v2773
        %v2775 = vpop.f32.mrb[0].mxu0
        %v2776 = vadd.f32 0.0, %v2775
        %v2777 = vpop.f32.mrb[0].mxu0
        %v2778 = vpop.f32.mrb[0].mxu0
        %2779 = vdwg.mxu0
        %2780 = vmatprep.subr.bf16.mxu0 %v2202
        %2781 = vmatpush1.bf16.msra.mxu0 %v2201
        %2782 = vmatprep.subr.bf16.mxu0 %v2214
        %2783 = vmatpush1.bf16.msra.mxu0 %v2213
        %2784 = vmatprep.subr.bf16.mxu0 %v2226
        %2785 = vmatpush1.bf16.msra.mxu0 %v2225
        %2786 = vmatprep.subr.bf16.mxu0 %v2238
        %2787 = vmatpush1.bf16.msra.mxu0 %v2237
        %2788 = vmatprep.subr.bf16.mxu0 %v2250
        %2789 = vmatpush1.bf16.msra.mxu0 %v2249
        %2790 = vmatprep.subr.bf16.mxu0 %v2262
        %2791 = vmatpush1.bf16.msra.mxu0 %v2261
        %2792 = vmatprep.subr.bf16.mxu0 %v2274
        %2793 = vmatpush1.bf16.msra.mxu0 %v2273
        %2794 = vmatprep.subr.bf16.mxu0 %v2286
        %2795 = vmatpush1.bf16.msra.mxu0 %v2285
        %2796 = vmatprep.subr.bf16.mxu0 %v2298
        %2797 = vmatpush1.bf16.msra.mxu0 %v2297
        %2798 = vmatprep.subr.bf16.mxu0 %v2310
        %2799 = vmatpush1.bf16.msra.mxu0 %v2309
        %2800 = vmatprep.subr.bf16.mxu0 %v2322
        %2801 = vmatpush1.bf16.msra.mxu0 %v2321
        %2802 = vmatprep.subr.bf16.mxu0 %v2334
        %2803 = vmatpush1.bf16.msra.mxu0 %v2333
        %2804 = vmatprep.subr.bf16.mxu0 %v2346
        %2805 = vmatpush1.bf16.msra.mxu0 %v2345
        %2806 = vmatprep.subr.bf16.mxu0 %v2358
        %2807 = vmatpush1.bf16.msra.mxu0 %v2357
        %2808 = vmatprep.subr.bf16.mxu0 %v2370
        %2809 = vmatpush1.bf16.msra.mxu0 %v2369
        %2810 = vmatprep.subr.bf16.mxu0 %v2382
        %2811 = vmatpush1.bf16.msra.mxu0 %v2381
        %2812 = vmatprep.mubr.bf16.mxu0 %v1422
        %2813 = vmatmul.mubr.bf16.gmra.mrb[0].mxu0 %v1421
        %v2814 = vpop.f32.mrb[0].mxu0
        %v2815 = vadd.f32 0.0, %v2814
        %v2816 = vpop.f32.mrb[0].mxu0
        %v2817 = vadd.f32 0.0, %v2816
        %v2818 = vpop.f32.mrb[0].mxu0
        %v2819 = vpop.f32.mrb[0].mxu0
        %2820 = vdwg.mxu0
        %v2821 = vxor.u32 %v2610, 2147483648
        %v2822 = vxor.u32 %v2612, 2147483648
        %v2823 = vxor.u32 %v2651, 2147483648
        %v2824 = vxor.u32 %v2653, 2147483648
        %v2825 = vxor.u32 %v2692, 2147483648
        %v2826 = vxor.u32 %v2694, 2147483648
        %v2827 = vmul.f32 %v2821, 1.442695
        %v2828 = vpow.pop %v2827
        %v2829 = vmul.f32 %v2822, 1.442695
        %v2830 = vpow.pop %v2829
        %v2831 = vmul.f32 %v2823, 1.442695
        %v2832 = vpow.pop %v2831
        %v2833 = vmul.f32 %v2824, 1.442695
        %v2834 = vpow.pop %v2833
        %v2835 = vmul.f32 %v2825, 1.442695
        %v2836 = vpow.pop %v2835
        %v2837 = vmul.f32 %v2826, 1.442695
        %v2838 = vpow.pop %v2837
        %v2839 = vadd.f32 %v2828, 1.0
        %v2840 = vadd.f32 %v2830, 1.0
        %v2841 = vadd.f32 %v2832, 1.0
        %v2842 = vadd.f32 %v2834, 1.0
        %v2843 = vadd.f32 %v2836, 1.0
        %v2844 = vadd.f32 %v2838, 1.0
        %v2845 = vrcp.pop %v2839
        %v2846 = vmul.f32 1.0, %v2845
        %v2847 = vrcp.pop %v2840
        %v2848 = vmul.f32 1.0, %v2847
        %v2849 = vrcp.pop %v2841
        %v2850 = vmul.f32 1.0, %v2849
        %v2851 = vrcp.pop %v2842
        %v2852 = vmul.f32 1.0, %v2851
        %v2853 = vrcp.pop %v2843
        %v2854 = vmul.f32 1.0, %v2853
        %v2855 = vrcp.pop %v2844
        %v2856 = vmul.f32 1.0, %v2855
        %v2857 = vmul.f32 %v2610, %v2846
        %v2858 = vmul.f32 %v2612, %v2848
        %v2859 = vmul.f32 %v2651, %v2850
        %v2860 = vmul.f32 %v2653, %v2852
        %v2861 = vmul.f32 %v2692, %v2854
        %v2862 = vmul.f32 %v2694, %v2856
        %v2863 = vmul.f32 %v2857, %v2733
        %v2864 = vmul.f32 %v2858, %v2735
        %v2865 = vmul.f32 %v2859, %v2774
        %v2866 = vmul.f32 %v2860, %v2776
        %v2867 = vmul.f32 %v2861, %v2815
        %v2868 = vmul.f32 %v2862, %v2817
        %v2869 = vpack.c.bf16 %v2863, %v2863
        %v2870 = vpack.c.bf16 %v2864, %v2864
        %v2871 = vpack.c.bf16 %v2865, %v2865
        %v2872 = vpack.c.bf16 %v2866, %v2866
        %v2873 = vpack.c.bf16 %v2867, %v2867
        %v2874 = vpack.c.bf16 %v2868, %v2868
        %v2875 = vld [vmem:[#allocation10] sm:$0xff]
        %v2876 = vld [vmem:[#allocation10 + $0x8] sm:$0xff]
        %v2877 = vld [vmem:[#allocation10 + $0x10] sm:$0xff]
        %v2878 = vld [vmem:[#allocation10 + $0x18] sm:$0xff]
        %v2879 = vld [vmem:[#allocation10 + $0x20] sm:$0xff]
        %v2880 = vld [vmem:[#allocation10 + $0x28] sm:$0xff]
        %v2881 = vld [vmem:[#allocation10 + $0x30] sm:$0xff]
        %v2882 = vld [vmem:[#allocation10 + $0x38] sm:$0xff]
        %v2883 = vld [vmem:[#allocation10 + $0x40] sm:$0xff]
        %v2884 = vld [vmem:[#allocation10 + $0x48] sm:$0xff]
        %v2885 = vld [vmem:[#allocation10 + $0x50] sm:$0xff]
        %v2886 = vld [vmem:[#allocation10 + $0x58] sm:$0xff]
        %v2887 = vld [vmem:[#allocation10 + $0x60] sm:$0xff]
        %v2888 = vld [vmem:[#allocation10 + $0x68] sm:$0xff]
        %v2889 = vld [vmem:[#allocation10 + $0x70] sm:$0xff]
        %v2890 = vld [vmem:[#allocation10 + $0x78] sm:$0xff]
        %v2891 = vld [vmem:[#allocation10 + $0x80] sm:$0xff]
        %v2892 = vld [vmem:[#allocation10 + $0x88] sm:$0xff]
        %v2893 = vld [vmem:[#allocation10 + $0x90] sm:$0xff]
        %v2894 = vld [vmem:[#allocation10 + $0x98] sm:$0xff]
        %v2895 = vld [vmem:[#allocation10 + $0xa0] sm:$0xff]
        %v2896 = vld [vmem:[#allocation10 + $0xa8] sm:$0xff]
        %v2897 = vld [vmem:[#allocation10 + $0xb0] sm:$0xff]
        %v2898 = vld [vmem:[#allocation10 + $0xb8] sm:$0xff]
        %v2899 = vld [vmem:[#allocation10 + $0xc0] sm:$0xff]
        %v2900 = vld [vmem:[#allocation10 + $0xc8] sm:$0xff]
        %v2901 = vld [vmem:[#allocation10 + $0xd0] sm:$0xff]
        %v2902 = vld [vmem:[#allocation10 + $0xd8] sm:$0xff]
        %v2903 = vld [vmem:[#allocation10 + $0xe0] sm:$0xff]
        %v2904 = vld [vmem:[#allocation10 + $0xe8] sm:$0xff]
        %v2905 = vld [vmem:[#allocation10 + $0xf0] sm:$0xff]
        %v2906 = vld [vmem:[#allocation10 + $0xf8] sm:$0xff]
        %v2907 = vld [vmem:[#allocation10 + $0x100] sm:$0xff]
        %v2908 = vld [vmem:[#allocation10 + $0x108] sm:$0xff]
        %v2909 = vld [vmem:[#allocation10 + $0x110] sm:$0xff]
        %v2910 = vld [vmem:[#allocation10 + $0x118] sm:$0xff]
        %v2911 = vld [vmem:[#allocation10 + $0x120] sm:$0xff]
        %v2912 = vld [vmem:[#allocation10 + $0x128] sm:$0xff]
        %v2913 = vld [vmem:[#allocation10 + $0x130] sm:$0xff]
        %v2914 = vld [vmem:[#allocation10 + $0x138] sm:$0xff]
        %v2915 = vld [vmem:[#allocation10 + $0x140] sm:$0xff]
        %v2916 = vld [vmem:[#allocation10 + $0x148] sm:$0xff]
        %v2917 = vld [vmem:[#allocation10 + $0x150] sm:$0xff]
        %v2918 = vld [vmem:[#allocation10 + $0x158] sm:$0xff]
        %v2919 = vld [vmem:[#allocation10 + $0x160] sm:$0xff]
        %v2920 = vld [vmem:[#allocation10 + $0x168] sm:$0xff]
        %v2921 = vld [vmem:[#allocation10 + $0x170] sm:$0xff]
        %v2922 = vld [vmem:[#allocation10 + $0x178] sm:$0xff]
        %v2923 = vld [vmem:[#allocation10 + $0x180] sm:$0xff]
        %v2924 = vld [vmem:[#allocation10 + $0x188] sm:$0xff]
        %v2925 = vld [vmem:[#allocation10 + $0x190] sm:$0xff]
        %v2926 = vld [vmem:[#allocation10 + $0x198] sm:$0xff]
        %v2927 = vld [vmem:[#allocation10 + $0x1a0] sm:$0xff]
        %v2928 = vld [vmem:[#allocation10 + $0x1a8] sm:$0xff]
        %v2929 = vld [vmem:[#allocation10 + $0x1b0] sm:$0xff]
        %v2930 = vld [vmem:[#allocation10 + $0x1b8] sm:$0xff]
        %v2931 = vld [vmem:[#allocation10 + $0x1c0] sm:$0xff]
        %v2932 = vld [vmem:[#allocation10 + $0x1c8] sm:$0xff]
        %v2933 = vld [vmem:[#allocation10 + $0x1d0] sm:$0xff]
        %v2934 = vld [vmem:[#allocation10 + $0x1d8] sm:$0xff]
        %v2935 = vld [vmem:[#allocation10 + $0x1e0] sm:$0xff]
        %v2936 = vld [vmem:[#allocation10 + $0x1e8] sm:$0xff]
        %v2937 = vld [vmem:[#allocation10 + $0x1f0] sm:$0xff]
        %v2938 = vld [vmem:[#allocation10 + $0x1f8] sm:$0xff]
        %v2939 = vld [vmem:[#allocation10 + $0x200] sm:$0xff]
        %v2940 = vld [vmem:[#allocation10 + $0x208] sm:$0xff]
        %v2941 = vld [vmem:[#allocation10 + $0x210] sm:$0xff]
        %v2942 = vld [vmem:[#allocation10 + $0x218] sm:$0xff]
        %v2943 = vld [vmem:[#allocation10 + $0x220] sm:$0xff]
        %v2944 = vld [vmem:[#allocation10 + $0x228] sm:$0xff]
        %v2945 = vld [vmem:[#allocation10 + $0x230] sm:$0xff]
        %v2946 = vld [vmem:[#allocation10 + $0x238] sm:$0xff]
        %v2947 = vld [vmem:[#allocation10 + $0x240] sm:$0xff]
        %v2948 = vld [vmem:[#allocation10 + $0x248] sm:$0xff]
        %v2949 = vld [vmem:[#allocation10 + $0x250] sm:$0xff]
        %v2950 = vld [vmem:[#allocation10 + $0x258] sm:$0xff]
        %v2951 = vld [vmem:[#allocation10 + $0x260] sm:$0xff]
        %v2952 = vld [vmem:[#allocation10 + $0x268] sm:$0xff]
        %v2953 = vld [vmem:[#allocation10 + $0x270] sm:$0xff]
        %v2954 = vld [vmem:[#allocation10 + $0x278] sm:$0xff]
        %v2955 = vld [vmem:[#allocation10 + $0x280] sm:$0xff]
        %v2956 = vld [vmem:[#allocation10 + $0x288] sm:$0xff]
        %v2957 = vld [vmem:[#allocation10 + $0x290] sm:$0xff]
        %v2958 = vld [vmem:[#allocation10 + $0x298] sm:$0xff]
        %v2959 = vld [vmem:[#allocation10 + $0x2a0] sm:$0xff]
        %v2960 = vld [vmem:[#allocation10 + $0x2a8] sm:$0xff]
        %v2961 = vld [vmem:[#allocation10 + $0x2b0] sm:$0xff]
        %v2962 = vld [vmem:[#allocation10 + $0x2b8] sm:$0xff]
        %v2963 = vld [vmem:[#allocation10 + $0x2c0] sm:$0xff]
        %v2964 = vld [vmem:[#allocation10 + $0x2c8] sm:$0xff]
        %v2965 = vld [vmem:[#allocation10 + $0x2d0] sm:$0xff]
        %v2966 = vld [vmem:[#allocation10 + $0x2d8] sm:$0xff]
        %v2967 = vld [vmem:[#allocation10 + $0x2e0] sm:$0xff]
        %v2968 = vld [vmem:[#allocation10 + $0x2e8] sm:$0xff]
        %v2969 = vld [vmem:[#allocation10 + $0x2f0] sm:$0xff]
        %v2970 = vld [vmem:[#allocation10 + $0x2f8] sm:$0xff]
        %v3067 = vunpack.c.l.b16 %v2875
        %v3068 = vunpack.c.h.b16 %v2875
        %v3069 = vunpack.c.l.b16 %v2876
        %v3070 = vunpack.c.h.b16 %v2876
        %v3071 = vunpack.c.l.b16 %v2877
        %v3072 = vunpack.c.h.b16 %v2877
        %v3073 = vunpack.c.l.b16 %v2878
        %v3074 = vunpack.c.h.b16 %v2878
        %v3075 = vunpack.c.l.b16 %v2879
        %v3076 = vunpack.c.h.b16 %v2879
        %v3077 = vunpack.c.l.b16 %v2880
        %v3078 = vunpack.c.h.b16 %v2880
        %v3079 = vunpack.c.l.b16 %v2881
        %v3080 = vunpack.c.h.b16 %v2881
        %v3081 = vunpack.c.l.b16 %v2882
        %v3082 = vunpack.c.h.b16 %v2882
        %v3083 = vunpack.c.l.b16 %v2883
        %v3084 = vunpack.c.h.b16 %v2883
        %v3085 = vunpack.c.l.b16 %v2884
        %v3086 = vunpack.c.h.b16 %v2884
        %v3087 = vunpack.c.l.b16 %v2885
        %v3088 = vunpack.c.h.b16 %v2885
        %v3089 = vunpack.c.l.b16 %v2886
        %v3090 = vunpack.c.h.b16 %v2886
        %v3091 = vunpack.c.l.b16 %v2887
        %v3092 = vunpack.c.h.b16 %v2887
        %v3093 = vunpack.c.l.b16 %v2888
        %v3094 = vunpack.c.h.b16 %v2888
        %v3095 = vunpack.c.l.b16 %v2889
        %v3096 = vunpack.c.h.b16 %v2889
        %v3097 = vunpack.c.l.b16 %v2890
        %v3098 = vunpack.c.h.b16 %v2890
        %v3099 = vunpack.c.l.b16 %v2891
        %v3100 = vunpack.c.h.b16 %v2891
        %v3101 = vunpack.c.l.b16 %v2892
        %v3102 = vunpack.c.h.b16 %v2892
        %v3103 = vunpack.c.l.b16 %v2893
        %v3104 = vunpack.c.h.b16 %v2893
        %v3105 = vunpack.c.l.b16 %v2894
        %v3106 = vunpack.c.h.b16 %v2894
        %v3107 = vunpack.c.l.b16 %v2895
        %v3108 = vunpack.c.h.b16 %v2895
        %v3109 = vunpack.c.l.b16 %v2896
        %v3110 = vunpack.c.h.b16 %v2896
        %v3111 = vunpack.c.l.b16 %v2897
        %v3112 = vunpack.c.h.b16 %v2897
        %v3113 = vunpack.c.l.b16 %v2898
        %v3114 = vunpack.c.h.b16 %v2898
        %v3115 = vunpack.c.l.b16 %v2899
        %v3116 = vunpack.c.h.b16 %v2899
        %v3117 = vunpack.c.l.b16 %v2900
        %v3118 = vunpack.c.h.b16 %v2900
        %v3119 = vunpack.c.l.b16 %v2901
        %v3120 = vunpack.c.h.b16 %v2901
        %v3121 = vunpack.c.l.b16 %v2902
        %v3122 = vunpack.c.h.b16 %v2902
        %v3123 = vunpack.c.l.b16 %v2903
        %v3124 = vunpack.c.h.b16 %v2903
        %v3125 = vunpack.c.l.b16 %v2904
        %v3126 = vunpack.c.h.b16 %v2904
        %v3127 = vunpack.c.l.b16 %v2905
        %v3128 = vunpack.c.h.b16 %v2905
        %v3129 = vunpack.c.l.b16 %v2906
        %v3130 = vunpack.c.h.b16 %v2906
        %v3131 = vunpack.c.l.b16 %v2907
        %v3132 = vunpack.c.h.b16 %v2907
        %v3133 = vunpack.c.l.b16 %v2908
        %v3134 = vunpack.c.h.b16 %v2908
        %v3135 = vunpack.c.l.b16 %v2909
        %v3136 = vunpack.c.h.b16 %v2909
        %v3137 = vunpack.c.l.b16 %v2910
        %v3138 = vunpack.c.h.b16 %v2910
        %v3139 = vunpack.c.l.b16 %v2911
        %v3140 = vunpack.c.h.b16 %v2911
        %v3141 = vunpack.c.l.b16 %v2912
        %v3142 = vunpack.c.h.b16 %v2912
        %v3143 = vunpack.c.l.b16 %v2913
        %v3144 = vunpack.c.h.b16 %v2913
        %v3145 = vunpack.c.l.b16 %v2914
        %v3146 = vunpack.c.h.b16 %v2914
        %v3147 = vunpack.c.l.b16 %v2915
        %v3148 = vunpack.c.h.b16 %v2915
        %v3149 = vunpack.c.l.b16 %v2916
        %v3150 = vunpack.c.h.b16 %v2916
        %v3151 = vunpack.c.l.b16 %v2917
        %v3152 = vunpack.c.h.b16 %v2917
        %v3153 = vunpack.c.l.b16 %v2918
        %v3154 = vunpack.c.h.b16 %v2918
        %v3155 = vunpack.c.l.b16 %v2919
        %v3156 = vunpack.c.h.b16 %v2919
        %v3157 = vunpack.c.l.b16 %v2920
        %v3158 = vunpack.c.h.b16 %v2920
        %v3159 = vunpack.c.l.b16 %v2921
        %v3160 = vunpack.c.h.b16 %v2921
        %v3161 = vunpack.c.l.b16 %v2922
        %v3162 = vunpack.c.h.b16 %v2922
        %v3163 = vunpack.c.l.b16 %v2923
        %v3164 = vunpack.c.h.b16 %v2923
        %v3165 = vunpack.c.l.b16 %v2924
        %v3166 = vunpack.c.h.b16 %v2924
        %v3167 = vunpack.c.l.b16 %v2925
        %v3168 = vunpack.c.h.b16 %v2925
        %v3169 = vunpack.c.l.b16 %v2926
        %v3170 = vunpack.c.h.b16 %v2926
        %v3171 = vunpack.c.l.b16 %v2927
        %v3172 = vunpack.c.h.b16 %v2927
        %v3173 = vunpack.c.l.b16 %v2928
        %v3174 = vunpack.c.h.b16 %v2928
        %v3175 = vunpack.c.l.b16 %v2929
        %v3176 = vunpack.c.h.b16 %v2929
        %v3177 = vunpack.c.l.b16 %v2930
        %v3178 = vunpack.c.h.b16 %v2930
        %v3179 = vunpack.c.l.b16 %v2931
        %v3180 = vunpack.c.h.b16 %v2931
        %v3181 = vunpack.c.l.b16 %v2932
        %v3182 = vunpack.c.h.b16 %v2932
        %v3183 = vunpack.c.l.b16 %v2933
        %v3184 = vunpack.c.h.b16 %v2933
        %v3185 = vunpack.c.l.b16 %v2934
        %v3186 = vunpack.c.h.b16 %v2934
        %v3187 = vunpack.c.l.b16 %v2935
        %v3188 = vunpack.c.h.b16 %v2935
        %v3189 = vunpack.c.l.b16 %v2936
        %v3190 = vunpack.c.h.b16 %v2936
        %v3191 = vunpack.c.l.b16 %v2937
        %v3192 = vunpack.c.h.b16 %v2937
        %v3193 = vunpack.c.l.b16 %v2938
        %v3194 = vunpack.c.h.b16 %v2938
        %v3195 = vunpack.c.l.b16 %v2939
        %v3196 = vunpack.c.h.b16 %v2939
        %v3197 = vunpack.c.l.b16 %v2940
        %v3198 = vunpack.c.h.b16 %v2940
        %v3199 = vunpack.c.l.b16 %v2941
        %v3200 = vunpack.c.h.b16 %v2941
        %v3201 = vunpack.c.l.b16 %v2942
        %v3202 = vunpack.c.h.b16 %v2942
        %v3203 = vunpack.c.l.b16 %v2943
        %v3204 = vunpack.c.h.b16 %v2943
        %v3205 = vunpack.c.l.b16 %v2944
        %v3206 = vunpack.c.h.b16 %v2944
        %v3207 = vunpack.c.l.b16 %v2945
        %v3208 = vunpack.c.h.b16 %v2945
        %v3209 = vunpack.c.l.b16 %v2946
        %v3210 = vunpack.c.h.b16 %v2946
        %v3211 = vunpack.c.l.b16 %v2947
        %v3212 = vunpack.c.h.b16 %v2947
        %v3213 = vunpack.c.l.b16 %v2948
        %v3214 = vunpack.c.h.b16 %v2948
        %v3215 = vunpack.c.l.b16 %v2949
        %v3216 = vunpack.c.h.b16 %v2949
        %v3217 = vunpack.c.l.b16 %v2950
        %v3218 = vunpack.c.h.b16 %v2950
        %v3219 = vunpack.c.l.b16 %v2951
        %v3220 = vunpack.c.h.b16 %v2951
        %v3221 = vunpack.c.l.b16 %v2952
        %v3222 = vunpack.c.h.b16 %v2952
        %v3223 = vunpack.c.l.b16 %v2953
        %v3224 = vunpack.c.h.b16 %v2953
        %v3225 = vunpack.c.l.b16 %v2954
        %v3226 = vunpack.c.h.b16 %v2954
        %v3227 = vunpack.c.l.b16 %v2955
        %v3228 = vunpack.c.h.b16 %v2955
        %v3229 = vunpack.c.l.b16 %v2956
        %v3230 = vunpack.c.h.b16 %v2956
        %v3231 = vunpack.c.l.b16 %v2957
        %v3232 = vunpack.c.h.b16 %v2957
        %v3233 = vunpack.c.l.b16 %v2958
        %v3234 = vunpack.c.h.b16 %v2958
        %v3235 = vunpack.c.l.b16 %v2959
        %v3236 = vunpack.c.h.b16 %v2959
        %v3237 = vunpack.c.l.b16 %v2960
        %v3238 = vunpack.c.h.b16 %v2960
        %v3239 = vunpack.c.l.b16 %v2961
        %v3240 = vunpack.c.h.b16 %v2961
        %v3241 = vunpack.c.l.b16 %v2962
        %v3242 = vunpack.c.h.b16 %v2962
        %v3243 = vunpack.c.l.b16 %v2963
        %v3244 = vunpack.c.h.b16 %v2963
        %v3245 = vunpack.c.l.b16 %v2964
        %v3246 = vunpack.c.h.b16 %v2964
        %v3247 = vunpack.c.l.b16 %v2965
        %v3248 = vunpack.c.h.b16 %v2965
        %v3249 = vunpack.c.l.b16 %v2966
        %v3250 = vunpack.c.h.b16 %v2966
        %v3251 = vunpack.c.l.b16 %v2967
        %v3252 = vunpack.c.h.b16 %v2967
        %v3253 = vunpack.c.l.b16 %v2968
        %v3254 = vunpack.c.h.b16 %v2968
        %v3255 = vunpack.c.l.b16 %v2969
        %v3256 = vunpack.c.h.b16 %v2969
        %v3257 = vunpack.c.l.b16 %v2970
        %v3258 = vunpack.c.h.b16 %v2970
        %v3259 = vpack.c.b16 %v3069, %v3067
        %v3260 = vpack.c.b16 %v3070, %v3068
        %v3261 = vpack.c.b16 %v3073, %v3071
        %v3262 = vpack.c.b16 %v3074, %v3072
        %v3263 = vpack.c.b16 %v3077, %v3075
        %v3264 = vpack.c.b16 %v3078, %v3076
        %v3265 = vpack.c.b16 %v3081, %v3079
        %v3266 = vpack.c.b16 %v3082, %v3080
        %v3267 = vpack.c.b16 %v3085, %v3083
        %v3268 = vpack.c.b16 %v3086, %v3084
        %v3269 = vpack.c.b16 %v3089, %v3087
        %v3270 = vpack.c.b16 %v3090, %v3088
        %v3271 = vpack.c.b16 %v3093, %v3091
        %v3272 = vpack.c.b16 %v3094, %v3092
        %v3273 = vpack.c.b16 %v3097, %v3095
        %v3274 = vpack.c.b16 %v3098, %v3096
        %v3275 = vpack.c.b16 %v3101, %v3099
        %v3276 = vpack.c.b16 %v3102, %v3100
        %v3277 = vpack.c.b16 %v3105, %v3103
        %v3278 = vpack.c.b16 %v3106, %v3104
        %v3279 = vpack.c.b16 %v3109, %v3107
        %v3280 = vpack.c.b16 %v3110, %v3108
        %v3281 = vpack.c.b16 %v3113, %v3111
        %v3282 = vpack.c.b16 %v3114, %v3112
        %v3283 = vpack.c.b16 %v3117, %v3115
        %v3284 = vpack.c.b16 %v3118, %v3116
        %v3285 = vpack.c.b16 %v3121, %v3119
        %v3286 = vpack.c.b16 %v3122, %v3120
        %v3287 = vpack.c.b16 %v3125, %v3123
        %v3288 = vpack.c.b16 %v3126, %v3124
        %v3289 = vpack.c.b16 %v3129, %v3127
        %v3290 = vpack.c.b16 %v3130, %v3128
        %v3291 = vpack.c.b16 %v3133, %v3131
        %v3292 = vpack.c.b16 %v3134, %v3132
        %v3293 = vpack.c.b16 %v3137, %v3135
        %v3294 = vpack.c.b16 %v3138, %v3136
        %v3295 = vpack.c.b16 %v3141, %v3139
        %v3296 = vpack.c.b16 %v3142, %v3140
        %v3297 = vpack.c.b16 %v3145, %v3143
        %v3298 = vpack.c.b16 %v3146, %v3144
        %v3299 = vpack.c.b16 %v3149, %v3147
        %v3300 = vpack.c.b16 %v3150, %v3148
        %v3301 = vpack.c.b16 %v3153, %v3151
        %v3302 = vpack.c.b16 %v3154, %v3152
        %v3303 = vpack.c.b16 %v3157, %v3155
        %v3304 = vpack.c.b16 %v3158, %v3156
        %v3305 = vpack.c.b16 %v3161, %v3159
        %v3306 = vpack.c.b16 %v3162, %v3160
        %v3307 = vpack.c.b16 %v3165, %v3163
        %v3308 = vpack.c.b16 %v3166, %v3164
        %v3309 = vpack.c.b16 %v3169, %v3167
        %v3310 = vpack.c.b16 %v3170, %v3168
        %v3311 = vpack.c.b16 %v3173, %v3171
        %v3312 = vpack.c.b16 %v3174, %v3172
        %v3313 = vpack.c.b16 %v3177, %v3175
        %v3314 = vpack.c.b16 %v3178, %v3176
        %v3315 = vpack.c.b16 %v3181, %v3179
        %v3316 = vpack.c.b16 %v3182, %v3180
        %v3317 = vpack.c.b16 %v3185, %v3183
        %v3318 = vpack.c.b16 %v3186, %v3184
        %v3319 = vpack.c.b16 %v3189, %v3187
        %v3320 = vpack.c.b16 %v3190, %v3188
        %v3321 = vpack.c.b16 %v3193, %v3191
        %v3322 = vpack.c.b16 %v3194, %v3192
        %v3323 = vpack.c.b16 %v3197, %v3195
        %v3324 = vpack.c.b16 %v3198, %v3196
        %v3325 = vpack.c.b16 %v3201, %v3199
        %v3326 = vpack.c.b16 %v3202, %v3200
        %v3327 = vpack.c.b16 %v3205, %v3203
        %v3328 = vpack.c.b16 %v3206, %v3204
        %v3329 = vpack.c.b16 %v3209, %v3207
        %v3330 = vpack.c.b16 %v3210, %v3208
        %v3331 = vpack.c.b16 %v3213, %v3211
        %v3332 = vpack.c.b16 %v3214, %v3212
        %v3333 = vpack.c.b16 %v3217, %v3215
        %v3334 = vpack.c.b16 %v3218, %v3216
        %v3335 = vpack.c.b16 %v3221, %v3219
        %v3336 = vpack.c.b16 %v3222, %v3220
        %v3337 = vpack.c.b16 %v3225, %v3223
        %v3338 = vpack.c.b16 %v3226, %v3224
        %v3339 = vpack.c.b16 %v3229, %v3227
        %v3340 = vpack.c.b16 %v3230, %v3228
        %v3341 = vpack.c.b16 %v3233, %v3231
        %v3342 = vpack.c.b16 %v3234, %v3232
        %v3343 = vpack.c.b16 %v3237, %v3235
        %v3344 = vpack.c.b16 %v3238, %v3236
        %v3345 = vpack.c.b16 %v3241, %v3239
        %v3346 = vpack.c.b16 %v3242, %v3240
        %v3347 = vpack.c.b16 %v3245, %v3243
        %v3348 = vpack.c.b16 %v3246, %v3244
        %v3349 = vpack.c.b16 %v3249, %v3247
        %v3350 = vpack.c.b16 %v3250, %v3248
        %v3351 = vpack.c.b16 %v3253, %v3251
        %v3352 = vpack.c.b16 %v3254, %v3252
        %v3353 = vpack.c.b16 %v3257, %v3255
        %v3354 = vpack.c.b16 %v3258, %v3256
        %3451 = vmatprep.subr.bf16.mxu0 %v3260
        %3452 = vmatpush1.bf16.msra.mxu0 %v3259
        %3453 = vmatprep.subr.bf16.mxu0 %v3262
        %3454 = vmatpush1.bf16.msra.mxu0 %v3261
        %3455 = vmatprep.subr.bf16.mxu0 %v3264
        %3456 = vmatpush1.bf16.msra.mxu0 %v3263
        %3457 = vmatprep.subr.bf16.mxu0 %v3266
        %3458 = vmatpush1.bf16.msra.mxu0 %v3265
        %3459 = vmatprep.subr.bf16.mxu0 %v3268
        %3460 = vmatpush1.bf16.msra.mxu0 %v3267
        %3461 = vmatprep.subr.bf16.mxu0 %v3270
        %3462 = vmatpush1.bf16.msra.mxu0 %v3269
        %3463 = vmatprep.subr.bf16.mxu0 %v3272
        %3464 = vmatpush1.bf16.msra.mxu0 %v3271
        %3465 = vmatprep.subr.bf16.mxu0 %v3274
        %3466 = vmatpush1.bf16.msra.mxu0 %v3273
        %3467 = vmatprep.subr.bf16.mxu0 %v3276
        %3468 = vmatpush1.bf16.msra.mxu0 %v3275
        %3469 = vmatprep.subr.bf16.mxu0 %v3278
        %3470 = vmatpush1.bf16.msra.mxu0 %v3277
        %3471 = vmatprep.subr.bf16.mxu0 %v3280
        %3472 = vmatpush1.bf16.msra.mxu0 %v3279
        %3473 = vmatprep.subr.bf16.mxu0 %v3282
        %3474 = vmatpush1.bf16.msra.mxu0 %v3281
        %3475 = vmatprep.subr.bf16.mxu0 %v3284
        %3476 = vmatpush1.bf16.msra.mxu0 %v3283
        %3477 = vmatprep.subr.bf16.mxu0 %v3286
        %3478 = vmatpush1.bf16.msra.mxu0 %v3285
        %3479 = vmatprep.subr.bf16.mxu0 %v3288
        %3480 = vmatpush1.bf16.msra.mxu0 %v3287
        %3481 = vmatprep.subr.bf16.mxu0 %v3290
        %3482 = vmatpush1.bf16.msra.mxu0 %v3289
        %3483 = vmatprep.mubr.bf16.mxu0 %v2870
        %3484 = vmatmul.mubr.bf16.gmra.mrb[0].mxu0 %v2869
        %v3485 = vpop.f32.mrb[0].mxu0
        %v3486 = vadd.f32 0.0, %v3485
        %v3487 = vpop.f32.mrb[0].mxu0
        %v3488 = vadd.f32 0.0, %v3487
        %v3489 = vpop.f32.mrb[0].mxu0
        %v3490 = vpop.f32.mrb[0].mxu0
        %3491 = vdwg.mxu0
        %3492 = vmatprep.subr.bf16.mxu0 %v3292
        %3493 = vmatpush1.bf16.msra.mxu0 %v3291
        %3494 = vmatprep.subr.bf16.mxu0 %v3294
        %3495 = vmatpush1.bf16.msra.mxu0 %v3293
        %3496 = vmatprep.subr.bf16.mxu0 %v3296
        %3497 = vmatpush1.bf16.msra.mxu0 %v3295
        %3498 = vmatprep.subr.bf16.mxu0 %v3298
        %3499 = vmatpush1.bf16.msra.mxu0 %v3297
        %3500 = vmatprep.subr.bf16.mxu0 %v3300
        %3501 = vmatpush1.bf16.msra.mxu0 %v3299
        %3502 = vmatprep.subr.bf16.mxu0 %v3302
        %3503 = vmatpush1.bf16.msra.mxu0 %v3301
        %3504 = vmatprep.subr.bf16.mxu0 %v3304
        %3505 = vmatpush1.bf16.msra.mxu0 %v3303
        %3506 = vmatprep.subr.bf16.mxu0 %v3306
        %3507 = vmatpush1.bf16.msra.mxu0 %v3305
        %3508 = vmatprep.subr.bf16.mxu0 %v3308
        %3509 = vmatpush1.bf16.msra.mxu0 %v3307
        %3510 = vmatprep.subr.bf16.mxu0 %v3310
        %3511 = vmatpush1.bf16.msra.mxu0 %v3309
        %3512 = vmatprep.subr.bf16.mxu0 %v3312
        %3513 = vmatpush1.bf16.msra.mxu0 %v3311
        %3514 = vmatprep.subr.bf16.mxu0 %v3314
        %3515 = vmatpush1.bf16.msra.mxu0 %v3313
        %3516 = vmatprep.subr.bf16.mxu0 %v3316
        %3517 = vmatpush1.bf16.msra.mxu0 %v3315
        %3518 = vmatprep.subr.bf16.mxu0 %v3318
        %3519 = vmatpush1.bf16.msra.mxu0 %v3317
        %3520 = vmatprep.subr.bf16.mxu0 %v3320
        %3521 = vmatpush1.bf16.msra.mxu0 %v3319
        %3522 = vmatprep.subr.bf16.mxu0 %v3322
        %3523 = vmatpush1.bf16.msra.mxu0 %v3321
        %3524 = vmatprep.mubr.bf16.mxu0 %v2872
        %3525 = vmatmul.mubr.bf16.gmra.mrb[0].mxu0 %v2871
        %v3526 = vpop.f32.mrb[0].mxu0
        %v3527 = vadd.f32 %v3486, %v3526
        %v3528 = vpop.f32.mrb[0].mxu0
        %v3529 = vadd.f32 %v3488, %v3528
        %v3530 = vpop.f32.mrb[0].mxu0
        %v3531 = vpop.f32.mrb[0].mxu0
        %3532 = vdwg.mxu0
        %3533 = vmatprep.subr.bf16.mxu0 %v3324
        %3534 = vmatpush1.bf16.msra.mxu0 %v3323
        %3535 = vmatprep.subr.bf16.mxu0 %v3326
        %3536 = vmatpush1.bf16.msra.mxu0 %v3325
        %3537 = vmatprep.subr.bf16.mxu0 %v3328
        %3538 = vmatpush1.bf16.msra.mxu0 %v3327
        %3539 = vmatprep.subr.bf16.mxu0 %v3330
        %3540 = vmatpush1.bf16.msra.mxu0 %v3329
        %3541 = vmatprep.subr.bf16.mxu0 %v3332
        %3542 = vmatpush1.bf16.msra.mxu0 %v3331
        %3543 = vmatprep.subr.bf16.mxu0 %v3334
        %3544 = vmatpush1.bf16.msra.mxu0 %v3333
        %3545 = vmatprep.subr.bf16.mxu0 %v3336
        %3546 = vmatpush1.bf16.msra.mxu0 %v3335
        %3547 = vmatprep.subr.bf16.mxu0 %v3338
        %3548 = vmatpush1.bf16.msra.mxu0 %v3337
        %3549 = vmatprep.subr.bf16.mxu0 %v3340
        %3550 = vmatpush1.bf16.msra.mxu0 %v3339
        %3551 = vmatprep.subr.bf16.mxu0 %v3342
        %3552 = vmatpush1.bf16.msra.mxu0 %v3341
        %3553 = vmatprep.subr.bf16.mxu0 %v3344
        %3554 = vmatpush1.bf16.msra.mxu0 %v3343
        %3555 = vmatprep.subr.bf16.mxu0 %v3346
        %3556 = vmatpush1.bf16.msra.mxu0 %v3345
        %3557 = vmatprep.subr.bf16.mxu0 %v3348
        %3558 = vmatpush1.bf16.msra.mxu0 %v3347
        %3559 = vmatprep.subr.bf16.mxu0 %v3350
        %3560 = vmatpush1.bf16.msra.mxu0 %v3349
        %3561 = vmatprep.subr.bf16.mxu0 %v3352
        %3562 = vmatpush1.bf16.msra.mxu0 %v3351
        %3563 = vmatprep.subr.bf16.mxu0 %v3354
        %3564 = vmatpush1.bf16.msra.mxu0 %v3353
        %3565 = vmatprep.mubr.bf16.mxu0 %v2874
        %3566 = vmatmul.mubr.bf16.gmra.mrb[0].mxu0 %v2873
        %v3567 = vpop.f32.mrb[0].mxu0
        %v3568 = vadd.f32 %v3527, %v3567
        %v3569 = vpop.f32.mrb[0].mxu0
        %v3570 = vadd.f32 %v3529, %v3569
        %v3571 = vpop.f32.mrb[0].mxu0
        %v3572 = vpop.f32.mrb[0].mxu0
        %3573 = vdwg.mxu0
        %v3574 = vadd.f32 %v1395, %v3568
        %v3575 = vadd.f32 %v1396, %v3570
        %3576 = vst [vmem:[%s446] sm:$0xff] %v3574
        %3577 = vst [vmem:[%s446 + $0x8] sm:$0xff] %v3575
        %s3578 = sand.u32 %s253, 1
        %s3579 = scalar_lea.sflag [#allocation4], %s3578
        %s3580 = sand.u32 %s253, 1
        %s3581 = smul.addr %s3580, 16
        %s3582 = scalar_lea.vmem [#allocation13], %s3581
        // Predicated region
        $region85: #{tpu_custom_call.1} parent=59 // pred_check
          %p3583 = pneg %p263
        $region86: #{tpu_custom_call.1} parent=59 // pred_check_branch
          %3585 = sbr.rel (%p3583) target = $region88
        $region87: #{tpu_custom_call.1} parent=59 // pred_region
          %s3587 = ssub.s32 256, 256
          %3588 = vsyncadd %s3579, %s3587
          %s3589 = smul.addr %s30, 2
          %s3590 = smul.addr %s3589, 128
          %s3591 = scalar_lea.hbm %s10, %s3590
          %s3593 = sshll.u32 %s3582, 4
          %s3594 = int_to_ptr.vmem [resolvable:$true] %s3593
          %3596 = dma.vmem_to_hbm [thread:$0]  %s3594, 256, %s3591, %s3579
        $region88: #{tpu_custom_call.1} parent=59 // pred_fallthru
          _
      $region60: #{tpu_custom_call.1} parent=5 // pred_fallthru
        _
      %p3597 = scmp.le.s32.totalorder 2, %s25
      // Predicated region
      $region89: #{tpu_custom_call.1} parent=5 // pred_check
        %p3598 = pneg %p3597
      $region90: #{tpu_custom_call.1} parent=5 // pred_check_branch
        %3600 = sbr.rel (%p3598) target = $region92
      $region91: #{tpu_custom_call.1} parent=5 // pred_region
        %s3601 = ssub.s32 %s25, 2
        // Predicated region
        $region93: #{tpu_custom_call.1} parent=91 // pred_check
          %p3602 = pneg %p269
        $region94: #{tpu_custom_call.1} parent=91 // pred_check_branch
          %3604 = sbr.rel (%p3602) target = $region96
        $region95: #{tpu_custom_call.1} parent=91 // pred_region
          %s3605 = sand.u32 %s254, 1
          %s3606 = scalar_lea.sflag [#allocation4], %s3605
          %s3607 = sand.u32 %s254, 1
          %s3608 = smul.addr %s3607, 16
          %s3609 = scalar_lea.vmem [#allocation13], %s3608
          %3610 = dma.done %s3606, 256
        $region96: #{tpu_custom_call.1} parent=91 // pred_fallthru
          _
      $region92: #{tpu_custom_call.1} parent=5 // pred_fallthru
        _
    $region6: #{tpu_custom_call.1} parent=1 // loop_footer
      %s29 = sadd.s32 1, %s25
    $region7: #{tpu_custom_call.1} parent=1 // loop_footer_branch
      %24 = sbr.rel target = $region3
    $region8: #{tpu_custom_call.1} parent=1 // loop_exit
      _
    %3611 = vsyncpa [#allocation3], 1
    %s3612 = scalar_lea.sflag [#allocation3], 1
    %3613 = vsyncpa %s3612, 1
    %3614 = vsyncpa [#allocation6], 1
    %3615 = vsyncpa [#allocation9], 1
    %3616 = vsyncpa [#allocation12], 1
    %3617 = vsyncpa [#allocation4], 1
    %s3618 = scalar_lea.sflag [#allocation4], 1
    %3619 = vsyncpa %s3618, 1

</llo_original>
